<compile_context>
chip_gen: v7x
topology: tpu7x:2x2x1
jax: 0.10.0
libtpu: 0.0.40
codegen_flags: <defaults>
</compile_context>

<pallas_src>
import functools

import jax
import jax.numpy as jnp
from jax.experimental import pallas as pl
from jax.experimental.pallas import tpu as pltpu


_VMEM_LIMIT = 48 * 1024 * 1024   # < 64 MiB physical on v7x, ample on v5e/v6e
_LANE = 128
_SUBLANE = 8
_STREAM_BUDGET = 16 * 1024 * 1024  # budget for double-buffered streamed blocks


def _round_up(n, m):
    return ((n + m - 1) // m) * m


def _pad_to(x, size, axis):
    cur = x.shape[axis]
    if cur == size:
        return x
    pad = [(0, 0)] * x.ndim
    pad[axis] = (0, size - cur)
    return jnp.pad(x, pad)


# --------------------------- linear (x @ w + b) ------------------------------


def _linear_kernel(x_ref, w_ref, b_ref, o_ref):
    """One (TM, K) x (K, TN) tile of x @ w + b (f32 accumulate)."""
    o_ref[...] = (jnp.dot(x_ref[...], w_ref[...],
                          preferred_element_type=jnp.float32)
                  + b_ref[...]).astype(o_ref.dtype)


def linear_forward(x2d, w, b, *, tm=256, tn=512, out_dtype=jnp.float32):
    """Tiled x2d[N,K] @ w[K,V] + b[V] -> [N,V]; (parallel, parallel) grid."""
    N, K = x2d.shape
    V = w.shape[-1]
    # Robustness: round N up to a sublane multiple before tiling.
    N_pad = _round_up(max(N, _SUBLANE), _SUBLANE)
    x2d = _pad_to(x2d, N_pad, 0)
    tm = max(_SUBLANE, min(tm, N_pad))
    tm -= tm % _SUBLANE
    tn = min(tn, V)
    grid = (pl.cdiv(N_pad, tm), pl.cdiv(V, tn))
    out = pl.pallas_call(
        _linear_kernel,
        out_shape=jax.ShapeDtypeStruct((N_pad, V), out_dtype),
        grid_spec=pltpu.PrefetchScalarGridSpec(
            num_scalar_prefetch=0,
            grid=grid,
            in_specs=[
                pl.BlockSpec((tm, K), lambda i, j: (i, 0)),
                pl.BlockSpec((K, tn), lambda i, j: (0, j)),
                pl.BlockSpec((1, tn), lambda i, j: (0, j)),
            ],
            out_specs=pl.BlockSpec((tm, tn), lambda i, j: (i, j)),
        ),
        compiler_params=pltpu.CompilerParams(
            dimension_semantics=("parallel", "parallel"),
            vmem_limit_bytes=_VMEM_LIMIT),
    )(x2d, w, b.reshape(1, V))
    return out[:N]


# ------------------------------ LSTM kernel ----------------------------------


def _lstm_block_kernel(zx_ref, whh_ref, h0_ref, c0_ref, *refs,
                       emit_h_all, seq_len, mask_tail):
    """One grid step == one (batch block, time block) of the recurrence.

    zx_ref:  (tb, bb, 4Hp) bf16  precomputed token rows of emb@W_ih + b
    whh_ref: (Hp, 4Hp)     bf16  recurrent weights (resident across the grid)
    h/c carried in registers inside the block, in VMEM scratch across blocks.
    """
    if emit_h_all:
        h_all_ref, h_fin_ref, c_fin_ref, h_sc, c_sc = refs
    else:
        h_fin_ref, c_fin_ref, h_sc, c_sc = refs

    t_blk = pl.program_id(1)
    last_t = pl.num_programs(1) - 1

    @pl.when(t_blk == 0)
    def _():
        h_sc[...] = h0_ref[...]
        c_sc[...] = c0_ref[...]

    tb = zx_ref.shape[0]
    Hp = h_sc.shape[-1]
    t_base = t_blk * tb

    def step(t, carry):
        h_prev, c_prev = carry                              # f32 (bb, Hp)
        # Single MXU dot per step; input projection + bias already folded in.
        z = zx_ref[t].astype(jnp.float32) + jnp.dot(
            h_prev.astype(whh_ref.dtype), whh_ref[...],
            preferred_element_type=jnp.float32)
        i_g = jax.nn.sigmoid(z[:, 0 * Hp:1 * Hp])           # lane-aligned slices
        f_g = jax.nn.sigmoid(z[:, 1 * Hp:2 * Hp])
        g_g = jnp.tanh(z[:, 2 * Hp:3 * Hp])
        o_g = jax.nn.sigmoid(z[:, 3 * Hp:4 * Hp])
        c_new = f_g * c_prev + i_g * g_g
        h_new = o_g * jnp.tanh(c_new)
        if mask_tail:
            # Padded tail time steps must not advance the carry.
            keep = ((t_base + t) < seq_len).astype(jnp.float32)
            h_new = keep * h_new + (1.0 - keep) * h_prev
            c_new = keep * c_new + (1.0 - keep) * c_prev
        if emit_h_all:
            h_all_ref[t] = h_new.astype(h_all_ref.dtype)    # bf16 store
        return h_new, c_new

    h_last, c_last = jax.lax.fori_loop(
        0, tb, step, (h_sc[...], c_sc[...]), unroll=min(8, tb))

    # One state store per block (not per step) to carry across time blocks.
    h_sc[...] = h_last
    c_sc[...] = c_last

    @pl.when(t_blk == last_t)
    def _():
        h_fin_ref[...] = h_last
        c_fin_ref[...] = c_last


def lstm_forward(zx, w_hh_pad, h0_pad, c0_pad, *, seq_len, emit_h_all,
                 h_all_dtype=jnp.bfloat16, time_block=32, batch_block=128):
    """Run the recurrence on pre-padded inputs.

    zx:       [T, B_pad, 4Hp] (bf16) — already fused emb@W_ih + b, batch padded
    w_hh_pad: [Hp, 4Hp], h0/c0: [B_pad, Hp] f32
    Returns padded (h_all | None, h_fin, c_fin).
    """
    T, B_pad, four_hp = zx.shape
    Hp = four_hp // 4

    bb = min(batch_block, B_pad)                  # batch block (multiple of 8)

    # Derive the time block from a VMEM budget for the streamed (double
    # buffered) blocks — matters on v7x's 64 MiB VMEM at realistic B/H.
    per_step = 2 * bb * four_hp * zx.dtype.itemsize
    if emit_h_all:
        per_step += 2 * bb * Hp * jnp.dtype(h_all_dtype).itemsize
    tb = max(1, min(time_block, T, _STREAM_BUDGET // max(1, per_step)))
    T_pad = _round_up(T, tb)
    zx = _pad_to(zx, T_pad, 0)
    mask_tail = T_pad > T

    grid = (B_pad // bb, T_pad // tb)

    kernel = functools.partial(_lstm_block_kernel, emit_h_all=emit_h_all,
                               seq_len=T, mask_tail=mask_tail)

    out_shapes, out_specs = [], []
    if emit_h_all:
        out_shapes.append(jax.ShapeDtypeStruct((T_pad, B_pad, Hp), h_all_dtype))
        out_specs.append(pl.BlockSpec((tb, bb, Hp), lambda b, t: (t, b, 0)))
    out_shapes += [jax.ShapeDtypeStruct((B_pad, Hp), jnp.float32),
                   jax.ShapeDtypeStruct((B_pad, Hp), jnp.float32)]
    out_specs += [pl.BlockSpec((bb, Hp), lambda b, t: (b, 0)),
                  pl.BlockSpec((bb, Hp), lambda b, t: (b, 0))]

    grid_spec = pltpu.PrefetchScalarGridSpec(
        num_scalar_prefetch=0,
        grid=grid,
        in_specs=[
            pl.BlockSpec((tb, bb, four_hp), lambda b, t: (t, b, 0)),   # Zx block
            pl.BlockSpec((Hp, four_hp), lambda b, t: (0, 0)),          # W_hh (resident)
            pl.BlockSpec((bb, Hp), lambda b, t: (b, 0)),               # h0
            pl.BlockSpec((bb, Hp), lambda b, t: (b, 0)),               # c0
        ],
        out_specs=out_specs,
        scratch_shapes=[pltpu.VMEM((bb, Hp), jnp.float32),             # h carry
                        pltpu.VMEM((bb, Hp), jnp.float32)],            # c carry
    )

    outs = pl.pallas_call(
        kernel,
        out_shape=tuple(out_shapes),
        grid_spec=grid_spec,
        compiler_params=pltpu.CompilerParams(
            # batch blocks parallel (v7x 2-core), recurrence sequential in time
            dimension_semantics=("parallel", "arbitrary"),
            vmem_limit_bytes=_VMEM_LIMIT),
    )(zx, w_hh_pad.astype(jnp.bfloat16), h0_pad, c0_pad)

    if emit_h_all:
        h_all, h_fin, c_fin = outs
    else:
        h_all, (h_fin, c_fin) = None, outs
    return h_all, h_fin, c_fin


# ------------------------- padding / input plumbing --------------------------


def _pad_gatewise(w, H, Hp):
    """Pad the last (4H) axis gate-by-gate (i|f|g|o) to 4Hp with zeros."""
    parts = [_pad_to(w[..., g * H:(g + 1) * H], Hp, axis=-1) for g in range(4)]
    return jnp.concatenate(parts, axis=-1)


def _lstm_inputs(p, tokens, h0, c0):
    """Fused emb@W_ih+b table -> gathered Zx (bf16), padded weights/state."""
    T, B = tokens.shape
    H = p["w_hh"].shape[0]
    Hp = _round_up(H, _LANE)
    B_pad = _round_up(max(B, _SUBLANE), _SUBLANE)

    w_ih_p = _pad_gatewise(p["w_ih"], H, Hp)                       # [E, 4Hp]
    w_hh_p = _pad_to(_pad_gatewise(p["w_hh"], H, Hp), Hp, axis=0)  # [Hp, 4Hp]
    b_p = _pad_gatewise(p["b"], H, Hp)                             # [4Hp]

    # Fused embedding + input projection: table[v] = emb[v] @ W_ih + b.
    # Strictly cheaper than projecting T*B tokens whenever T*B > V.
    table = linear_forward(p["emb"], w_ih_p, b_p, out_dtype=jnp.bfloat16)
    # TODO(synk): fuse this row gather into the LSTM kernel (scalar-prefetch
    # token ids + resident table in VMEM) instead of materializing Zx in HBM.
    zx = jnp.take(table, tokens.reshape(-1), axis=0).reshape(T, B, 4 * Hp)
    zx = _pad_to(zx, B_pad, axis=1)

    h0 = _pad_to(_pad_to(h0.astype(jnp.float32), B_pad, 0), Hp, 1)
    c0 = _pad_to(_pad_to(c0.astype(jnp.float32), B_pad, 0), Hp, 1)
    return zx, w_hh_p, h0, c0


# ----------------------------- encoder / decoder -----------------------------


def encoder_forward(params, inputs):
    """inputs: int32 [T_src, B] -> (hidden [B,H], cell [B,H])."""
    p = params["enc"]
    T, B = inputs.shape
    H = p["w_hh"].shape[0]
    zx, w_hh_p, h0, c0 = _lstm_inputs(
        p, inputs, jnp.zeros((B, H), jnp.float32), jnp.zeros((B, H), jnp.float32))
    # Finals-only: the encoder discards per-step hiddens, so never write them.
    _, h_fin, c_fin = lstm_forward(zx, w_hh_p, h0, c0, seq_len=T,
                                   emit_h_all=False)
    return h_fin[:B, :H], c_fin[:B, :H]


def decoder_forward(params, target, hidden, cell):
    """target: int32 [T_tgt, B]; hidden/cell: [1, B, H] -> (logits, h, c)."""
    p = params["dec"]
    T, B = target.shape
    H = p["w_hh"].shape[0]
    V = p["w_out"].shape[-1]

    zx, w_hh_p, h0, c0 = _lstm_inputs(p, target, hidden[0], cell[0])
    h_all, h_fin, c_fin = lstm_forward(zx, w_hh_p, h0, c0, seq_len=T,
                                       emit_h_all=True,
                                       h_all_dtype=jnp.bfloat16)
    T_pad, B_pad, Hp = h_all.shape

    # Vocab projection on the still-padded bf16 activations with a lane-dense
    # padded V; slice only the final logits.
    Vp = _round_up(V, _LANE)
    w_out_p = _pad_to(_pad_to(p["w_out"], Hp, 0), Vp, 1).astype(jnp.bfloat16)
    b_out_p = _pad_to(p["b_out"], Vp, 0)
    logits = linear_forward(h_all.reshape(T_pad * B_pad, Hp), w_out_p, b_out_p,
                            out_dtype=jnp.float32)
    logits = logits.reshape(T_pad, B_pad, Vp)[:T, :B, :V]
    return logits, h_fin[:B, :H][None], c_fin[:B, :H][None]


def seq2seq_forward(params, inputs, target):
    # Mirrors Seq2Seq.forward exactly.  Under jit, the decoder's embedding /
    # table work has no dependence on the encoder state, so XLA may overlap it
    # with the serial encoder recurrence.
    hidden, cell = encoder_forward(params, inputs)
    if hidden.ndim == 2:
        hidden = hidden[None]                                  # unsqueeze(0)
    if cell.ndim == 2:
        cell = cell[None]
    output, _hidden_state, _cell_state = decoder_forward(params, target, hidden, cell)
    return output


# --------------------------- deterministic init ------------------------------


def init_params(key, vocab, emb, hidden):
    ks = jax.random.split(key, 10)
    s = 0.1

    def lstm_block(k0, k1, k2, k3, in_dim):
        return {
            "emb": s * jax.random.normal(k0, (vocab, emb), jnp.float32),
            "w_ih": s * jax.random.normal(k1, (in_dim, 4 * hidden), jnp.float32),
            "w_hh": s * jax.random.normal(k2, (hidden, 4 * hidden), jnp.float32),
            # Single combined bias (== PyTorch b_ih + b_hh when porting weights).
            "b": s * jax.random.normal(k3, (4 * hidden,), jnp.float32),
        }

    params = {
        "enc": lstm_block(ks[0], ks[1], ks[2], ks[3], emb),
        "dec": lstm_block(ks[4], ks[5], ks[6], ks[7], emb),
    }
    params["dec"]["w_out"] = s * jax.random.normal(ks[8], (hidden, vocab), jnp.float32)
    params["dec"]["b_out"] = s * jax.random.normal(ks[9], (vocab,), jnp.float32)
    return params


# ------------------------------ f32 reference --------------------------------


def _reference_seq2seq(params, inputs, target):
    """Pure-JAX f32 reference mirroring the PyTorch module semantics."""
    def lstm(p, tokens, h, c):
        H = p["w_hh"].shape[0]
        x = p["emb"][tokens]
        hs = []
        for t in range(x.shape[0]):
            z = x[t] @ p["w_ih"] + h @ p["w_hh"] + p["b"]
            i = jax.nn.sigmoid(z[:, 0 * H:1 * H])
            f = jax.nn.sigmoid(z[:, 1 * H:2 * H])
            g = jnp.tanh(z[:, 2 * H:3 * H])
            o = jax.nn.sigmoid(z[:, 3 * H:4 * H])
            c = f * c + i * g
            h = o * jnp.tanh(c)
            hs.append(h)
        return jnp.stack(hs), h, c

    pe, pd = params["enc"], params["dec"]
    B = inputs.shape[1]
    H = pe["w_hh"].shape[0]
    h0 = jnp.zeros((B, H), jnp.float32)
    c0 = jnp.zeros((B, H), jnp.float32)
    _, h, c = lstm(pe, inputs, h0, c0)
    h_all, _, _ = lstm(pd, target, h, c)
    return h_all @ pd["w_out"] + pd["b_out"]


# ---------------------------------- main -------------------------------------

if __name__ == "__main__":
    VOCAB, EMB, HIDDEN = 32, 16, 32
    T_SRC, T_TGT, BATCH = 8, 8, 2

    key = jax.random.PRNGKey(0)
    k_p, k_in, k_tg = jax.random.split(key, 3)

    params = init_params(k_p, VOCAB, EMB, HIDDEN)
    inputs = jax.random.randint(k_in, (T_SRC, BATCH), 0, VOCAB, jnp.int32)   # [T_src, B]
    target = jax.random.randint(k_tg, (T_TGT, BATCH), 0, VOCAB, jnp.int32)   # [T_tgt, B]

    fwd = jax.jit(seq2seq_forward)
    out = fwd(params, inputs, target)               # logits [T_tgt, B, VOCAB]
    jax.block_until_ready(out)

    assert out.shape == (T_TGT, BATCH, VOCAB)
    assert out.dtype == jnp.float32
    assert bool(jnp.all(jnp.isfinite(out)))

    # Tolerance check against a pure-f32 reference (bf16 matmuls / Zx / h_all).
    ref = _reference_seq2seq(params, inputs, target)
    max_err = float(jnp.max(jnp.abs(out - ref)))
    assert max_err < 3e-2, f"max abs error vs f32 reference: {max_err}"

    print("KERNEL_OK")
</pallas_src>

<mosaic_0001>
module attributes {stable_mosaic.version = 11 : i64} {
  func.func @_linear_kernel(%arg0: i32, %arg1: i32, %arg2: memref<32x16xf32, #tpu.memory_space<vmem>>, %arg3: memref<16x512xf32, #tpu.memory_space<vmem>>, %arg4: memref<1x512xf32, #tpu.memory_space<vmem>>, %arg5: memref<32x512xbf16, #tpu.memory_space<vmem>>) attributes {dimension_semantics = [#tpu.dimension_semantics<parallel>, #tpu.dimension_semantics<parallel>], iteration_bounds = array<i64: 1, 1>, scalar_prefetch = 0 : i64, scratch_operands = 0 : i64, tpu.core_type = #tpu.core_type<tc>, window_params = [{transform_indices = @transform_0, window_bounds = array<i64: 32, 16>}, {transform_indices = @transform_1, window_bounds = array<i64: 16, 512>}, {transform_indices = @transform_2, window_bounds = array<i64: 1, 512>}, {transform_indices = @transform_3, window_bounds = array<i64: 32, 512>}]} {
    %c0 = arith.constant 0 : index
    %c0_0 = arith.constant 0 : index
    %0 = vector.load %arg2[%c0, %c0_0] : memref<32x16xf32, #tpu.memory_space<vmem>>, vector<32x16xf32>
    %c0_1 = arith.constant 0 : index
    %c0_2 = arith.constant 0 : index
    %1 = vector.load %arg3[%c0_1, %c0_2] : memref<16x512xf32, #tpu.memory_space<vmem>>, vector<16x512xf32>
    %cst = arith.constant dense<0.000000e+00> : vector<32x512xf32>
    %2 = tpu.matmul %0, %1, %cst {dimension_numbers = #tpu.dot_dimension_numbers<[1], [0], [0], [1], [0, 0, 1, 1], [], []>} : vector<32x16xf32>, vector<16x512xf32>, vector<32x512xf32> -> vector<32x512xf32>
    %c0_3 = arith.constant 0 : index
    %c0_4 = arith.constant 0 : index
    %3 = vector.load %arg4[%c0_3, %c0_4] : memref<1x512xf32, #tpu.memory_space<vmem>>, vector<1x512xf32>
    %4 = vector.broadcast %3 : vector<1x512xf32> to vector<32x512xf32>
    %5 = arith.addf %2, %4 : vector<32x512xf32>
    %6 = arith.truncf %5 : vector<32x512xf32> to vector<32x512xbf16>
    %c0_5 = arith.constant 0 : index
    %c0_6 = arith.constant 0 : index
    %7 = vector.load %arg5[%c0_5, %c0_6] : memref<32x512xbf16, #tpu.memory_space<vmem>>, vector<32x512xbf16>
    tpu.vector_store %arg5[%c0_5, %c0_6], %6 {strides = array<i32>} : memref<32x512xbf16, #tpu.memory_space<vmem>>, vector<32x512xbf16>,
    return
  }
  func.func @transform_0(%arg0: i32, %arg1: i32) -> (i32, i32) {
    %c0_i32 = arith.constant 0 : i32
    %c0_i32_0 = arith.constant 0 : i32
    return %arg0, %c0_i32 : i32, i32
  }
  func.func @transform_1(%arg0: i32, %arg1: i32) -> (i32, i32) {
    %c0_i32 = arith.constant 0 : i32
    %c0_i32_0 = arith.constant 0 : i32
    return %c0_i32, %arg1 : i32, i32
  }
  func.func @transform_2(%arg0: i32, %arg1: i32) -> (i32, i32) {
    %c0_i32 = arith.constant 0 : i32
    %c0_i32_0 = arith.constant 0 : i32
    return %c0_i32, %arg1 : i32, i32
  }
  func.func @transform_3(%arg0: i32, %arg1: i32) -> (i32, i32) {
    %c0_i32 = arith.constant 0 : i32
    return %arg0, %arg1 : i32, i32
  }
}

module attributes {stable_mosaic.version = 11 : i64} {
  func.func @_lstm_block_kernel(%arg0: i32, %arg1: i32, %arg2: memref<8x8x512xbf16, #tpu.memory_space<vmem>>, %arg3: memref<128x512xbf16, #tpu.memory_space<vmem>>, %arg4: memref<8x128xf32, #tpu.memory_space<vmem>>, %arg5: memref<8x128xf32, #tpu.memory_space<vmem>>, %arg6: memref<8x128xf32, #tpu.memory_space<vmem>>, %arg7: memref<8x128xf32, #tpu.memory_space<vmem>>, %arg8: memref<8x128xf32, #tpu.memory_space<vmem>>, %arg9: memref<8x128xf32, #tpu.memory_space<vmem>>) attributes {dimension_semantics = [#tpu.dimension_semantics<parallel>, #tpu.dimension_semantics<arbitrary>], iteration_bounds = array<i64: 1, 1>, scalar_prefetch = 0 : i64, scratch_operands = 2 : i64, tpu.core_type = #tpu.core_type<tc>, window_params = [{transform_indices = @transform_0, window_bounds = array<i64: 8, 8, 512>}, {pipeline_mode = #tpu.pipeline_mode<synchronous>, transform_indices = @transform_1, window_bounds = array<i64: 128, 512>}, {transform_indices = @transform_2, window_bounds = array<i64: 8, 128>}, {transform_indices = @transform_3, window_bounds = array<i64: 8, 128>}, {transform_indices = @transform_4, window_bounds = array<i64: 8, 128>}, {transform_indices = @transform_5, window_bounds = array<i64: 8, 128>}]} {
    %c0_i32 = arith.constant 0 : i32
    %0 = arith.cmpi eq, %arg1, %c0_i32 : i32
    %1 = arith.extui %0 : i1 to i32
    %c0_i32_0 = arith.constant 0 : i32
    %2 = arith.cmpi ne, %1, %c0_i32_0 : i32
    scf.if %2 {
      %c0_74 = arith.constant 0 : index
      %c0_75 = arith.constant 0 : index
      %274 = vector.load %arg4[%c0_74, %c0_75] : memref<8x128xf32, #tpu.memory_space<vmem>>, vector<8x128xf32>
      %c0_76 = arith.constant 0 : index
      %c0_77 = arith.constant 0 : index
      %275 = vector.load %arg8[%c0_76, %c0_77] : memref<8x128xf32, #tpu.memory_space<vmem>>, vector<8x128xf32>
      tpu.vector_store %arg8[%c0_76, %c0_77], %274 {strides = array<i32>} : memref<8x128xf32, #tpu.memory_space<vmem>>, vector<8x128xf32>,
      %c0_78 = arith.constant 0 : index
      %c0_79 = arith.constant 0 : index
      %276 = vector.load %arg5[%c0_78, %c0_79] : memref<8x128xf32, #tpu.memory_space<vmem>>, vector<8x128xf32>
      %c0_80 = arith.constant 0 : index
      %c0_81 = arith.constant 0 : index
      %277 = vector.load %arg9[%c0_80, %c0_81] : memref<8x128xf32, #tpu.memory_space<vmem>>, vector<8x128xf32>
      tpu.vector_store %arg9[%c0_80, %c0_81], %276 {strides = array<i32>} : memref<8x128xf32, #tpu.memory_space<vmem>>, vector<8x128xf32>,
    } else {
    }
    %c0 = arith.constant 0 : index
    %c0_1 = arith.constant 0 : index
    %3 = vector.load %arg8[%c0, %c0_1] : memref<8x128xf32, #tpu.memory_space<vmem>>, vector<8x128xf32>
    %c0_2 = arith.constant 0 : index
    %c0_3 = arith.constant 0 : index
    %4 = vector.load %arg9[%c0_2, %c0_3] : memref<8x128xf32, #tpu.memory_space<vmem>>, vector<8x128xf32>
    %c0_i32_4 = arith.constant 0 : i32
    %5 = arith.index_cast %c0_i32_4 : i32 to index
    %c0_5 = arith.constant 0 : index
    %c0_6 = arith.constant 0 : index
    %6 = vector.load %arg2[%5, %c0_5, %c0_6] : memref<8x8x512xbf16, #tpu.memory_space<vmem>>, vector<1x8x512xbf16>
    %7 = vector.shape_cast %6 : vector<1x8x512xbf16> to vector<8x512xbf16>
    %8 = arith.extf %7 : vector<8x512xbf16> to vector<8x512xf32>
    %9 = arith.truncf %3 : vector<8x128xf32> to vector<8x128xbf16>
    %c0_7 = arith.constant 0 : index
    %c0_8 = arith.constant 0 : index
    %10 = vector.load %arg3[%c0_7, %c0_8] : memref<128x512xbf16, #tpu.memory_space<vmem>>, vector<128x512xbf16>
    %cst = arith.constant dense<0.000000e+00> : vector<8x512xf32>
    %11 = tpu.matmul %9, %10, %cst {dimension_numbers = #tpu.dot_dimension_numbers<[1], [0], [0], [1], [0, 0, 1, 1], [], []>} : vector<8x128xbf16>, vector<128x512xbf16>, vector<8x512xf32> -> vector<8x512xf32>
    %12 = arith.addf %8, %11 : vector<8x512xf32>
    %13 = vector.extract_strided_slice %12 {offsets = [0, 0], sizes = [8, 128], strides = [1, 1]} : vector<8x512xf32> to vector<8x128xf32>
    %14 = arith.negf %13 : vector<8x128xf32>
    %15 = math.exp %14 : vector<8x128xf32>
    %cst_9 = arith.constant 1.000000e+00 : f32
    %16 = vector.broadcast %cst_9 : f32 to vector<8x128xf32>
    %17 = arith.addf %16, %15 : vector<8x128xf32>
    %18 = arith.divf %16, %17 : vector<8x128xf32>
    %19 = vector.extract_strided_slice %12 {offsets = [0, 128], sizes = [8, 128], strides = [1, 1]} : vector<8x512xf32> to vector<8x128xf32>
    %20 = arith.negf %19 : vector<8x128xf32>
    %21 = math.exp %20 : vector<8x128xf32>
    %cst_10 = arith.constant 1.000000e+00 : f32
    %22 = vector.broadcast %cst_10 : f32 to vector<8x128xf32>
    %23 = arith.addf %22, %21 : vector<8x128xf32>
    %24 = arith.divf %22, %23 : vector<8x128xf32>
    %25 = vector.extract_strided_slice %12 {offsets = [0, 256], sizes = [8, 128], strides = [1, 1]} : vector<8x512xf32> to vector<8x128xf32>
    %26 = math.tanh %25 : vector<8x128xf32>
    %27 = vector.extract_strided_slice %12 {offsets = [0, 384], sizes = [8, 128], strides = [1, 1]} : vector<8x512xf32> to vector<8x128xf32>
    %28 = arith.negf %27 : vector<8x128xf32>
    %29 = math.exp %28 : vector<8x128xf32>
    %cst_11 = arith.constant 1.000000e+00 : f32
    %30 = vector.broadcast %cst_11 : f32 to vector<8x128xf32>
    %31 = arith.addf %30, %29 : vector<8x128xf32>
    %32 = arith.divf %30, %31 : vector<8x128xf32>
    %33 = arith.mulf %24, %4 : vector<8x128xf32>
    %34 = arith.mulf %18, %26 : vector<8x128xf32>
    %35 = arith.addf %33, %34 : vector<8x128xf32>
    %36 = math.tanh %35 : vector<8x128xf32>
    %37 = arith.mulf %32, %36 : vector<8x128xf32>
    %c1_i32 = arith.constant 1 : i32
    %38 = arith.index_cast %c1_i32 : i32 to index
    %c0_12 = arith.constant 0 : index
    %c0_13 = arith.constant 0 : index
    %39 = vector.load %arg2[%38, %c0_12, %c0_13] : memref<8x8x512xbf16, #tpu.memory_space<vmem>>, vector<1x8x512xbf16>
    %40 = vector.shape_cast %39 : vector<1x8x512xbf16> to vector<8x512xbf16>
    %41 = arith.extf %40 : vector<8x512xbf16> to vector<8x512xf32>
    %42 = arith.truncf %37 : vector<8x128xf32> to vector<8x128xbf16>
    %c0_14 = arith.constant 0 : index
    %c0_15 = arith.constant 0 : index
    %43 = vector.load %arg3[%c0_14, %c0_15] : memref<128x512xbf16, #tpu.memory_space<vmem>>, vector<128x512xbf16>
    %cst_16 = arith.constant dense<0.000000e+00> : vector<8x512xf32>
    %44 = tpu.matmul %42, %43, %cst_16 {dimension_numbers = #tpu.dot_dimension_numbers<[1], [0], [0], [1], [0, 0, 1, 1], [], []>} : vector<8x128xbf16>, vector<128x512xbf16>, vector<8x512xf32> -> vector<8x512xf32>
    %45 = arith.addf %41, %44 : vector<8x512xf32>
    %46 = vector.extract_strided_slice %45 {offsets = [0, 0], sizes = [8, 128], strides = [1, 1]} : vector<8x512xf32> to vector<8x128xf32>
    %47 = arith.negf %46 : vector<8x128xf32>
    %48 = math.exp %47 : vector<8x128xf32>
    %cst_17 = arith.constant 1.000000e+00 : f32
    %49 = vector.broadcast %cst_17 : f32 to vector<8x128xf32>
    %50 = arith.addf %49, %48 : vector<8x128xf32>
    %51 = arith.divf %49, %50 : vector<8x128xf32>
    %52 = vector.extract_strided_slice %45 {offsets = [0, 128], sizes = [8, 128], strides = [1, 1]} : vector<8x512xf32> to vector<8x128xf32>
    %53 = arith.negf %52 : vector<8x128xf32>
    %54 = math.exp %53 : vector<8x128xf32>
    %cst_18 = arith.constant 1.000000e+00 : f32
    %55 = vector.broadcast %cst_18 : f32 to vector<8x128xf32>
    %56 = arith.addf %55, %54 : vector<8x128xf32>
    %57 = arith.divf %55, %56 : vector<8x128xf32>
    %58 = vector.extract_strided_slice %45 {offsets = [0, 256], sizes = [8, 128], strides = [1, 1]} : vector<8x512xf32> to vector<8x128xf32>
    %59 = math.tanh %58 : vector<8x128xf32>
    %60 = vector.extract_strided_slice %45 {offsets = [0, 384], sizes = [8, 128], strides = [1, 1]} : vector<8x512xf32> to vector<8x128xf32>
    %61 = arith.negf %60 : vector<8x128xf32>
    %62 = math.exp %61 : vector<8x128xf32>
    %cst_19 = arith.constant 1.000000e+00 : f32
    %63 = vector.broadcast %cst_19 : f32 to vector<8x128xf32>
    %64 = arith.addf %63, %62 : vector<8x128xf32>
    %65 = arith.divf %63, %64 : vector<8x128xf32>
    %66 = arith.mulf %57, %35 : vector<8x128xf32>
    %67 = arith.mulf %51, %59 : vector<8x128xf32>
    %68 = arith.addf %66, %67 : vector<8x128xf32>
    %69 = math.tanh %68 : vector<8x128xf32>
    %70 = arith.mulf %65, %69 : vector<8x128xf32>
    %c2_i32 = arith.constant 2 : i32
    %71 = arith.index_cast %c2_i32 : i32 to index
    %c0_20 = arith.constant 0 : index
    %c0_21 = arith.constant 0 : index
    %72 = vector.load %arg2[%71, %c0_20, %c0_21] : memref<8x8x512xbf16, #tpu.memory_space<vmem>>, vector<1x8x512xbf16>
    %73 = vector.shape_cast %72 : vector<1x8x512xbf16> to vector<8x512xbf16>
    %74 = arith.extf %73 : vector<8x512xbf16> to vector<8x512xf32>
    %75 = arith.truncf %70 : vector<8x128xf32> to vector<8x128xbf16>
    %c0_22 = arith.constant 0 : index
    %c0_23 = arith.constant 0 : index
    %76 = vector.load %arg3[%c0_22, %c0_23] : memref<128x512xbf16, #tpu.memory_space<vmem>>, vector<128x512xbf16>
    %cst_24 = arith.constant dense<0.000000e+00> : vector<8x512xf32>
    %77 = tpu.matmul %75, %76, %cst_24 {dimension_numbers = #tpu.dot_dimension_numbers<[1], [0], [0], [1], [0, 0, 1, 1], [], []>} : vector<8x128xbf16>, vector<128x512xbf16>, vector<8x512xf32> -> vector<8x512xf32>
    %78 = arith.addf %74, %77 : vector<8x512xf32>
    %79 = vector.extract_strided_slice %78 {offsets = [0, 0], sizes = [8, 128], strides = [1, 1]} : vector<8x512xf32> to vector<8x128xf32>
    %80 = arith.negf %79 : vector<8x128xf32>
    %81 = math.exp %80 : vector<8x128xf32>
    %cst_25 = arith.constant 1.000000e+00 : f32
    %82 = vector.broadcast %cst_25 : f32 to vector<8x128xf32>
    %83 = arith.addf %82, %81 : vector<8x128xf32>
    %84 = arith.divf %82, %83 : vector<8x128xf32>
    %85 = vector.extract_strided_slice %78 {offsets = [0, 128], sizes = [8, 128], strides = [1, 1]} : vector<8x512xf32> to vector<8x128xf32>
    %86 = arith.negf %85 : vector<8x128xf32>
    %87 = math.exp %86 : vector<8x128xf32>
    %cst_26 = arith.constant 1.000000e+00 : f32
    %88 = vector.broadcast %cst_26 : f32 to vector<8x128xf32>
    %89 = arith.addf %88, %87 : vector<8x128xf32>
    %90 = arith.divf %88, %89 : vector<8x128xf32>
    %91 = vector.extract_strided_slice %78 {offsets = [0, 256], sizes = [8, 128], strides = [1, 1]} : vector<8x512xf32> to vector<8x128xf32>
    %92 = math.tanh %91 : vector<8x128xf32>
    %93 = vector.extract_strided_slice %78 {offsets = [0, 384], sizes = [8, 128], strides = [1, 1]} : vector<8x512xf32> to vector<8x128xf32>
    %94 = arith.negf %93 : vector<8x128xf32>
    %95 = math.exp %94 : vector<8x128xf32>
    %cst_27 = arith.constant 1.000000e+00 : f32
    %96 = vector.broadcast %cst_27 : f32 to vector<8x128xf32>
    %97 = arith.addf %96, %95 : vector<8x128xf32>
    %98 = arith.divf %96, %97 : vector<8x128xf32>
    %99 = arith.mulf %90, %68 : vector<8x128xf32>
    %100 = arith.mulf %84, %92 : vector<8x128xf32>
    %101 = arith.addf %99, %100 : vector<8x128xf32>
    %102 = math.tanh %101 : vector<8x128xf32>
    %103 = arith.mulf %98, %102 : vector<8x128xf32>
    %c3_i32 = arith.constant 3 : i32
    %104 = arith.index_cast %c3_i32 : i32 to index
    %c0_28 = arith.constant 0 : index
    %c0_29 = arith.constant 0 : index
    %105 = vector.load %arg2[%104, %c0_28, %c0_29] : memref<8x8x512xbf16, #tpu.memory_space<vmem>>, vector<1x8x512xbf16>
    %106 = vector.shape_cast %105 : vector<1x8x512xbf16> to vector<8x512xbf16>
    %107 = arith.extf %106 : vector<8x512xbf16> to vector<8x512xf32>
    %108 = arith.truncf %103 : vector<8x128xf32> to vector<8x128xbf16>
    %c0_30 = arith.constant 0 : index
    %c0_31 = arith.constant 0 : index
    %109 = vector.load %arg3[%c0_30, %c0_31] : memref<128x512xbf16, #tpu.memory_space<vmem>>, vector<128x512xbf16>
    %cst_32 = arith.constant dense<0.000000e+00> : vector<8x512xf32>
    %110 = tpu.matmul %108, %109, %cst_32 {dimension_numbers = #tpu.dot_dimension_numbers<[1], [0], [0], [1], [0, 0, 1, 1], [], []>} : vector<8x128xbf16>, vector<128x512xbf16>, vector<8x512xf32> -> vector<8x512xf32>
    %111 = arith.addf %107, %110 : vector<8x512xf32>
    %112 = vector.extract_strided_slice %111 {offsets = [0, 0], sizes = [8, 128], strides = [1, 1]} : vector<8x512xf32> to vector<8x128xf32>
    %113 = arith.negf %112 : vector<8x128xf32>
    %114 = math.exp %113 : vector<8x128xf32>
    %cst_33 = arith.constant 1.000000e+00 : f32
    %115 = vector.broadcast %cst_33 : f32 to vector<8x128xf32>
    %116 = arith.addf %115, %114 : vector<8x128xf32>
    %117 = arith.divf %115, %116 : vector<8x128xf32>
    %118 = vector.extract_strided_slice %111 {offsets = [0, 128], sizes = [8, 128], strides = [1, 1]} : vector<8x512xf32> to vector<8x128xf32>
    %119 = arith.negf %118 : vector<8x128xf32>
    %120 = math.exp %119 : vector<8x128xf32>
    %cst_34 = arith.constant 1.000000e+00 : f32
    %121 = vector.broadcast %cst_34 : f32 to vector<8x128xf32>
    %122 = arith.addf %121, %120 : vector<8x128xf32>
    %123 = arith.divf %121, %122 : vector<8x128xf32>
    %124 = vector.extract_strided_slice %111 {offsets = [0, 256], sizes = [8, 128], strides = [1, 1]} : vector<8x512xf32> to vector<8x128xf32>
    %125 = math.tanh %124 : vector<8x128xf32>
    %126 = vector.extract_strided_slice %111 {offsets = [0, 384], sizes = [8, 128], strides = [1, 1]} : vector<8x512xf32> to vector<8x128xf32>
    %127 = arith.negf %126 : vector<8x128xf32>
    %128 = math.exp %127 : vector<8x128xf32>
    %cst_35 = arith.constant 1.000000e+00 : f32
    %129 = vector.broadcast %cst_35 : f32 to vector<8x128xf32>
    %130 = arith.addf %129, %128 : vector<8x128xf32>
    %131 = arith.divf %129, %130 : vector<8x128xf32>
    %132 = arith.mulf %123, %101 : vector<8x128xf32>
    %133 = arith.mulf %117, %125 : vector<8x128xf32>
    %134 = arith.addf %132, %133 : vector<8x128xf32>
    %135 = math.tanh %134 : vector<8x128xf32>
    %136 = arith.mulf %131, %135 : vector<8x128xf32>
    %c4_i32 = arith.constant 4 : i32
    %137 = arith.index_cast %c4_i32 : i32 to index
    %c0_36 = arith.constant 0 : index
    %c0_37 = arith.constant 0 : index
    %138 = vector.load %arg2[%137, %c0_36, %c0_37] : memref<8x8x512xbf16, #tpu.memory_space<vmem>>, vector<1x8x512xbf16>
    %139 = vector.shape_cast %138 : vector<1x8x512xbf16> to vector<8x512xbf16>
    %140 = arith.extf %139 : vector<8x512xbf16> to vector<8x512xf32>
    %141 = arith.truncf %136 : vector<8x128xf32> to vector<8x128xbf16>
    %c0_38 = arith.constant 0 : index
    %c0_39 = arith.constant 0 : index
    %142 = vector.load %arg3[%c0_38, %c0_39] : memref<128x512xbf16, #tpu.memory_space<vmem>>, vector<128x512xbf16>
    %cst_40 = arith.constant dense<0.000000e+00> : vector<8x512xf32>
    %143 = tpu.matmul %141, %142, %cst_40 {dimension_numbers = #tpu.dot_dimension_numbers<[1], [0], [0], [1], [0, 0, 1, 1], [], []>} : vector<8x128xbf16>, vector<128x512xbf16>, vector<8x512xf32> -> vector<8x512xf32>
    %144 = arith.addf %140, %143 : vector<8x512xf32>
    %145 = vector.extract_strided_slice %144 {offsets = [0, 0], sizes = [8, 128], strides = [1, 1]} : vector<8x512xf32> to vector<8x128xf32>
    %146 = arith.negf %145 : vector<8x128xf32>
    %147 = math.exp %146 : vector<8x128xf32>
    %cst_41 = arith.constant 1.000000e+00 : f32
    %148 = vector.broadcast %cst_41 : f32 to vector<8x128xf32>
    %149 = arith.addf %148, %147 : vector<8x128xf32>
    %150 = arith.divf %148, %149 : vector<8x128xf32>
    %151 = vector.extract_strided_slice %144 {offsets = [0, 128], sizes = [8, 128], strides = [1, 1]} : vector<8x512xf32> to vector<8x128xf32>
    %152 = arith.negf %151 : vector<8x128xf32>
    %153 = math.exp %152 : vector<8x128xf32>
    %cst_42 = arith.constant 1.000000e+00 : f32
    %154 = vector.broadcast %cst_42 : f32 to vector<8x128xf32>
    %155 = arith.addf %154, %153 : vector<8x128xf32>
    %156 = arith.divf %154, %155 : vector<8x128xf32>
    %157 = vector.extract_strided_slice %144 {offsets = [0, 256], sizes = [8, 128], strides = [1, 1]} : vector<8x512xf32> to vector<8x128xf32>
    %158 = math.tanh %157 : vector<8x128xf32>
    %159 = vector.extract_strided_slice %144 {offsets = [0, 384], sizes = [8, 128], strides = [1, 1]} : vector<8x512xf32> to vector<8x128xf32>
    %160 = arith.negf %159 : vector<8x128xf32>
    %161 = math.exp %160 : vector<8x128xf32>
    %cst_43 = arith.constant 1.000000e+00 : f32
    %162 = vector.broadcast %cst_43 : f32 to vector<8x128xf32>
    %163 = arith.addf %162, %161 : vector<8x128xf32>
    %164 = arith.divf %162, %163 : vector<8x128xf32>
    %165 = arith.mulf %156, %134 : vector<8x128xf32>
    %166 = arith.mulf %150, %158 : vector<8x128xf32>
    %167 = arith.addf %165, %166 : vector<8x128xf32>
    %168 = math.tanh %167 : vector<8x128xf32>
    %169 = arith.mulf %164, %168 : vector<8x128xf32>
    %c5_i32 = arith.constant 5 : i32
    %170 = arith.index_cast %c5_i32 : i32 to index
    %c0_44 = arith.constant 0 : index
    %c0_45 = arith.constant 0 : index
    %171 = vector.load %arg2[%170, %c0_44, %c0_45] : memref<8x8x512xbf16, #tpu.memory_space<vmem>>, vector<1x8x512xbf16>
    %172 = vector.shape_cast %171 : vector<1x8x512xbf16> to vector<8x512xbf16>
    %173 = arith.extf %172 : vector<8x512xbf16> to vector<8x512xf32>
    %174 = arith.truncf %169 : vector<8x128xf32> to vector<8x128xbf16>
    %c0_46 = arith.constant 0 : index
    %c0_47 = arith.constant 0 : index
    %175 = vector.load %arg3[%c0_46, %c0_47] : memref<128x512xbf16, #tpu.memory_space<vmem>>, vector<128x512xbf16>
    %cst_48 = arith.constant dense<0.000000e+00> : vector<8x512xf32>
    %176 = tpu.matmul %174, %175, %cst_48 {dimension_numbers = #tpu.dot_dimension_numbers<[1], [0], [0], [1], [0, 0, 1, 1], [], []>} : vector<8x128xbf16>, vector<128x512xbf16>, vector<8x512xf32> -> vector<8x512xf32>
    %177 = arith.addf %173, %176 : vector<8x512xf32>
    %178 = vector.extract_strided_slice %177 {offsets = [0, 0], sizes = [8, 128], strides = [1, 1]} : vector<8x512xf32> to vector<8x128xf32>
    %179 = arith.negf %178 : vector<8x128xf32>
    %180 = math.exp %179 : vector<8x128xf32>
    %cst_49 = arith.constant 1.000000e+00 : f32
    %181 = vector.broadcast %cst_49 : f32 to vector<8x128xf32>
    %182 = arith.addf %181, %180 : vector<8x128xf32>
    %183 = arith.divf %181, %182 : vector<8x128xf32>
    %184 = vector.extract_strided_slice %177 {offsets = [0, 128], sizes = [8, 128], strides = [1, 1]} : vector<8x512xf32> to vector<8x128xf32>
    %185 = arith.negf %184 : vector<8x128xf32>
    %186 = math.exp %185 : vector<8x128xf32>
    %cst_50 = arith.constant 1.000000e+00 : f32
    %187 = vector.broadcast %cst_50 : f32 to vector<8x128xf32>
    %188 = arith.addf %187, %186 : vector<8x128xf32>
    %189 = arith.divf %187, %188 : vector<8x128xf32>
    %190 = vector.extract_strided_slice %177 {offsets = [0, 256], sizes = [8, 128], strides = [1, 1]} : vector<8x512xf32> to vector<8x128xf32>
    %191 = math.tanh %190 : vector<8x128xf32>
    %192 = vector.extract_strided_slice %177 {offsets = [0, 384], sizes = [8, 128], strides = [1, 1]} : vector<8x512xf32> to vector<8x128xf32>
    %193 = arith.negf %192 : vector<8x128xf32>
    %194 = math.exp %193 : vector<8x128xf32>
    %cst_51 = arith.constant 1.000000e+00 : f32
    %195 = vector.broadcast %cst_51 : f32 to vector<8x128xf32>
    %196 = arith.addf %195, %194 : vector<8x128xf32>
    %197 = arith.divf %195, %196 : vector<8x128xf32>
    %198 = arith.mulf %189, %167 : vector<8x128xf32>
    %199 = arith.mulf %183, %191 : vector<8x128xf32>
    %200 = arith.addf %198, %199 : vector<8x128xf32>
    %201 = math.tanh %200 : vector<8x128xf32>
    %202 = arith.mulf %197, %201 : vector<8x128xf32>
    %c6_i32 = arith.constant 6 : i32
    %203 = arith.index_cast %c6_i32 : i32 to index
    %c0_52 = arith.constant 0 : index
    %c0_53 = arith.constant 0 : index
    %204 = vector.load %arg2[%203, %c0_52, %c0_53] : memref<8x8x512xbf16, #tpu.memory_space<vmem>>, vector<1x8x512xbf16>
    %205 = vector.shape_cast %204 : vector<1x8x512xbf16> to vector<8x512xbf16>
    %206 = arith.extf %205 : vector<8x512xbf16> to vector<8x512xf32>
    %207 = arith.truncf %202 : vector<8x128xf32> to vector<8x128xbf16>
    %c0_54 = arith.constant 0 : index
    %c0_55 = arith.constant 0 : index
    %208 = vector.load %arg3[%c0_54, %c0_55] : memref<128x512xbf16, #tpu.memory_space<vmem>>, vector<128x512xbf16>
    %cst_56 = arith.constant dense<0.000000e+00> : vector<8x512xf32>
    %209 = tpu.matmul %207, %208, %cst_56 {dimension_numbers = #tpu.dot_dimension_numbers<[1], [0], [0], [1], [0, 0, 1, 1], [], []>} : vector<8x128xbf16>, vector<128x512xbf16>, vector<8x512xf32> -> vector<8x512xf32>
    %210 = arith.addf %206, %209 : vector<8x512xf32>
    %211 = vector.extract_strided_slice %210 {offsets = [0, 0], sizes = [8, 128], strides = [1, 1]} : vector<8x512xf32> to vector<8x128xf32>
    %212 = arith.negf %211 : vector<8x128xf32>
    %213 = math.exp %212 : vector<8x128xf32>
    %cst_57 = arith.constant 1.000000e+00 : f32
    %214 = vector.broadcast %cst_57 : f32 to vector<8x128xf32>
    %215 = arith.addf %214, %213 : vector<8x128xf32>
    %216 = arith.divf %214, %215 : vector<8x128xf32>
    %217 = vector.extract_strided_slice %210 {offsets = [0, 128], sizes = [8, 128], strides = [1, 1]} : vector<8x512xf32> to vector<8x128xf32>
    %218 = arith.negf %217 : vector<8x128xf32>
    %219 = math.exp %218 : vector<8x128xf32>
    %cst_58 = arith.constant 1.000000e+00 : f32
    %220 = vector.broadcast %cst_58 : f32 to vector<8x128xf32>
    %221 = arith.addf %220, %219 : vector<8x128xf32>
    %222 = arith.divf %220, %221 : vector<8x128xf32>
    %223 = vector.extract_strided_slice %210 {offsets = [0, 256], sizes = [8, 128], strides = [1, 1]} : vector<8x512xf32> to vector<8x128xf32>
    %224 = math.tanh %223 : vector<8x128xf32>
    %225 = vector.extract_strided_slice %210 {offsets = [0, 384], sizes = [8, 128], strides = [1, 1]} : vector<8x512xf32> to vector<8x128xf32>
    %226 = arith.negf %225 : vector<8x128xf32>
    %227 = math.exp %226 : vector<8x128xf32>
    %cst_59 = arith.constant 1.000000e+00 : f32
    %228 = vector.broadcast %cst_59 : f32 to vector<8x128xf32>
    %229 = arith.addf %228, %227 : vector<8x128xf32>
    %230 = arith.divf %228, %229 : vector<8x128xf32>
    %231 = arith.mulf %222, %200 : vector<8x128xf32>
    %232 = arith.mulf %216, %224 : vector<8x128xf32>
    %233 = arith.addf %231, %232 : vector<8x128xf32>
    %234 = math.tanh %233 : vector<8x128xf32>
    %235 = arith.mulf %230, %234 : vector<8x128xf32>
    %c7_i32 = arith.constant 7 : i32
    %236 = arith.index_cast %c7_i32 : i32 to index
    %c0_60 = arith.constant 0 : index
    %c0_61 = arith.constant 0 : index
    %237 = vector.load %arg2[%236, %c0_60, %c0_61] : memref<8x8x512xbf16, #tpu.memory_space<vmem>>, vector<1x8x512xbf16>
    %238 = vector.shape_cast %237 : vector<1x8x512xbf16> to vector<8x512xbf16>
    %239 = arith.extf %238 : vector<8x512xbf16> to vector<8x512xf32>
    %240 = arith.truncf %235 : vector<8x128xf32> to vector<8x128xbf16>
    %c0_62 = arith.constant 0 : index
    %c0_63 = arith.constant 0 : index
    %241 = vector.load %arg3[%c0_62, %c0_63] : memref<128x512xbf16, #tpu.memory_space<vmem>>, vector<128x512xbf16>
    %cst_64 = arith.constant dense<0.000000e+00> : vector<8x512xf32>
    %242 = tpu.matmul %240, %241, %cst_64 {dimension_numbers = #tpu.dot_dimension_numbers<[1], [0], [0], [1], [0, 0, 1, 1], [], []>} : vector<8x128xbf16>, vector<128x512xbf16>, vector<8x512xf32> -> vector<8x512xf32>
    %243 = arith.addf %239, %242 : vector<8x512xf32>
    %244 = vector.extract_strided_slice %243 {offsets = [0, 0], sizes = [8, 128], strides = [1, 1]} : vector<8x512xf32> to vector<8x128xf32>
    %245 = arith.negf %244 : vector<8x128xf32>
    %246 = math.exp %245 : vector<8x128xf32>
    %cst_65 = arith.constant 1.000000e+00 : f32
    %247 = vector.broadcast %cst_65 : f32 to vector<8x128xf32>
    %248 = arith.addf %247, %246 : vector<8x128xf32>
    %249 = arith.divf %247, %248 : vector<8x128xf32>
    %250 = vector.extract_strided_slice %243 {offsets = [0, 128], sizes = [8, 128], strides = [1, 1]} : vector<8x512xf32> to vector<8x128xf32>
    %251 = arith.negf %250 : vector<8x128xf32>
    %252 = math.exp %251 : vector<8x128xf32>
    %cst_66 = arith.constant 1.000000e+00 : f32
    %253 = vector.broadcast %cst_66 : f32 to vector<8x128xf32>
    %254 = arith.addf %253, %252 : vector<8x128xf32>
    %255 = arith.divf %253, %254 : vector<8x128xf32>
    %256 = vector.extract_strided_slice %243 {offsets = [0, 256], sizes = [8, 128], strides = [1, 1]} : vector<8x512xf32> to vector<8x128xf32>
    %257 = math.tanh %256 : vector<8x128xf32>
    %258 = vector.extract_strided_slice %243 {offsets = [0, 384], sizes = [8, 128], strides = [1, 1]} : vector<8x512xf32> to vector<8x128xf32>
    %259 = arith.negf %258 : vector<8x128xf32>
    %260 = math.exp %259 : vector<8x128xf32>
    %cst_67 = arith.constant 1.000000e+00 : f32
    %261 = vector.broadcast %cst_67 : f32 to vector<8x128xf32>
    %262 = arith.addf %261, %260 : vector<8x128xf32>
    %263 = arith.divf %261, %262 : vector<8x128xf32>
    %264 = arith.mulf %255, %233 : vector<8x128xf32>
    %265 = arith.mulf %249, %257 : vector<8x128xf32>
    %266 = arith.addf %264, %265 : vector<8x128xf32>
    %267 = math.tanh %266 : vector<8x128xf32>
    %268 = arith.mulf %263, %267 : vector<8x128xf32>
    %c8_i32 = arith.constant 8 : i32
    %c0_68 = arith.constant 0 : index
    %c0_69 = arith.constant 0 : index
    %269 = vector.load %arg8[%c0_68, %c0_69] : memref<8x128xf32, #tpu.memory_space<vmem>>, vector<8x128xf32>
    tpu.vector_store %arg8[%c0_68, %c0_69], %268 {strides = array<i32>} : memref<8x128xf32, #tpu.memory_space<vmem>>, vector<8x128xf32>,
    %c0_70 = arith.constant 0 : index
    %c0_71 = arith.constant 0 : index
    %270 = vector.load %arg9[%c0_70, %c0_71] : memref<8x128xf32, #tpu.memory_space<vmem>>, vector<8x128xf32>
    tpu.vector_store %arg9[%c0_70, %c0_71], %266 {strides = array<i32>} : memref<8x128xf32, #tpu.memory_space<vmem>>, vector<8x128xf32>,
    %c0_i32_72 = arith.constant 0 : i32
    %271 = arith.cmpi eq, %arg1, %c0_i32_72 : i32
    %272 = arith.extui %271 : i1 to i32
    %c0_i32_73 = arith.constant 0 : i32
    %273 = arith.cmpi ne, %272, %c0_i32_73 : i32
    scf.if %273 {
      %c0_74 = arith.constant 0 : index
      %c0_75 = arith.constant 0 : index
      %274 = vector.load %arg6[%c0_74, %c0_75] : memref<8x128xf32, #tpu.memory_space<vmem>>, vector<8x128xf32>
      tpu.vector_store %arg6[%c0_74, %c0_75], %268 {strides = array<i32>} : memref<8x128xf32, #tpu.memory_space<vmem>>, vector<8x128xf32>,
      %c0_76 = arith.constant 0 : index
      %c0_77 = arith.constant 0 : index
      %275 = vector.load %arg7[%c0_76, %c0_77] : memref<8x128xf32, #tpu.memory_space<vmem>>, vector<8x128xf32>
      tpu.vector_store %arg7[%c0_76, %c0_77], %266 {strides = array<i32>} : memref<8x128xf32, #tpu.memory_space<vmem>>, vector<8x128xf32>,
    } else {
    }
    return
  }
  func.func @transform_0(%arg0: i32, %arg1: i32) -> (i32, i32, i32) {
    %c0_i32 = arith.constant 0 : i32
    %c0_i32_0 = arith.constant 0 : i32
    return %arg1, %arg0, %c0_i32 : i32, i32, i32
  }
  func.func @transform_1(%arg0: i32, %arg1: i32) -> (i32, i32) {
    %c0_i32 = arith.constant 0 : i32
    %c0_i32_0 = arith.constant 0 : i32
    %c0_i32_1 = arith.constant 0 : i32
    return %c0_i32, %c0_i32_0 : i32, i32
  }
  func.func @transform_2(%arg0: i32, %arg1: i32) -> (i32, i32) {
    %c0_i32 = arith.constant 0 : i32
    %c0_i32_0 = arith.constant 0 : i32
    return %arg0, %c0_i32 : i32, i32
  }
  func.func @transform_3(%arg0: i32, %arg1: i32) -> (i32, i32) {
    %c0_i32 = arith.constant 0 : i32
    %c0_i32_0 = arith.constant 0 : i32
    return %arg0, %c0_i32 : i32, i32
  }
  func.func @transform_4(%arg0: i32, %arg1: i32) -> (i32, i32) {
    %c0_i32 = arith.constant 0 : i32
    %c0_i32_0 = arith.constant 0 : i32
    return %arg0, %c0_i32 : i32, i32
  }
  func.func @transform_5(%arg0: i32, %arg1: i32) -> (i32, i32) {
    %c0_i32 = arith.constant 0 : i32
    %c0_i32_0 = arith.constant 0 : i32
    return %arg0, %c0_i32 : i32, i32
  }
}

module attributes {stable_mosaic.version = 11 : i64} {
  func.func @_lstm_block_kernel(%arg0: i32, %arg1: i32, %arg2: memref<8x8x512xbf16, #tpu.memory_space<vmem>>, %arg3: memref<128x512xbf16, #tpu.memory_space<vmem>>, %arg4: memref<8x128xf32, #tpu.memory_space<vmem>>, %arg5: memref<8x128xf32, #tpu.memory_space<vmem>>, %arg6: memref<8x8x128xbf16, #tpu.memory_space<vmem>>, %arg7: memref<8x128xf32, #tpu.memory_space<vmem>>, %arg8: memref<8x128xf32, #tpu.memory_space<vmem>>, %arg9: memref<8x128xf32, #tpu.memory_space<vmem>>, %arg10: memref<8x128xf32, #tpu.memory_space<vmem>>) attributes {dimension_semantics = [#tpu.dimension_semantics<parallel>, #tpu.dimension_semantics<arbitrary>], iteration_bounds = array<i64: 1, 1>, scalar_prefetch = 0 : i64, scratch_operands = 2 : i64, tpu.core_type = #tpu.core_type<tc>, window_params = [{transform_indices = @transform_0, window_bounds = array<i64: 8, 8, 512>}, {pipeline_mode = #tpu.pipeline_mode<synchronous>, transform_indices = @transform_1, window_bounds = array<i64: 128, 512>}, {transform_indices = @transform_2, window_bounds = array<i64: 8, 128>}, {transform_indices = @transform_3, window_bounds = array<i64: 8, 128>}, {transform_indices = @transform_4, window_bounds = array<i64: 8, 8, 128>}, {transform_indices = @transform_5, window_bounds = array<i64: 8, 128>}, {transform_indices = @transform_6, window_bounds = array<i64: 8, 128>}]} {
    %c0_i32 = arith.constant 0 : i32
    %0 = arith.cmpi eq, %arg1, %c0_i32 : i32
    %1 = arith.extui %0 : i1 to i32
    %c0_i32_0 = arith.constant 0 : i32
    %2 = arith.cmpi ne, %1, %c0_i32_0 : i32
    scf.if %2 {
      %c0_90 = arith.constant 0 : index
      %c0_91 = arith.constant 0 : index
      %314 = vector.load %arg4[%c0_90, %c0_91] : memref<8x128xf32, #tpu.memory_space<vmem>>, vector<8x128xf32>
      %c0_92 = arith.constant 0 : index
      %c0_93 = arith.constant 0 : index
      %315 = vector.load %arg9[%c0_92, %c0_93] : memref<8x128xf32, #tpu.memory_space<vmem>>, vector<8x128xf32>
      tpu.vector_store %arg9[%c0_92, %c0_93], %314 {strides = array<i32>} : memref<8x128xf32, #tpu.memory_space<vmem>>, vector<8x128xf32>,
      %c0_94 = arith.constant 0 : index
      %c0_95 = arith.constant 0 : index
      %316 = vector.load %arg5[%c0_94, %c0_95] : memref<8x128xf32, #tpu.memory_space<vmem>>, vector<8x128xf32>
      %c0_96 = arith.constant 0 : index
      %c0_97 = arith.constant 0 : index
      %317 = vector.load %arg10[%c0_96, %c0_97] : memref<8x128xf32, #tpu.memory_space<vmem>>, vector<8x128xf32>
      tpu.vector_store %arg10[%c0_96, %c0_97], %316 {strides = array<i32>} : memref<8x128xf32, #tpu.memory_space<vmem>>, vector<8x128xf32>,
    } else {
    }
    %c0 = arith.constant 0 : index
    %c0_1 = arith.constant 0 : index
    %3 = vector.load %arg9[%c0, %c0_1] : memref<8x128xf32, #tpu.memory_space<vmem>>, vector<8x128xf32>
    %c0_2 = arith.constant 0 : index
    %c0_3 = arith.constant 0 : index
    %4 = vector.load %arg10[%c0_2, %c0_3] : memref<8x128xf32, #tpu.memory_space<vmem>>, vector<8x128xf32>
    %c0_i32_4 = arith.constant 0 : i32
    %5 = arith.index_cast %c0_i32_4 : i32 to index
    %c0_5 = arith.constant 0 : index
    %c0_6 = arith.constant 0 : index
    %6 = vector.load %arg2[%5, %c0_5, %c0_6] : memref<8x8x512xbf16, #tpu.memory_space<vmem>>, vector<1x8x512xbf16>
    %7 = vector.shape_cast %6 : vector<1x8x512xbf16> to vector<8x512xbf16>
    %8 = arith.extf %7 : vector<8x512xbf16> to vector<8x512xf32>
    %9 = arith.truncf %3 : vector<8x128xf32> to vector<8x128xbf16>
    %c0_7 = arith.constant 0 : index
    %c0_8 = arith.constant 0 : index
    %10 = vector.load %arg3[%c0_7, %c0_8] : memref<128x512xbf16, #tpu.memory_space<vmem>>, vector<128x512xbf16>
    %cst = arith.constant dense<0.000000e+00> : vector<8x512xf32>
    %11 = tpu.matmul %9, %10, %cst {dimension_numbers = #tpu.dot_dimension_numbers<[1], [0], [0], [1], [0, 0, 1, 1], [], []>} : vector<8x128xbf16>, vector<128x512xbf16>, vector<8x512xf32> -> vector<8x512xf32>
    %12 = arith.addf %8, %11 : vector<8x512xf32>
    %13 = vector.extract_strided_slice %12 {offsets = [0, 0], sizes = [8, 128], strides = [1, 1]} : vector<8x512xf32> to vector<8x128xf32>
    %14 = arith.negf %13 : vector<8x128xf32>
    %15 = math.exp %14 : vector<8x128xf32>
    %cst_9 = arith.constant 1.000000e+00 : f32
    %16 = vector.broadcast %cst_9 : f32 to vector<8x128xf32>
    %17 = arith.addf %16, %15 : vector<8x128xf32>
    %18 = arith.divf %16, %17 : vector<8x128xf32>
    %19 = vector.extract_strided_slice %12 {offsets = [0, 128], sizes = [8, 128], strides = [1, 1]} : vector<8x512xf32> to vector<8x128xf32>
    %20 = arith.negf %19 : vector<8x128xf32>
    %21 = math.exp %20 : vector<8x128xf32>
    %cst_10 = arith.constant 1.000000e+00 : f32
    %22 = vector.broadcast %cst_10 : f32 to vector<8x128xf32>
    %23 = arith.addf %22, %21 : vector<8x128xf32>
    %24 = arith.divf %22, %23 : vector<8x128xf32>
    %25 = vector.extract_strided_slice %12 {offsets = [0, 256], sizes = [8, 128], strides = [1, 1]} : vector<8x512xf32> to vector<8x128xf32>
    %26 = math.tanh %25 : vector<8x128xf32>
    %27 = vector.extract_strided_slice %12 {offsets = [0, 384], sizes = [8, 128], strides = [1, 1]} : vector<8x512xf32> to vector<8x128xf32>
    %28 = arith.negf %27 : vector<8x128xf32>
    %29 = math.exp %28 : vector<8x128xf32>
    %cst_11 = arith.constant 1.000000e+00 : f32
    %30 = vector.broadcast %cst_11 : f32 to vector<8x128xf32>
    %31 = arith.addf %30, %29 : vector<8x128xf32>
    %32 = arith.divf %30, %31 : vector<8x128xf32>
    %33 = arith.mulf %24, %4 : vector<8x128xf32>
    %34 = arith.mulf %18, %26 : vector<8x128xf32>
    %35 = arith.addf %33, %34 : vector<8x128xf32>
    %36 = math.tanh %35 : vector<8x128xf32>
    %37 = arith.mulf %32, %36 : vector<8x128xf32>
    %38 = arith.truncf %37 : vector<8x128xf32> to vector<8x128xbf16>
    %39 = arith.index_cast %c0_i32_4 : i32 to index
    %c0_12 = arith.constant 0 : index
    %c0_13 = arith.constant 0 : index
    %40 = vector.load %arg6[%39, %c0_12, %c0_13] : memref<8x8x128xbf16, #tpu.memory_space<vmem>>, vector<1x8x128xbf16>
    %41 = vector.shape_cast %40 : vector<1x8x128xbf16> to vector<8x128xbf16>
    %42 = vector.shape_cast %38 : vector<8x128xbf16> to vector<1x8x128xbf16>
    tpu.vector_store %arg6[%39, %c0_12, %c0_13], %42 {strides = array<i32>} : memref<8x8x128xbf16, #tpu.memory_space<vmem>>, vector<1x8x128xbf16>,
    %c1_i32 = arith.constant 1 : i32
    %43 = arith.index_cast %c1_i32 : i32 to index
    %c0_14 = arith.constant 0 : index
    %c0_15 = arith.constant 0 : index
    %44 = vector.load %arg2[%43, %c0_14, %c0_15] : memref<8x8x512xbf16, #tpu.memory_space<vmem>>, vector<1x8x512xbf16>
    %45 = vector.shape_cast %44 : vector<1x8x512xbf16> to vector<8x512xbf16>
    %46 = arith.extf %45 : vector<8x512xbf16> to vector<8x512xf32>
    %47 = arith.truncf %37 : vector<8x128xf32> to vector<8x128xbf16>
    %c0_16 = arith.constant 0 : index
    %c0_17 = arith.constant 0 : index
    %48 = vector.load %arg3[%c0_16, %c0_17] : memref<128x512xbf16, #tpu.memory_space<vmem>>, vector<128x512xbf16>
    %cst_18 = arith.constant dense<0.000000e+00> : vector<8x512xf32>
    %49 = tpu.matmul %47, %48, %cst_18 {dimension_numbers = #tpu.dot_dimension_numbers<[1], [0], [0], [1], [0, 0, 1, 1], [], []>} : vector<8x128xbf16>, vector<128x512xbf16>, vector<8x512xf32> -> vector<8x512xf32>
    %50 = arith.addf %46, %49 : vector<8x512xf32>
    %51 = vector.extract_strided_slice %50 {offsets = [0, 0], sizes = [8, 128], strides = [1, 1]} : vector<8x512xf32> to vector<8x128xf32>
    %52 = arith.negf %51 : vector<8x128xf32>
    %53 = math.exp %52 : vector<8x128xf32>
    %cst_19 = arith.constant 1.000000e+00 : f32
    %54 = vector.broadcast %cst_19 : f32 to vector<8x128xf32>
    %55 = arith.addf %54, %53 : vector<8x128xf32>
    %56 = arith.divf %54, %55 : vector<8x128xf32>
    %57 = vector.extract_strided_slice %50 {offsets = [0, 128], sizes = [8, 128], strides = [1, 1]} : vector<8x512xf32> to vector<8x128xf32>
    %58 = arith.negf %57 : vector<8x128xf32>
    %59 = math.exp %58 : vector<8x128xf32>
    %cst_20 = arith.constant 1.000000e+00 : f32
    %60 = vector.broadcast %cst_20 : f32 to vector<8x128xf32>
    %61 = arith.addf %60, %59 : vector<8x128xf32>
    %62 = arith.divf %60, %61 : vector<8x128xf32>
    %63 = vector.extract_strided_slice %50 {offsets = [0, 256], sizes = [8, 128], strides = [1, 1]} : vector<8x512xf32> to vector<8x128xf32>
    %64 = math.tanh %63 : vector<8x128xf32>
    %65 = vector.extract_strided_slice %50 {offsets = [0, 384], sizes = [8, 128], strides = [1, 1]} : vector<8x512xf32> to vector<8x128xf32>
    %66 = arith.negf %65 : vector<8x128xf32>
    %67 = math.exp %66 : vector<8x128xf32>
    %cst_21 = arith.constant 1.000000e+00 : f32
    %68 = vector.broadcast %cst_21 : f32 to vector<8x128xf32>
    %69 = arith.addf %68, %67 : vector<8x128xf32>
    %70 = arith.divf %68, %69 : vector<8x128xf32>
    %71 = arith.mulf %62, %35 : vector<8x128xf32>
    %72 = arith.mulf %56, %64 : vector<8x128xf32>
    %73 = arith.addf %71, %72 : vector<8x128xf32>
    %74 = math.tanh %73 : vector<8x128xf32>
    %75 = arith.mulf %70, %74 : vector<8x128xf32>
    %76 = arith.truncf %75 : vector<8x128xf32> to vector<8x128xbf16>
    %77 = arith.index_cast %c1_i32 : i32 to index
    %c0_22 = arith.constant 0 : index
    %c0_23 = arith.constant 0 : index
    %78 = vector.load %arg6[%77, %c0_22, %c0_23] : memref<8x8x128xbf16, #tpu.memory_space<vmem>>, vector<1x8x128xbf16>
    %79 = vector.shape_cast %78 : vector<1x8x128xbf16> to vector<8x128xbf16>
    %80 = vector.shape_cast %76 : vector<8x128xbf16> to vector<1x8x128xbf16>
    tpu.vector_store %arg6[%77, %c0_22, %c0_23], %80 {strides = array<i32>} : memref<8x8x128xbf16, #tpu.memory_space<vmem>>, vector<1x8x128xbf16>,
    %c2_i32 = arith.constant 2 : i32
    %81 = arith.index_cast %c2_i32 : i32 to index
    %c0_24 = arith.constant 0 : index
    %c0_25 = arith.constant 0 : index
    %82 = vector.load %arg2[%81, %c0_24, %c0_25] : memref<8x8x512xbf16, #tpu.memory_space<vmem>>, vector<1x8x512xbf16>
    %83 = vector.shape_cast %82 : vector<1x8x512xbf16> to vector<8x512xbf16>
    %84 = arith.extf %83 : vector<8x512xbf16> to vector<8x512xf32>
    %85 = arith.truncf %75 : vector<8x128xf32> to vector<8x128xbf16>
    %c0_26 = arith.constant 0 : index
    %c0_27 = arith.constant 0 : index
    %86 = vector.load %arg3[%c0_26, %c0_27] : memref<128x512xbf16, #tpu.memory_space<vmem>>, vector<128x512xbf16>
    %cst_28 = arith.constant dense<0.000000e+00> : vector<8x512xf32>
    %87 = tpu.matmul %85, %86, %cst_28 {dimension_numbers = #tpu.dot_dimension_numbers<[1], [0], [0], [1], [0, 0, 1, 1], [], []>} : vector<8x128xbf16>, vector<128x512xbf16>, vector<8x512xf32> -> vector<8x512xf32>
    %88 = arith.addf %84, %87 : vector<8x512xf32>
    %89 = vector.extract_strided_slice %88 {offsets = [0, 0], sizes = [8, 128], strides = [1, 1]} : vector<8x512xf32> to vector<8x128xf32>
    %90 = arith.negf %89 : vector<8x128xf32>
    %91 = math.exp %90 : vector<8x128xf32>
    %cst_29 = arith.constant 1.000000e+00 : f32
    %92 = vector.broadcast %cst_29 : f32 to vector<8x128xf32>
    %93 = arith.addf %92, %91 : vector<8x128xf32>
    %94 = arith.divf %92, %93 : vector<8x128xf32>
    %95 = vector.extract_strided_slice %88 {offsets = [0, 128], sizes = [8, 128], strides = [1, 1]} : vector<8x512xf32> to vector<8x128xf32>
    %96 = arith.negf %95 : vector<8x128xf32>
    %97 = math.exp %96 : vector<8x128xf32>
    %cst_30 = arith.constant 1.000000e+00 : f32
    %98 = vector.broadcast %cst_30 : f32 to vector<8x128xf32>
    %99 = arith.addf %98, %97 : vector<8x128xf32>
    %100 = arith.divf %98, %99 : vector<8x128xf32>
    %101 = vector.extract_strided_slice %88 {offsets = [0, 256], sizes = [8, 128], strides = [1, 1]} : vector<8x512xf32> to vector<8x128xf32>
    %102 = math.tanh %101 : vector<8x128xf32>
    %103 = vector.extract_strided_slice %88 {offsets = [0, 384], sizes = [8, 128], strides = [1, 1]} : vector<8x512xf32> to vector<8x128xf32>
    %104 = arith.negf %103 : vector<8x128xf32>
    %105 = math.exp %104 : vector<8x128xf32>
    %cst_31 = arith.constant 1.000000e+00 : f32
    %106 = vector.broadcast %cst_31 : f32 to vector<8x128xf32>
    %107 = arith.addf %106, %105 : vector<8x128xf32>
    %108 = arith.divf %106, %107 : vector<8x128xf32>
    %109 = arith.mulf %100, %73 : vector<8x128xf32>
    %110 = arith.mulf %94, %102 : vector<8x128xf32>
    %111 = arith.addf %109, %110 : vector<8x128xf32>
    %112 = math.tanh %111 : vector<8x128xf32>
    %113 = arith.mulf %108, %112 : vector<8x128xf32>
    %114 = arith.truncf %113 : vector<8x128xf32> to vector<8x128xbf16>
    %115 = arith.index_cast %c2_i32 : i32 to index
    %c0_32 = arith.constant 0 : index
    %c0_33 = arith.constant 0 : index
    %116 = vector.load %arg6[%115, %c0_32, %c0_33] : memref<8x8x128xbf16, #tpu.memory_space<vmem>>, vector<1x8x128xbf16>
    %117 = vector.shape_cast %116 : vector<1x8x128xbf16> to vector<8x128xbf16>
    %118 = vector.shape_cast %114 : vector<8x128xbf16> to vector<1x8x128xbf16>
    tpu.vector_store %arg6[%115, %c0_32, %c0_33], %118 {strides = array<i32>} : memref<8x8x128xbf16, #tpu.memory_space<vmem>>, vector<1x8x128xbf16>,
    %c3_i32 = arith.constant 3 : i32
    %119 = arith.index_cast %c3_i32 : i32 to index
    %c0_34 = arith.constant 0 : index
    %c0_35 = arith.constant 0 : index
    %120 = vector.load %arg2[%119, %c0_34, %c0_35] : memref<8x8x512xbf16, #tpu.memory_space<vmem>>, vector<1x8x512xbf16>
    %121 = vector.shape_cast %120 : vector<1x8x512xbf16> to vector<8x512xbf16>
    %122 = arith.extf %121 : vector<8x512xbf16> to vector<8x512xf32>
    %123 = arith.truncf %113 : vector<8x128xf32> to vector<8x128xbf16>
    %c0_36 = arith.constant 0 : index
    %c0_37 = arith.constant 0 : index
    %124 = vector.load %arg3[%c0_36, %c0_37] : memref<128x512xbf16, #tpu.memory_space<vmem>>, vector<128x512xbf16>
    %cst_38 = arith.constant dense<0.000000e+00> : vector<8x512xf32>
    %125 = tpu.matmul %123, %124, %cst_38 {dimension_numbers = #tpu.dot_dimension_numbers<[1], [0], [0], [1], [0, 0, 1, 1], [], []>} : vector<8x128xbf16>, vector<128x512xbf16>, vector<8x512xf32> -> vector<8x512xf32>
    %126 = arith.addf %122, %125 : vector<8x512xf32>
    %127 = vector.extract_strided_slice %126 {offsets = [0, 0], sizes = [8, 128], strides = [1, 1]} : vector<8x512xf32> to vector<8x128xf32>
    %128 = arith.negf %127 : vector<8x128xf32>
    %129 = math.exp %128 : vector<8x128xf32>
    %cst_39 = arith.constant 1.000000e+00 : f32
    %130 = vector.broadcast %cst_39 : f32 to vector<8x128xf32>
    %131 = arith.addf %130, %129 : vector<8x128xf32>
    %132 = arith.divf %130, %131 : vector<8x128xf32>
    %133 = vector.extract_strided_slice %126 {offsets = [0, 128], sizes = [8, 128], strides = [1, 1]} : vector<8x512xf32> to vector<8x128xf32>
    %134 = arith.negf %133 : vector<8x128xf32>
    %135 = math.exp %134 : vector<8x128xf32>
    %cst_40 = arith.constant 1.000000e+00 : f32
    %136 = vector.broadcast %cst_40 : f32 to vector<8x128xf32>
    %137 = arith.addf %136, %135 : vector<8x128xf32>
    %138 = arith.divf %136, %137 : vector<8x128xf32>
    %139 = vector.extract_strided_slice %126 {offsets = [0, 256], sizes = [8, 128], strides = [1, 1]} : vector<8x512xf32> to vector<8x128xf32>
    %140 = math.tanh %139 : vector<8x128xf32>
    %141 = vector.extract_strided_slice %126 {offsets = [0, 384], sizes = [8, 128], strides = [1, 1]} : vector<8x512xf32> to vector<8x128xf32>
    %142 = arith.negf %141 : vector<8x128xf32>
    %143 = math.exp %142 : vector<8x128xf32>
    %cst_41 = arith.constant 1.000000e+00 : f32
    %144 = vector.broadcast %cst_41 : f32 to vector<8x128xf32>
    %145 = arith.addf %144, %143 : vector<8x128xf32>
    %146 = arith.divf %144, %145 : vector<8x128xf32>
    %147 = arith.mulf %138, %111 : vector<8x128xf32>
    %148 = arith.mulf %132, %140 : vector<8x128xf32>
    %149 = arith.addf %147, %148 : vector<8x128xf32>
    %150 = math.tanh %149 : vector<8x128xf32>
    %151 = arith.mulf %146, %150 : vector<8x128xf32>
    %152 = arith.truncf %151 : vector<8x128xf32> to vector<8x128xbf16>
    %153 = arith.index_cast %c3_i32 : i32 to index
    %c0_42 = arith.constant 0 : index
    %c0_43 = arith.constant 0 : index
    %154 = vector.load %arg6[%153, %c0_42, %c0_43] : memref<8x8x128xbf16, #tpu.memory_space<vmem>>, vector<1x8x128xbf16>
    %155 = vector.shape_cast %154 : vector<1x8x128xbf16> to vector<8x128xbf16>
    %156 = vector.shape_cast %152 : vector<8x128xbf16> to vector<1x8x128xbf16>
    tpu.vector_store %arg6[%153, %c0_42, %c0_43], %156 {strides = array<i32>} : memref<8x8x128xbf16, #tpu.memory_space<vmem>>, vector<1x8x128xbf16>,
    %c4_i32 = arith.constant 4 : i32
    %157 = arith.index_cast %c4_i32 : i32 to index
    %c0_44 = arith.constant 0 : index
    %c0_45 = arith.constant 0 : index
    %158 = vector.load %arg2[%157, %c0_44, %c0_45] : memref<8x8x512xbf16, #tpu.memory_space<vmem>>, vector<1x8x512xbf16>
    %159 = vector.shape_cast %158 : vector<1x8x512xbf16> to vector<8x512xbf16>
    %160 = arith.extf %159 : vector<8x512xbf16> to vector<8x512xf32>
    %161 = arith.truncf %151 : vector<8x128xf32> to vector<8x128xbf16>
    %c0_46 = arith.constant 0 : index
    %c0_47 = arith.constant 0 : index
    %162 = vector.load %arg3[%c0_46, %c0_47] : memref<128x512xbf16, #tpu.memory_space<vmem>>, vector<128x512xbf16>
    %cst_48 = arith.constant dense<0.000000e+00> : vector<8x512xf32>
    %163 = tpu.matmul %161, %162, %cst_48 {dimension_numbers = #tpu.dot_dimension_numbers<[1], [0], [0], [1], [0, 0, 1, 1], [], []>} : vector<8x128xbf16>, vector<128x512xbf16>, vector<8x512xf32> -> vector<8x512xf32>
    %164 = arith.addf %160, %163 : vector<8x512xf32>
    %165 = vector.extract_strided_slice %164 {offsets = [0, 0], sizes = [8, 128], strides = [1, 1]} : vector<8x512xf32> to vector<8x128xf32>
    %166 = arith.negf %165 : vector<8x128xf32>
    %167 = math.exp %166 : vector<8x128xf32>
    %cst_49 = arith.constant 1.000000e+00 : f32
    %168 = vector.broadcast %cst_49 : f32 to vector<8x128xf32>
    %169 = arith.addf %168, %167 : vector<8x128xf32>
    %170 = arith.divf %168, %169 : vector<8x128xf32>
    %171 = vector.extract_strided_slice %164 {offsets = [0, 128], sizes = [8, 128], strides = [1, 1]} : vector<8x512xf32> to vector<8x128xf32>
    %172 = arith.negf %171 : vector<8x128xf32>
    %173 = math.exp %172 : vector<8x128xf32>
    %cst_50 = arith.constant 1.000000e+00 : f32
    %174 = vector.broadcast %cst_50 : f32 to vector<8x128xf32>
    %175 = arith.addf %174, %173 : vector<8x128xf32>
    %176 = arith.divf %174, %175 : vector<8x128xf32>
    %177 = vector.extract_strided_slice %164 {offsets = [0, 256], sizes = [8, 128], strides = [1, 1]} : vector<8x512xf32> to vector<8x128xf32>
    %178 = math.tanh %177 : vector<8x128xf32>
    %179 = vector.extract_strided_slice %164 {offsets = [0, 384], sizes = [8, 128], strides = [1, 1]} : vector<8x512xf32> to vector<8x128xf32>
    %180 = arith.negf %179 : vector<8x128xf32>
    %181 = math.exp %180 : vector<8x128xf32>
    %cst_51 = arith.constant 1.000000e+00 : f32
    %182 = vector.broadcast %cst_51 : f32 to vector<8x128xf32>
    %183 = arith.addf %182, %181 : vector<8x128xf32>
    %184 = arith.divf %182, %183 : vector<8x128xf32>
    %185 = arith.mulf %176, %149 : vector<8x128xf32>
    %186 = arith.mulf %170, %178 : vector<8x128xf32>
    %187 = arith.addf %185, %186 : vector<8x128xf32>
    %188 = math.tanh %187 : vector<8x128xf32>
    %189 = arith.mulf %184, %188 : vector<8x128xf32>
    %190 = arith.truncf %189 : vector<8x128xf32> to vector<8x128xbf16>
    %191 = arith.index_cast %c4_i32 : i32 to index
    %c0_52 = arith.constant 0 : index
    %c0_53 = arith.constant 0 : index
    %192 = vector.load %arg6[%191, %c0_52, %c0_53] : memref<8x8x128xbf16, #tpu.memory_space<vmem>>, vector<1x8x128xbf16>
    %193 = vector.shape_cast %192 : vector<1x8x128xbf16> to vector<8x128xbf16>
    %194 = vector.shape_cast %190 : vector<8x128xbf16> to vector<1x8x128xbf16>
    tpu.vector_store %arg6[%191, %c0_52, %c0_53], %194 {strides = array<i32>} : memref<8x8x128xbf16, #tpu.memory_space<vmem>>, vector<1x8x128xbf16>,
    %c5_i32 = arith.constant 5 : i32
    %195 = arith.index_cast %c5_i32 : i32 to index
    %c0_54 = arith.constant 0 : index
    %c0_55 = arith.constant 0 : index
    %196 = vector.load %arg2[%195, %c0_54, %c0_55] : memref<8x8x512xbf16, #tpu.memory_space<vmem>>, vector<1x8x512xbf16>
    %197 = vector.shape_cast %196 : vector<1x8x512xbf16> to vector<8x512xbf16>
    %198 = arith.extf %197 : vector<8x512xbf16> to vector<8x512xf32>
    %199 = arith.truncf %189 : vector<8x128xf32> to vector<8x128xbf16>
    %c0_56 = arith.constant 0 : index
    %c0_57 = arith.constant 0 : index
    %200 = vector.load %arg3[%c0_56, %c0_57] : memref<128x512xbf16, #tpu.memory_space<vmem>>, vector<128x512xbf16>
    %cst_58 = arith.constant dense<0.000000e+00> : vector<8x512xf32>
    %201 = tpu.matmul %199, %200, %cst_58 {dimension_numbers = #tpu.dot_dimension_numbers<[1], [0], [0], [1], [0, 0, 1, 1], [], []>} : vector<8x128xbf16>, vector<128x512xbf16>, vector<8x512xf32> -> vector<8x512xf32>
    %202 = arith.addf %198, %201 : vector<8x512xf32>
    %203 = vector.extract_strided_slice %202 {offsets = [0, 0], sizes = [8, 128], strides = [1, 1]} : vector<8x512xf32> to vector<8x128xf32>
    %204 = arith.negf %203 : vector<8x128xf32>
    %205 = math.exp %204 : vector<8x128xf32>
    %cst_59 = arith.constant 1.000000e+00 : f32
    %206 = vector.broadcast %cst_59 : f32 to vector<8x128xf32>
    %207 = arith.addf %206, %205 : vector<8x128xf32>
    %208 = arith.divf %206, %207 : vector<8x128xf32>
    %209 = vector.extract_strided_slice %202 {offsets = [0, 128], sizes = [8, 128], strides = [1, 1]} : vector<8x512xf32> to vector<8x128xf32>
    %210 = arith.negf %209 : vector<8x128xf32>
    %211 = math.exp %210 : vector<8x128xf32>
    %cst_60 = arith.constant 1.000000e+00 : f32
    %212 = vector.broadcast %cst_60 : f32 to vector<8x128xf32>
    %213 = arith.addf %212, %211 : vector<8x128xf32>
    %214 = arith.divf %212, %213 : vector<8x128xf32>
    %215 = vector.extract_strided_slice %202 {offsets = [0, 256], sizes = [8, 128], strides = [1, 1]} : vector<8x512xf32> to vector<8x128xf32>
    %216 = math.tanh %215 : vector<8x128xf32>
    %217 = vector.extract_strided_slice %202 {offsets = [0, 384], sizes = [8, 128], strides = [1, 1]} : vector<8x512xf32> to vector<8x128xf32>
    %218 = arith.negf %217 : vector<8x128xf32>
    %219 = math.exp %218 : vector<8x128xf32>
    %cst_61 = arith.constant 1.000000e+00 : f32
    %220 = vector.broadcast %cst_61 : f32 to vector<8x128xf32>
    %221 = arith.addf %220, %219 : vector<8x128xf32>
    %222 = arith.divf %220, %221 : vector<8x128xf32>
    %223 = arith.mulf %214, %187 : vector<8x128xf32>
    %224 = arith.mulf %208, %216 : vector<8x128xf32>
    %225 = arith.addf %223, %224 : vector<8x128xf32>
    %226 = math.tanh %225 : vector<8x128xf32>
    %227 = arith.mulf %222, %226 : vector<8x128xf32>
    %228 = arith.truncf %227 : vector<8x128xf32> to vector<8x128xbf16>
    %229 = arith.index_cast %c5_i32 : i32 to index
    %c0_62 = arith.constant 0 : index
    %c0_63 = arith.constant 0 : index
    %230 = vector.load %arg6[%229, %c0_62, %c0_63] : memref<8x8x128xbf16, #tpu.memory_space<vmem>>, vector<1x8x128xbf16>
    %231 = vector.shape_cast %230 : vector<1x8x128xbf16> to vector<8x128xbf16>
    %232 = vector.shape_cast %228 : vector<8x128xbf16> to vector<1x8x128xbf16>
    tpu.vector_store %arg6[%229, %c0_62, %c0_63], %232 {strides = array<i32>} : memref<8x8x128xbf16, #tpu.memory_space<vmem>>, vector<1x8x128xbf16>,
    %c6_i32 = arith.constant 6 : i32
    %233 = arith.index_cast %c6_i32 : i32 to index
    %c0_64 = arith.constant 0 : index
    %c0_65 = arith.constant 0 : index
    %234 = vector.load %arg2[%233, %c0_64, %c0_65] : memref<8x8x512xbf16, #tpu.memory_space<vmem>>, vector<1x8x512xbf16>
    %235 = vector.shape_cast %234 : vector<1x8x512xbf16> to vector<8x512xbf16>
    %236 = arith.extf %235 : vector<8x512xbf16> to vector<8x512xf32>
    %237 = arith.truncf %227 : vector<8x128xf32> to vector<8x128xbf16>
    %c0_66 = arith.constant 0 : index
    %c0_67 = arith.constant 0 : index
    %238 = vector.load %arg3[%c0_66, %c0_67] : memref<128x512xbf16, #tpu.memory_space<vmem>>, vector<128x512xbf16>
    %cst_68 = arith.constant dense<0.000000e+00> : vector<8x512xf32>
    %239 = tpu.matmul %237, %238, %cst_68 {dimension_numbers = #tpu.dot_dimension_numbers<[1], [0], [0], [1], [0, 0, 1, 1], [], []>} : vector<8x128xbf16>, vector<128x512xbf16>, vector<8x512xf32> -> vector<8x512xf32>
    %240 = arith.addf %236, %239 : vector<8x512xf32>
    %241 = vector.extract_strided_slice %240 {offsets = [0, 0], sizes = [8, 128], strides = [1, 1]} : vector<8x512xf32> to vector<8x128xf32>
    %242 = arith.negf %241 : vector<8x128xf32>
    %243 = math.exp %242 : vector<8x128xf32>
    %cst_69 = arith.constant 1.000000e+00 : f32
    %244 = vector.broadcast %cst_69 : f32 to vector<8x128xf32>
    %245 = arith.addf %244, %243 : vector<8x128xf32>
    %246 = arith.divf %244, %245 : vector<8x128xf32>
    %247 = vector.extract_strided_slice %240 {offsets = [0, 128], sizes = [8, 128], strides = [1, 1]} : vector<8x512xf32> to vector<8x128xf32>
    %248 = arith.negf %247 : vector<8x128xf32>
    %249 = math.exp %248 : vector<8x128xf32>
    %cst_70 = arith.constant 1.000000e+00 : f32
    %250 = vector.broadcast %cst_70 : f32 to vector<8x128xf32>
    %251 = arith.addf %250, %249 : vector<8x128xf32>
    %252 = arith.divf %250, %251 : vector<8x128xf32>
    %253 = vector.extract_strided_slice %240 {offsets = [0, 256], sizes = [8, 128], strides = [1, 1]} : vector<8x512xf32> to vector<8x128xf32>
    %254 = math.tanh %253 : vector<8x128xf32>
    %255 = vector.extract_strided_slice %240 {offsets = [0, 384], sizes = [8, 128], strides = [1, 1]} : vector<8x512xf32> to vector<8x128xf32>
    %256 = arith.negf %255 : vector<8x128xf32>
    %257 = math.exp %256 : vector<8x128xf32>
    %cst_71 = arith.constant 1.000000e+00 : f32
    %258 = vector.broadcast %cst_71 : f32 to vector<8x128xf32>
    %259 = arith.addf %258, %257 : vector<8x128xf32>
    %260 = arith.divf %258, %259 : vector<8x128xf32>
    %261 = arith.mulf %252, %225 : vector<8x128xf32>
    %262 = arith.mulf %246, %254 : vector<8x128xf32>
    %263 = arith.addf %261, %262 : vector<8x128xf32>
    %264 = math.tanh %263 : vector<8x128xf32>
    %265 = arith.mulf %260, %264 : vector<8x128xf32>
    %266 = arith.truncf %265 : vector<8x128xf32> to vector<8x128xbf16>
    %267 = arith.index_cast %c6_i32 : i32 to index
    %c0_72 = arith.constant 0 : index
    %c0_73 = arith.constant 0 : index
    %268 = vector.load %arg6[%267, %c0_72, %c0_73] : memref<8x8x128xbf16, #tpu.memory_space<vmem>>, vector<1x8x128xbf16>
    %269 = vector.shape_cast %268 : vector<1x8x128xbf16> to vector<8x128xbf16>
    %270 = vector.shape_cast %266 : vector<8x128xbf16> to vector<1x8x128xbf16>
    tpu.vector_store %arg6[%267, %c0_72, %c0_73], %270 {strides = array<i32>} : memref<8x8x128xbf16, #tpu.memory_space<vmem>>, vector<1x8x128xbf16>,
    %c7_i32 = arith.constant 7 : i32
    %271 = arith.index_cast %c7_i32 : i32 to index
    %c0_74 = arith.constant 0 : index
    %c0_75 = arith.constant 0 : index
    %272 = vector.load %arg2[%271, %c0_74, %c0_75] : memref<8x8x512xbf16, #tpu.memory_space<vmem>>, vector<1x8x512xbf16>
    %273 = vector.shape_cast %272 : vector<1x8x512xbf16> to vector<8x512xbf16>
    %274 = arith.extf %273 : vector<8x512xbf16> to vector<8x512xf32>
    %275 = arith.truncf %265 : vector<8x128xf32> to vector<8x128xbf16>
    %c0_76 = arith.constant 0 : index
    %c0_77 = arith.constant 0 : index
    %276 = vector.load %arg3[%c0_76, %c0_77] : memref<128x512xbf16, #tpu.memory_space<vmem>>, vector<128x512xbf16>
    %cst_78 = arith.constant dense<0.000000e+00> : vector<8x512xf32>
    %277 = tpu.matmul %275, %276, %cst_78 {dimension_numbers = #tpu.dot_dimension_numbers<[1], [0], [0], [1], [0, 0, 1, 1], [], []>} : vector<8x128xbf16>, vector<128x512xbf16>, vector<8x512xf32> -> vector<8x512xf32>
    %278 = arith.addf %274, %277 : vector<8x512xf32>
    %279 = vector.extract_strided_slice %278 {offsets = [0, 0], sizes = [8, 128], strides = [1, 1]} : vector<8x512xf32> to vector<8x128xf32>
    %280 = arith.negf %279 : vector<8x128xf32>
    %281 = math.exp %280 : vector<8x128xf32>
    %cst_79 = arith.constant 1.000000e+00 : f32
    %282 = vector.broadcast %cst_79 : f32 to vector<8x128xf32>
    %283 = arith.addf %282, %281 : vector<8x128xf32>
    %284 = arith.divf %282, %283 : vector<8x128xf32>
    %285 = vector.extract_strided_slice %278 {offsets = [0, 128], sizes = [8, 128], strides = [1, 1]} : vector<8x512xf32> to vector<8x128xf32>
    %286 = arith.negf %285 : vector<8x128xf32>
    %287 = math.exp %286 : vector<8x128xf32>
    %cst_80 = arith.constant 1.000000e+00 : f32
    %288 = vector.broadcast %cst_80 : f32 to vector<8x128xf32>
    %289 = arith.addf %288, %287 : vector<8x128xf32>
    %290 = arith.divf %288, %289 : vector<8x128xf32>
    %291 = vector.extract_strided_slice %278 {offsets = [0, 256], sizes = [8, 128], strides = [1, 1]} : vector<8x512xf32> to vector<8x128xf32>
    %292 = math.tanh %291 : vector<8x128xf32>
    %293 = vector.extract_strided_slice %278 {offsets = [0, 384], sizes = [8, 128], strides = [1, 1]} : vector<8x512xf32> to vector<8x128xf32>
    %294 = arith.negf %293 : vector<8x128xf32>
    %295 = math.exp %294 : vector<8x128xf32>
    %cst_81 = arith.constant 1.000000e+00 : f32
    %296 = vector.broadcast %cst_81 : f32 to vector<8x128xf32>
    %297 = arith.addf %296, %295 : vector<8x128xf32>
    %298 = arith.divf %296, %297 : vector<8x128xf32>
    %299 = arith.mulf %290, %263 : vector<8x128xf32>
    %300 = arith.mulf %284, %292 : vector<8x128xf32>
    %301 = arith.addf %299, %300 : vector<8x128xf32>
    %302 = math.tanh %301 : vector<8x128xf32>
    %303 = arith.mulf %298, %302 : vector<8x128xf32>
    %304 = arith.truncf %303 : vector<8x128xf32> to vector<8x128xbf16>
    %305 = arith.index_cast %c7_i32 : i32 to index
    %c0_82 = arith.constant 0 : index
    %c0_83 = arith.constant 0 : index
    %306 = vector.load %arg6[%305, %c0_82, %c0_83] : memref<8x8x128xbf16, #tpu.memory_space<vmem>>, vector<1x8x128xbf16>
    %307 = vector.shape_cast %306 : vector<1x8x128xbf16> to vector<8x128xbf16>
    %308 = vector.shape_cast %304 : vector<8x128xbf16> to vector<1x8x128xbf16>
    tpu.vector_store %arg6[%305, %c0_82, %c0_83], %308 {strides = array<i32>} : memref<8x8x128xbf16, #tpu.memory_space<vmem>>, vector<1x8x128xbf16>,
    %c8_i32 = arith.constant 8 : i32
    %c0_84 = arith.constant 0 : index
    %c0_85 = arith.constant 0 : index
    %309 = vector.load %arg9[%c0_84, %c0_85] : memref<8x128xf32, #tpu.memory_space<vmem>>, vector<8x128xf32>
    tpu.vector_store %arg9[%c0_84, %c0_85], %303 {strides = array<i32>} : memref<8x128xf32, #tpu.memory_space<vmem>>, vector<8x128xf32>,
    %c0_86 = arith.constant 0 : index
    %c0_87 = arith.constant 0 : index
    %310 = vector.load %arg10[%c0_86, %c0_87] : memref<8x128xf32, #tpu.memory_space<vmem>>, vector<8x128xf32>
    tpu.vector_store %arg10[%c0_86, %c0_87], %301 {strides = array<i32>} : memref<8x128xf32, #tpu.memory_space<vmem>>, vector<8x128xf32>,
    %c0_i32_88 = arith.constant 0 : i32
    %311 = arith.cmpi eq, %arg1, %c0_i32_88 : i32
    %312 = arith.extui %311 : i1 to i32
    %c0_i32_89 = arith.constant 0 : i32
    %313 = arith.cmpi ne, %312, %c0_i32_89 : i32
    scf.if %313 {
      %c0_90 = arith.constant 0 : index
      %c0_91 = arith.constant 0 : index
      %314 = vector.load %arg7[%c0_90, %c0_91] : memref<8x128xf32, #tpu.memory_space<vmem>>, vector<8x128xf32>
      tpu.vector_store %arg7[%c0_90, %c0_91], %303 {strides = array<i32>} : memref<8x128xf32, #tpu.memory_space<vmem>>, vector<8x128xf32>,
      %c0_92 = arith.constant 0 : index
      %c0_93 = arith.constant 0 : index
      %315 = vector.load %arg8[%c0_92, %c0_93] : memref<8x128xf32, #tpu.memory_space<vmem>>, vector<8x128xf32>
      tpu.vector_store %arg8[%c0_92, %c0_93], %301 {strides = array<i32>} : memref<8x128xf32, #tpu.memory_space<vmem>>, vector<8x128xf32>,
    } else {
    }
    return
  }
  func.func @transform_0(%arg0: i32, %arg1: i32) -> (i32, i32, i32) {
    %c0_i32 = arith.constant 0 : i32
    %c0_i32_0 = arith.constant 0 : i32
    return %arg1, %arg0, %c0_i32 : i32, i32, i32
  }
  func.func @transform_1(%arg0: i32, %arg1: i32) -> (i32, i32) {
    %c0_i32 = arith.constant 0 : i32
    %c0_i32_0 = arith.constant 0 : i32
    %c0_i32_1 = arith.constant 0 : i32
    return %c0_i32, %c0_i32_0 : i32, i32
  }
  func.func @transform_2(%arg0: i32, %arg1: i32) -> (i32, i32) {
    %c0_i32 = arith.constant 0 : i32
    %c0_i32_0 = arith.constant 0 : i32
    return %arg0, %c0_i32 : i32, i32
  }
  func.func @transform_3(%arg0: i32, %arg1: i32) -> (i32, i32) {
    %c0_i32 = arith.constant 0 : i32
    %c0_i32_0 = arith.constant 0 : i32
    return %arg0, %c0_i32 : i32, i32
  }
  func.func @transform_4(%arg0: i32, %arg1: i32) -> (i32, i32, i32) {
    %c0_i32 = arith.constant 0 : i32
    %c0_i32_0 = arith.constant 0 : i32
    return %arg1, %arg0, %c0_i32 : i32, i32, i32
  }
  func.func @transform_5(%arg0: i32, %arg1: i32) -> (i32, i32) {
    %c0_i32 = arith.constant 0 : i32
    %c0_i32_0 = arith.constant 0 : i32
    return %arg0, %c0_i32 : i32, i32
  }
  func.func @transform_6(%arg0: i32, %arg1: i32) -> (i32, i32) {
    %c0_i32 = arith.constant 0 : i32
    %c0_i32_0 = arith.constant 0 : i32
    return %arg0, %c0_i32 : i32, i32
  }
}

module attributes {stable_mosaic.version = 11 : i64} {
  func.func @_linear_kernel(%arg0: i32, %arg1: i32, %arg2: memref<64x128xbf16, #tpu.memory_space<vmem>>, %arg3: memref<128x128xbf16, #tpu.memory_space<vmem>>, %arg4: memref<1x128xf32, #tpu.memory_space<vmem>>, %arg5: memref<64x128xf32, #tpu.memory_space<vmem>>) attributes {dimension_semantics = [#tpu.dimension_semantics<parallel>, #tpu.dimension_semantics<parallel>], iteration_bounds = array<i64: 1, 1>, scalar_prefetch = 0 : i64, scratch_operands = 0 : i64, tpu.core_type = #tpu.core_type<tc>, window_params = [{transform_indices = @transform_0, window_bounds = array<i64: 64, 128>}, {transform_indices = @transform_1, window_bounds = array<i64: 128, 128>}, {transform_indices = @transform_2, window_bounds = array<i64: 1, 128>}, {transform_indices = @transform_3, window_bounds = array<i64: 64, 128>}]} {
    %c0 = arith.constant 0 : index
    %c0_0 = arith.constant 0 : index
    %0 = vector.load %arg2[%c0, %c0_0] : memref<64x128xbf16, #tpu.memory_space<vmem>>, vector<64x128xbf16>
    %c0_1 = arith.constant 0 : index
    %c0_2 = arith.constant 0 : index
    %1 = vector.load %arg3[%c0_1, %c0_2] : memref<128x128xbf16, #tpu.memory_space<vmem>>, vector<128x128xbf16>
    %cst = arith.constant dense<0.000000e+00> : vector<64x128xf32>
    %2 = tpu.matmul %0, %1, %cst {dimension_numbers = #tpu.dot_dimension_numbers<[1], [0], [0], [1], [0, 0, 1, 1], [], []>} : vector<64x128xbf16>, vector<128x128xbf16>, vector<64x128xf32> -> vector<64x128xf32>
    %c0_3 = arith.constant 0 : index
    %c0_4 = arith.constant 0 : index
    %3 = vector.load %arg4[%c0_3, %c0_4] : memref<1x128xf32, #tpu.memory_space<vmem>>, vector<1x128xf32>
    %4 = vector.broadcast %3 : vector<1x128xf32> to vector<64x128xf32>
    %5 = arith.addf %2, %4 : vector<64x128xf32>
    %c0_5 = arith.constant 0 : index
    %c0_6 = arith.constant 0 : index
    %6 = vector.load %arg5[%c0_5, %c0_6] : memref<64x128xf32, #tpu.memory_space<vmem>>, vector<64x128xf32>
    tpu.vector_store %arg5[%c0_5, %c0_6], %5 {strides = array<i32>} : memref<64x128xf32, #tpu.memory_space<vmem>>, vector<64x128xf32>,
    return
  }
  func.func @transform_0(%arg0: i32, %arg1: i32) -> (i32, i32) {
    %c0_i32 = arith.constant 0 : i32
    %c0_i32_0 = arith.constant 0 : i32
    return %arg0, %c0_i32 : i32, i32
  }
  func.func @transform_1(%arg0: i32, %arg1: i32) -> (i32, i32) {
    %c0_i32 = arith.constant 0 : i32
    %c0_i32_0 = arith.constant 0 : i32
    return %c0_i32, %arg1 : i32, i32
  }
  func.func @transform_2(%arg0: i32, %arg1: i32) -> (i32, i32) {
    %c0_i32 = arith.constant 0 : i32
    %c0_i32_0 = arith.constant 0 : i32
    return %c0_i32, %arg1 : i32, i32
  }
  func.func @transform_3(%arg0: i32, %arg1: i32) -> (i32, i32) {
    %c0_i32 = arith.constant 0 : i32
    return %arg0, %arg1 : i32, i32
  }
}

</mosaic_0001>

<llo_original>
// kernel: seq2seq_forward.5
$region0: #{seq2seq_forward.5}
  #allocation0 [shape = 'u32[]', space=smem, size = 0x4, offset = 0x4, fixed_abs, tag = 'smem constant byte address 0x4 - core index']
  #allocation1 [shape = 'u32[144,128]{1,0:T(1,128)}', space=vmem, size = 0x12000, scoped, tag = 'internal scratch']
  %s0 = inlined_call_operand.vmem [shape: f32[32,16], index: 0, kind: input, shape index: {}]
  %s1 = inlined_call_operand.vmem [shape: f32[16,512], index: 1, kind: input, shape index: {}]
  %s2 = inlined_call_operand.vmem [shape: f32[1,512], index: 2, kind: input, shape index: {}]
  %s3 = inlined_call_operand.vmem [shape: bf16[32,512], index: 3, kind: output, shape index: {}]
  %s4 = sld [smem:[#allocation0]]
  $region22: #{seq2seq_forward.5} parent=0
    _
  %s6 = ssub.s32 1, %s4
  %s7 = scalar_select 0, %s6, %s4
  // Predicated region
  $region2: #{seq2seq_forward.5} parent=0 // pred_check
    _
  $region3: #{seq2seq_forward.5} parent=0 // pred_check_branch
    %9 = sbr.rel (0) target = $region5
  $region4: #{seq2seq_forward.5} parent=0 // pred_region
    _
  $region5: #{seq2seq_forward.5} parent=0 // pred_fallthru
    _
  // Predicated region
  $region6: #{seq2seq_forward.5} parent=0 // pred_check
    _
  $region7: #{seq2seq_forward.5} parent=0 // pred_check_branch
    %11 = sbr.rel (0) target = $region9
  $region8: #{seq2seq_forward.5} parent=0 // pred_region
    _
  $region9: #{seq2seq_forward.5} parent=0 // pred_fallthru
    _
  // Predicated region
  $region10: #{seq2seq_forward.5} parent=0 // pred_check
    _
  $region11: #{seq2seq_forward.5} parent=0 // pred_check_branch
    %13 = sbr.rel (0) target = $region13
  $region12: #{seq2seq_forward.5} parent=0 // pred_region
    _
  $region13: #{seq2seq_forward.5} parent=0 // pred_fallthru
    _
  %v14 = vld [vmem:[%s0] sm:$0xff]
  %v15 = vld [vmem:[%s0 + $0x8] sm:$0xff]
  %v16 = vld [vmem:[%s0 + $0x10] sm:$0xff]
  %v17 = vld [vmem:[%s0 + $0x18] sm:$0xff]
  %v18 = vld [vmem:[%s1] sm:$0xff]
  %v19 = vld [vmem:[%s1 + $0x8] sm:$0xff]
  %v20 = vld [vmem:[%s1 + $0x10] sm:$0xff]
  %v21 = vld [vmem:[%s1 + $0x18] sm:$0xff]
  %v22 = vld [vmem:[%s1 + $0x20] sm:$0xff]
  %v23 = vld [vmem:[%s1 + $0x28] sm:$0xff]
  %v24 = vld [vmem:[%s1 + $0x30] sm:$0xff]
  %v25 = vld [vmem:[%s1 + $0x38] sm:$0xff]
  %v26 = vld [vmem:[%s2] sm:$0xf]
  %v28 = vlaneseq
  %v29 = vshrl.u32 %v28, 7
  %v30 = vsub.s32 0, %v29
  %v31 = vrot.slane %v26, %v30
  %v32 = vlaneseq
  %v33 = vshrl.u32 %v32, 7
  %v34 = vsub.s32 1, %v33
  %v35 = vrot.slane %v26, %v34
  %v36 = vlaneseq
  %v37 = vshrl.u32 %v36, 7
  %v38 = vsub.s32 2, %v37
  %v39 = vrot.slane %v26, %v38
  %v40 = vlaneseq
  %v41 = vshrl.u32 %v40, 7
  %v42 = vsub.s32 3, %v41
  %v43 = vrot.slane %v26, %v42
  %vm48 = vcmask 130048
  %v50 = vsel %vm48, %v14, 0
  %v53 = vsel %vm48, %v15, 0
  %v56 = vsel %vm48, %v16, 0
  %v59 = vsel %vm48, %v17, 0
  %61 = vmatprep.subr.mxu0 %v19
  %62 = vmatpush1.msra.mxu0 %v18
  %63 = vmatprep.subr.mxu0 %v23
  %64 = vmatpush1.msra.mxu0 %v22
  %65 = vmatprep.subr.mxu0 0.0
  %66 = vmatpush1.msra.mxu0 0.0
  %67 = vmatprep.subr.mxu0 0.0
  %68 = vmatpush1.msra.mxu0 0.0
  %69 = vmatprep.subr.mxu0 0.0
  %70 = vmatpush1.msra.mxu0 0.0
  %71 = vmatprep.subr.mxu0 0.0
  %72 = vmatpush1.msra.mxu0 0.0
  %73 = vmatprep.subr.mxu0 0.0
  %74 = vmatpush1.msra.mxu0 0.0
  %75 = vmatprep.subr.mxu0 0.0
  %76 = vmatpush1.msra.mxu0 0.0
  %77 = vmatprep.subr.mxu0 0.0
  %78 = vmatpush1.msra.mxu0 0.0
  %79 = vmatprep.subr.mxu0 0.0
  %80 = vmatpush1.msra.mxu0 0.0
  %81 = vmatprep.subr.mxu0 0.0
  %82 = vmatpush1.msra.mxu0 0.0
  %83 = vmatprep.subr.mxu0 0.0
  %84 = vmatpush1.msra.mxu0 0.0
  %85 = vmatprep.subr.mxu0 0.0
  %86 = vmatpush1.msra.mxu0 0.0
  %87 = vmatprep.subr.mxu0 0.0
  %88 = vmatpush1.msra.mxu0 0.0
  %89 = vmatprep.subr.mxu0 0.0
  %90 = vmatpush1.msra.mxu0 0.0
  %91 = vmatprep.subr.mxu0 0.0
  %92 = vmatpush1.msra.mxu0 0.0
  %93 = vmatprep.subr.mxu0 0.0
  %94 = vmatpush1.msra.mxu0 0.0
  %95 = vmatprep.subr.mxu0 0.0
  %96 = vmatpush1.msra.mxu0 0.0
  %97 = vmatprep.subr.mxu0 0.0
  %98 = vmatpush1.msra.mxu0 0.0
  %99 = vmatprep.subr.mxu0 0.0
  %100 = vmatpush1.msra.mxu0 0.0
  %101 = vmatprep.subr.mxu0 0.0
  %102 = vmatpush1.msra.mxu0 0.0
  %103 = vmatprep.subr.mxu0 0.0
  %104 = vmatpush1.msra.mxu0 0.0
  %105 = vmatprep.subr.mxu0 0.0
  %106 = vmatpush1.msra.mxu0 0.0
  %107 = vmatprep.subr.mxu0 0.0
  %108 = vmatpush1.msra.mxu0 0.0
  %109 = vmatprep.subr.mxu0 0.0
  %110 = vmatpush1.msra.mxu0 0.0
  %111 = vmatprep.subr.mxu0 0.0
  %112 = vmatpush1.msra.mxu0 0.0
  %113 = vmatprep.subr.mxu0 0.0
  %114 = vmatpush1.msra.mxu0 0.0
  %115 = vmatprep.subr.mxu0 0.0
  %116 = vmatpush1.msra.mxu0 0.0
  %117 = vmatprep.subr.mxu0 0.0
  %118 = vmatpush1.msra.mxu0 0.0
  %119 = vmatprep.subr.mxu0 0.0
  %120 = vmatpush1.msra.mxu0 0.0
  %121 = vmatprep.subr.mxu0 0.0
  %122 = vmatpush1.msra.mxu0 0.0
  %123 = vmatprep.subr.mxu0 0.0
  %124 = vmatpush1.msra.mxu0 0.0
  %125 = vmatprep.mubr.f32.mxu0 0.0
  %126 = vmatmul.mubr.f32.gmra.mrb[0].mxu0 %v50
  %v127 = vpop.f32.mrb[0].mxu0
  %v128 = vadd.f32 %v31, %v127
  %v129 = vpop.f32.mrb[0].mxu0
  %v130 = vadd.f32 %v35, %v129
  %131 = vmatprep.mubr.f32.mxu0 0.0
  %132 = vmatmul.mubr.f32.gmra.mrb[0].mxu0 %v53
  %v133 = vpop.f32.mrb[0].mxu0
  %v134 = vadd.f32 %v31, %v133
  %v135 = vpop.f32.mrb[0].mxu0
  %v136 = vadd.f32 %v35, %v135
  %137 = vmatprep.mubr.f32.mxu0 0.0
  %138 = vmatmul.mubr.f32.gmra.mrb[0].mxu0 %v56
  %v139 = vpop.f32.mrb[0].mxu0
  %v140 = vadd.f32 %v31, %v139
  %v141 = vpop.f32.mrb[0].mxu0
  %v142 = vadd.f32 %v35, %v141
  %143 = vmatprep.mubr.f32.mxu0 0.0
  %144 = vmatmul.mubr.f32.gmra.mrb[0].mxu0 %v59
  %v145 = vpop.f32.mrb[0].mxu0
  %v146 = vadd.f32 %v31, %v145
  %v147 = vpop.f32.mrb[0].mxu0
  %v148 = vadd.f32 %v35, %v147
  %149 = vdwg.mxu0
  %150 = vmatprep.subr.mxu0 %v21
  %151 = vmatpush1.msra.mxu0 %v20
  %152 = vmatprep.subr.mxu0 %v25
  %153 = vmatpush1.msra.mxu0 %v24
  %154 = vmatprep.subr.mxu0 0.0
  %155 = vmatpush1.msra.mxu0 0.0
  %156 = vmatprep.subr.mxu0 0.0
  %157 = vmatpush1.msra.mxu0 0.0
  %158 = vmatprep.subr.mxu0 0.0
  %159 = vmatpush1.msra.mxu0 0.0
  %160 = vmatprep.subr.mxu0 0.0
  %161 = vmatpush1.msra.mxu0 0.0
  %162 = vmatprep.subr.mxu0 0.0
  %163 = vmatpush1.msra.mxu0 0.0
  %164 = vmatprep.subr.mxu0 0.0
  %165 = vmatpush1.msra.mxu0 0.0
  %166 = vmatprep.subr.mxu0 0.0
  %167 = vmatpush1.msra.mxu0 0.0
  %168 = vmatprep.subr.mxu0 0.0
  %169 = vmatpush1.msra.mxu0 0.0
  %170 = vmatprep.subr.mxu0 0.0
  %171 = vmatpush1.msra.mxu0 0.0
  %172 = vmatprep.subr.mxu0 0.0
  %173 = vmatpush1.msra.mxu0 0.0
  %174 = vmatprep.subr.mxu0 0.0
  %175 = vmatpush1.msra.mxu0 0.0
  %176 = vmatprep.subr.mxu0 0.0
  %177 = vmatpush1.msra.mxu0 0.0
  %178 = vmatprep.subr.mxu0 0.0
  %179 = vmatpush1.msra.mxu0 0.0
  %180 = vmatprep.subr.mxu0 0.0
  %181 = vmatpush1.msra.mxu0 0.0
  %182 = vmatprep.subr.mxu0 0.0
  %183 = vmatpush1.msra.mxu0 0.0
  %184 = vmatprep.subr.mxu0 0.0
  %185 = vmatpush1.msra.mxu0 0.0
  %186 = vmatprep.subr.mxu0 0.0
  %187 = vmatpush1.msra.mxu0 0.0
  %188 = vmatprep.subr.mxu0 0.0
  %189 = vmatpush1.msra.mxu0 0.0
  %190 = vmatprep.subr.mxu0 0.0
  %191 = vmatpush1.msra.mxu0 0.0
  %192 = vmatprep.subr.mxu0 0.0
  %193 = vmatpush1.msra.mxu0 0.0
  %194 = vmatprep.subr.mxu0 0.0
  %195 = vmatpush1.msra.mxu0 0.0
  %196 = vmatprep.subr.mxu0 0.0
  %197 = vmatpush1.msra.mxu0 0.0
  %198 = vmatprep.subr.mxu0 0.0
  %199 = vmatpush1.msra.mxu0 0.0
  %200 = vmatprep.subr.mxu0 0.0
  %201 = vmatpush1.msra.mxu0 0.0
  %202 = vmatprep.subr.mxu0 0.0
  %203 = vmatpush1.msra.mxu0 0.0
  %204 = vmatprep.subr.mxu0 0.0
  %205 = vmatpush1.msra.mxu0 0.0
  %206 = vmatprep.subr.mxu0 0.0
  %207 = vmatpush1.msra.mxu0 0.0
  %208 = vmatprep.subr.mxu0 0.0
  %209 = vmatpush1.msra.mxu0 0.0
  %210 = vmatprep.subr.mxu0 0.0
  %211 = vmatpush1.msra.mxu0 0.0
  %212 = vmatprep.subr.mxu0 0.0
  %213 = vmatpush1.msra.mxu0 0.0
  %214 = vmatprep.mubr.f32.mxu0 0.0
  %215 = vmatmul.mubr.f32.gmra.mrb[0].mxu0 %v50
  %v216 = vpop.f32.mrb[0].mxu0
  %v217 = vadd.f32 %v39, %v216
  %v218 = vpop.f32.mrb[0].mxu0
  %v219 = vadd.f32 %v43, %v218
  %220 = vmatprep.mubr.f32.mxu0 0.0
  %221 = vmatmul.mubr.f32.gmra.mrb[0].mxu0 %v53
  %v222 = vpop.f32.mrb[0].mxu0
  %v223 = vadd.f32 %v39, %v222
  %v224 = vpop.f32.mrb[0].mxu0
  %v225 = vadd.f32 %v43, %v224
  %226 = vmatprep.mubr.f32.mxu0 0.0
  %227 = vmatmul.mubr.f32.gmra.mrb[0].mxu0 %v56
  %v228 = vpop.f32.mrb[0].mxu0
  %v229 = vadd.f32 %v39, %v228
  %v230 = vpop.f32.mrb[0].mxu0
  %v231 = vadd.f32 %v43, %v230
  %232 = vmatprep.mubr.f32.mxu0 0.0
  %233 = vmatmul.mubr.f32.gmra.mrb[0].mxu0 %v59
  %v234 = vpop.f32.mrb[0].mxu0
  %v235 = vadd.f32 %v39, %v234
  %v236 = vpop.f32.mrb[0].mxu0
  %v237 = vadd.f32 %v43, %v236
  %238 = vdwg.mxu0
  %v239 = vpack.c.bf16 %v134, %v128
  %v240 = vpack.c.bf16 %v136, %v130
  %v241 = vpack.c.bf16 %v223, %v217
  %v242 = vpack.c.bf16 %v225, %v219
  %v243 = vpack.c.bf16 %v146, %v140
  %v244 = vpack.c.bf16 %v148, %v142
  %v245 = vpack.c.bf16 %v235, %v229
  %v246 = vpack.c.bf16 %v237, %v231
  %v255 = vunpack.c.l.b16 %v239
  %v256 = vunpack.c.l.b16 %v240
  %v257 = vunpack.c.l.b16 %v241
  %v258 = vunpack.c.l.b16 %v242
  %v259 = vunpack.c.h.b16 %v239
  %v260 = vunpack.c.h.b16 %v240
  %v261 = vunpack.c.h.b16 %v241
  %v262 = vunpack.c.h.b16 %v242
  %v263 = vunpack.c.l.b16 %v243
  %v264 = vunpack.c.l.b16 %v244
  %v265 = vunpack.c.l.b16 %v245
  %v266 = vunpack.c.l.b16 %v246
  %v267 = vunpack.c.h.b16 %v243
  %v268 = vunpack.c.h.b16 %v244
  %v269 = vunpack.c.h.b16 %v245
  %v270 = vunpack.c.h.b16 %v246
  %v271 = vpack.c.b16 %v256, %v255
  %v272 = vpack.c.b16 %v258, %v257
  %v273 = vpack.c.b16 %v260, %v259
  %v274 = vpack.c.b16 %v262, %v261
  %v275 = vpack.c.b16 %v264, %v263
  %v276 = vpack.c.b16 %v266, %v265
  %v277 = vpack.c.b16 %v268, %v267
  %v278 = vpack.c.b16 %v270, %v269
  %287 = vst [vmem:[%s3] sm:$0xff] %v271
  %288 = vst [vmem:[%s3 + $0x8] sm:$0xff] %v272
  %289 = vst [vmem:[%s3 + $0x10] sm:$0xff] %v273
  %290 = vst [vmem:[%s3 + $0x18] sm:$0xff] %v274
  %291 = vst [vmem:[%s3 + $0x20] sm:$0xff] %v275
  %292 = vst [vmem:[%s3 + $0x28] sm:$0xff] %v276
  %293 = vst [vmem:[%s3 + $0x30] sm:$0xff] %v277
  %294 = vst [vmem:[%s3 + $0x38] sm:$0xff] %v278
  // Predicated region
  $region14: #{seq2seq_forward.5} parent=0 // pred_check
    _
  $region15: #{seq2seq_forward.5} parent=0 // pred_check_branch
    %296 = sbr.rel (0) target = $region17
  $region16: #{seq2seq_forward.5} parent=0 // pred_region
    _
  $region17: #{seq2seq_forward.5} parent=0 // pred_fallthru
    _
  // Predicated region
  $region18: #{seq2seq_forward.5} parent=0 // pred_check
    _
  $region19: #{seq2seq_forward.5} parent=0 // pred_check_branch
    %298 = sbr.rel (0) target = $region21
  $region20: #{seq2seq_forward.5} parent=0 // pred_region
    _
  $region21: #{seq2seq_forward.5} parent=0 // pred_fallthru
    _

// kernel: seq2seq_forward.9
$region0: #{seq2seq_forward.9}
  #allocation0 [shape = 'u32[]', space=smem, size = 0x4, offset = 0x4, fixed_abs, tag = 'smem constant byte address 0x4 - core index']
  #allocation1 [shape = 'u32[144,128]{1,0:T(1,128)}', space=vmem, size = 0x12000, scoped, tag = 'internal scratch']
  %s0 = inlined_call_operand.vmem [shape: bf16[64,128], index: 0, kind: input, shape index: {}]
  %s1 = inlined_call_operand.vmem [shape: bf16[128,128], index: 1, kind: input, shape index: {}]
  %s2 = inlined_call_operand.vmem [shape: f32[1,128], index: 2, kind: input, shape index: {}]
  %s3 = inlined_call_operand.vmem [shape: f32[64,128], index: 3, kind: output, shape index: {}]
  %s4 = sld [smem:[#allocation0]]
  $region22: #{seq2seq_forward.9} parent=0
    _
  %s6 = ssub.s32 1, %s4
  %s7 = scalar_select 0, %s6, %s4
  // Predicated region
  $region2: #{seq2seq_forward.9} parent=0 // pred_check
    _
  $region3: #{seq2seq_forward.9} parent=0 // pred_check_branch
    %9 = sbr.rel (0) target = $region5
  $region4: #{seq2seq_forward.9} parent=0 // pred_region
    _
  $region5: #{seq2seq_forward.9} parent=0 // pred_fallthru
    _
  // Predicated region
  $region6: #{seq2seq_forward.9} parent=0 // pred_check
    _
  $region7: #{seq2seq_forward.9} parent=0 // pred_check_branch
    %11 = sbr.rel (0) target = $region9
  $region8: #{seq2seq_forward.9} parent=0 // pred_region
    _
  $region9: #{seq2seq_forward.9} parent=0 // pred_fallthru
    _
  // Predicated region
  $region10: #{seq2seq_forward.9} parent=0 // pred_check
    _
  $region11: #{seq2seq_forward.9} parent=0 // pred_check_branch
    %13 = sbr.rel (0) target = $region13
  $region12: #{seq2seq_forward.9} parent=0 // pred_region
    _
  $region13: #{seq2seq_forward.9} parent=0 // pred_fallthru
    _
  %v15 = vld [vmem:[%s0] sm:$0xf]
  %v16 = vld [vmem:[%s0 + $0x4] sm:$0xf]
  %v17 = vld [vmem:[%s0 + $0x8] sm:$0xf]
  %v18 = vld [vmem:[%s0 + $0xc] sm:$0xf]
  %v19 = vld [vmem:[%s0 + $0x10] sm:$0xf]
  %v20 = vld [vmem:[%s0 + $0x14] sm:$0xf]
  %v21 = vld [vmem:[%s0 + $0x18] sm:$0xf]
  %v22 = vld [vmem:[%s0 + $0x1c] sm:$0xf]
  %v23 = vld [vmem:[%s1] sm:$0xf]
  %v24 = vld [vmem:[%s1 + $0x4] sm:$0xf]
  %v25 = vld [vmem:[%s1 + $0x8] sm:$0xf]
  %v26 = vld [vmem:[%s1 + $0xc] sm:$0xf]
  %v27 = vld [vmem:[%s1 + $0x10] sm:$0xf]
  %v28 = vld [vmem:[%s1 + $0x14] sm:$0xf]
  %v29 = vld [vmem:[%s1 + $0x18] sm:$0xf]
  %v30 = vld [vmem:[%s1 + $0x1c] sm:$0xf]
  %v31 = vld [vmem:[%s1 + $0x20] sm:$0xf]
  %v32 = vld [vmem:[%s1 + $0x24] sm:$0xf]
  %v33 = vld [vmem:[%s1 + $0x28] sm:$0xf]
  %v34 = vld [vmem:[%s1 + $0x2c] sm:$0xf]
  %v35 = vld [vmem:[%s1 + $0x30] sm:$0xf]
  %v36 = vld [vmem:[%s1 + $0x34] sm:$0xf]
  %v37 = vld [vmem:[%s1 + $0x38] sm:$0xf]
  %v38 = vld [vmem:[%s1 + $0x3c] sm:$0xf]
  %v39 = vld [vmem:[%s2] sm:$0x1]
  %v41 = vlaneseq
  %v42 = vshrl.u32 %v41, 7
  %v43 = vsub.s32 0, %v42
  %v44 = vrot.slane %v39, %v43
  %v54 = vunpack.c.l.b16 %v15
  %v55 = vunpack.c.l.b16 %v16
  %v56 = vunpack.c.l.b16 %v17
  %v57 = vunpack.c.l.b16 %v18
  %v58 = vunpack.c.l.b16 %v19
  %v59 = vunpack.c.l.b16 %v20
  %v60 = vunpack.c.l.b16 %v21
  %v61 = vunpack.c.l.b16 %v22
  %v62 = vpack.c.b16 %v55, %v54
  %v63 = vpack.c.b16 %v57, %v56
  %v64 = vpack.c.b16 %v59, %v58
  %v65 = vpack.c.b16 %v61, %v60
  %v86 = vunpack.c.l.b16 %v23
  %v87 = vunpack.c.l.b16 %v24
  %v88 = vunpack.c.l.b16 %v25
  %v89 = vunpack.c.l.b16 %v26
  %v90 = vunpack.c.l.b16 %v27
  %v91 = vunpack.c.l.b16 %v28
  %v92 = vunpack.c.l.b16 %v29
  %v93 = vunpack.c.l.b16 %v30
  %v94 = vunpack.c.l.b16 %v31
  %v95 = vunpack.c.l.b16 %v32
  %v96 = vunpack.c.l.b16 %v33
  %v97 = vunpack.c.l.b16 %v34
  %v98 = vunpack.c.l.b16 %v35
  %v99 = vunpack.c.l.b16 %v36
  %v100 = vunpack.c.l.b16 %v37
  %v101 = vunpack.c.l.b16 %v38
  %v102 = vpack.c.b16 %v87, %v86
  %v103 = vpack.c.b16 %v89, %v88
  %v104 = vpack.c.b16 %v91, %v90
  %v105 = vpack.c.b16 %v93, %v92
  %v106 = vpack.c.b16 %v95, %v94
  %v107 = vpack.c.b16 %v97, %v96
  %v108 = vpack.c.b16 %v99, %v98
  %v109 = vpack.c.b16 %v101, %v100
  %118 = vmatprep.subr.bf16.mxu0 0
  %119 = vmatpush1.bf16.msra.mxu0 %v102
  %120 = vmatprep.subr.bf16.mxu0 0
  %121 = vmatpush1.bf16.msra.mxu0 %v103
  %122 = vmatprep.subr.bf16.mxu0 0
  %123 = vmatpush1.bf16.msra.mxu0 %v104
  %124 = vmatprep.subr.bf16.mxu0 0
  %125 = vmatpush1.bf16.msra.mxu0 %v105
  %126 = vmatprep.subr.bf16.mxu0 0
  %127 = vmatpush1.bf16.msra.mxu0 %v106
  %128 = vmatprep.subr.bf16.mxu0 0
  %129 = vmatpush1.bf16.msra.mxu0 %v107
  %130 = vmatprep.subr.bf16.mxu0 0
  %131 = vmatpush1.bf16.msra.mxu0 %v108
  %132 = vmatprep.subr.bf16.mxu0 0
  %133 = vmatpush1.bf16.msra.mxu0 %v109
  %134 = vmatprep.subr.bf16.mxu0 0
  %135 = vmatpush1.bf16.msra.mxu0 0
  %136 = vmatprep.subr.bf16.mxu0 0
  %137 = vmatpush1.bf16.msra.mxu0 0
  %138 = vmatprep.subr.bf16.mxu0 0
  %139 = vmatpush1.bf16.msra.mxu0 0
  %140 = vmatprep.subr.bf16.mxu0 0
  %141 = vmatpush1.bf16.msra.mxu0 0
  %142 = vmatprep.subr.bf16.mxu0 0
  %143 = vmatpush1.bf16.msra.mxu0 0
  %144 = vmatprep.subr.bf16.mxu0 0
  %145 = vmatpush1.bf16.msra.mxu0 0
  %146 = vmatprep.subr.bf16.mxu0 0
  %147 = vmatpush1.bf16.msra.mxu0 0
  %148 = vmatprep.subr.bf16.mxu0 0
  %149 = vmatpush1.bf16.msra.mxu0 0
  %150 = vmatprep.mubr.bf16.mxu0 0
  %151 = vmatmul.mubr.bf16.gmra.mrb[0].mxu0 %v62
  %v152 = vpop.f32.mrb[0].mxu0
  %v153 = vadd.f32 %v44, %v152
  %v154 = vpop.f32.mrb[0].mxu0
  %v155 = vpop.f32.mrb[0].mxu0
  %v156 = vadd.f32 %v44, %v155
  %v157 = vpop.f32.mrb[0].mxu0
  %158 = vmatprep.mubr.bf16.mxu0 0
  %159 = vmatmul.mubr.bf16.gmra.mrb[0].mxu0 %v63
  %v160 = vpop.f32.mrb[0].mxu0
  %v161 = vadd.f32 %v44, %v160
  %v162 = vpop.f32.mrb[0].mxu0
  %v163 = vpop.f32.mrb[0].mxu0
  %v164 = vadd.f32 %v44, %v163
  %v165 = vpop.f32.mrb[0].mxu0
  %166 = vmatprep.mubr.bf16.mxu0 0
  %167 = vmatmul.mubr.bf16.gmra.mrb[0].mxu0 %v64
  %v168 = vpop.f32.mrb[0].mxu0
  %v169 = vadd.f32 %v44, %v168
  %v170 = vpop.f32.mrb[0].mxu0
  %v171 = vpop.f32.mrb[0].mxu0
  %v172 = vadd.f32 %v44, %v171
  %v173 = vpop.f32.mrb[0].mxu0
  %174 = vmatprep.mubr.bf16.mxu0 0
  %175 = vmatmul.mubr.bf16.gmra.mrb[0].mxu0 %v65
  %v176 = vpop.f32.mrb[0].mxu0
  %v177 = vadd.f32 %v44, %v176
  %v178 = vpop.f32.mrb[0].mxu0
  %v179 = vpop.f32.mrb[0].mxu0
  %v180 = vadd.f32 %v44, %v179
  %v181 = vpop.f32.mrb[0].mxu0
  %182 = vdwg.mxu0
  %183 = vst [vmem:[%s3] sm:$0xff] %v153
  %184 = vst [vmem:[%s3 + $0x8] sm:$0xff] %v156
  %185 = vst [vmem:[%s3 + $0x10] sm:$0xff] %v161
  %186 = vst [vmem:[%s3 + $0x18] sm:$0xff] %v164
  %187 = vst [vmem:[%s3 + $0x20] sm:$0xff] %v169
  %188 = vst [vmem:[%s3 + $0x28] sm:$0xff] %v172
  %189 = vst [vmem:[%s3 + $0x30] sm:$0xff] %v177
  %190 = vst [vmem:[%s3 + $0x38] sm:$0xff] %v180
  // Predicated region
  $region14: #{seq2seq_forward.9} parent=0 // pred_check
    _
  $region15: #{seq2seq_forward.9} parent=0 // pred_check_branch
    %192 = sbr.rel (0) target = $region17
  $region16: #{seq2seq_forward.9} parent=0 // pred_region
    _
  $region17: #{seq2seq_forward.9} parent=0 // pred_fallthru
    _
  // Predicated region
  $region18: #{seq2seq_forward.9} parent=0 // pred_check
    _
  $region19: #{seq2seq_forward.9} parent=0 // pred_check_branch
    %194 = sbr.rel (0) target = $region21
  $region20: #{seq2seq_forward.9} parent=0 // pred_region
    _
  $region21: #{seq2seq_forward.9} parent=0 // pred_fallthru
    _

// kernel: seq2seq_forward.6
$region0: #{seq2seq_forward.6}
  #allocation0 [shape = 'u32[]', space=smem, size = 0x4, offset = 0x4, fixed_abs, tag = 'smem constant byte address 0x4 - core index']
  #allocation1 [shape = 'u32[144,128]{1,0:T(1,128)}', space=vmem, size = 0x12000, scoped, tag = 'internal scratch']
  #allocation2 [shape = 'f32[8,128]{1,0:T(8,128)}', space=vmem, size = 0x1000, scoped, tag = 'scratch operand']
  #allocation3 [shape = 'f32[8,128]{1,0:T(8,128)}', space=vmem, size = 0x1000, scoped, tag = 'scratch operand']
  %s0 = inlined_call_operand.vmem [shape: bf16[8,8,512], index: 0, kind: input, shape index: {}]
  %s1 = inlined_call_operand.vmem [shape: bf16[128,512], index: 1, kind: input, shape index: {}]
  %s2 = inlined_call_operand.vmem [shape: f32[8,128], index: 2, kind: input, shape index: {}, may-alias: {2,3}]
  %s3 = inlined_call_operand.vmem [shape: f32[8,128], index: 3, kind: input, shape index: {}, may-alias: {2,3}]
  %s4 = inlined_call_operand.vmem [shape: f32[8,128], index: 4, kind: output, shape index: {0}]
  %s5 = inlined_call_operand.vmem [shape: f32[8,128], index: 5, kind: output, shape index: {1}]
  %6 = xla_tuple %s4, %s5
  %s7 = sld [smem:[#allocation0]]
  $region42: #{seq2seq_forward.6} parent=0
    _
  %s9 = ssub.s32 1, %s7
  %s10 = scalar_select 0, %s9, %s7
  // Predicated region
  $region2: #{seq2seq_forward.6} parent=0 // pred_check
    _
  $region3: #{seq2seq_forward.6} parent=0 // pred_check_branch
    %12 = sbr.rel (0) target = $region5
  $region4: #{seq2seq_forward.6} parent=0 // pred_region
    _
  $region5: #{seq2seq_forward.6} parent=0 // pred_fallthru
    _
  // Predicated region
  $region6: #{seq2seq_forward.6} parent=0 // pred_check
    _
  $region7: #{seq2seq_forward.6} parent=0 // pred_check_branch
    %14 = sbr.rel (0) target = $region9
  $region8: #{seq2seq_forward.6} parent=0 // pred_region
    _
  $region9: #{seq2seq_forward.6} parent=0 // pred_fallthru
    _
  // Predicated region
  $region10: #{seq2seq_forward.6} parent=0 // pred_check
    _
  $region11: #{seq2seq_forward.6} parent=0 // pred_check_branch
    %16 = sbr.rel (0) target = $region13
  $region12: #{seq2seq_forward.6} parent=0 // pred_region
    _
  $region13: #{seq2seq_forward.6} parent=0 // pred_fallthru
    _
  // Predicated region
  $region14: #{seq2seq_forward.6} parent=0 // pred_check
    _
  $region15: #{seq2seq_forward.6} parent=0 // pred_check_branch
    %18 = sbr.rel (0) target = $region17
  $region16: #{seq2seq_forward.6} parent=0 // pred_region
    _
  $region17: #{seq2seq_forward.6} parent=0 // pred_fallthru
    _
  %p20 = scmp.eq.s32.totalorder 0, 0
  // Predicated region
  $region18: #{seq2seq_forward.6} parent=0 // pred_check
    %p21 = pneg %p20
  $region19: #{seq2seq_forward.6} parent=0 // pred_check_branch
    %23 = sbr.rel (%p21) target = $region21
  $region20: #{seq2seq_forward.6} parent=0 // pred_region
    %v24 = vld [vmem:[%s2] sm:$0xff]
    %25 = vst [vmem:[#allocation2] sm:$0xff] %v24
    %v26 = vld [vmem:[%s3] sm:$0xff]
    %27 = vst [vmem:[#allocation3] sm:$0xff] %v26
  $region21: #{seq2seq_forward.6} parent=0 // pred_fallthru
    _
  %v28 = vld [vmem:[#allocation2] sm:$0xff]
  %v29 = vld [vmem:[#allocation3] sm:$0xff]
  %v30 = vld [vmem:[%s0] sm:$0xff]
  %v31 = vld [vmem:[%s0 + $0x8] sm:$0xff]
  %v32 = vunpack.c.l.bf16 %v30
  %v33 = vunpack.c.h.bf16 %v30
  %v34 = vunpack.c.l.bf16 %v31
  %v35 = vunpack.c.h.bf16 %v31
  %v36 = vpack.c.bf16 %v28, %v28
  %v37 = vld [vmem:[%s1] sm:$0xff]
  %v38 = vld [vmem:[%s1 + $0x8] sm:$0xff]
  %v39 = vld [vmem:[%s1 + $0x10] sm:$0xff]
  %v40 = vld [vmem:[%s1 + $0x18] sm:$0xff]
  %v41 = vld [vmem:[%s1 + $0x20] sm:$0xff]
  %v42 = vld [vmem:[%s1 + $0x28] sm:$0xff]
  %v43 = vld [vmem:[%s1 + $0x30] sm:$0xff]
  %v44 = vld [vmem:[%s1 + $0x38] sm:$0xff]
  %v45 = vld [vmem:[%s1 + $0x40] sm:$0xff]
  %v46 = vld [vmem:[%s1 + $0x48] sm:$0xff]
  %v47 = vld [vmem:[%s1 + $0x50] sm:$0xff]
  %v48 = vld [vmem:[%s1 + $0x58] sm:$0xff]
  %v49 = vld [vmem:[%s1 + $0x60] sm:$0xff]
  %v50 = vld [vmem:[%s1 + $0x68] sm:$0xff]
  %v51 = vld [vmem:[%s1 + $0x70] sm:$0xff]
  %v52 = vld [vmem:[%s1 + $0x78] sm:$0xff]
  %v53 = vld [vmem:[%s1 + $0x80] sm:$0xff]
  %v54 = vld [vmem:[%s1 + $0x88] sm:$0xff]
  %v55 = vld [vmem:[%s1 + $0x90] sm:$0xff]
  %v56 = vld [vmem:[%s1 + $0x98] sm:$0xff]
  %v57 = vld [vmem:[%s1 + $0xa0] sm:$0xff]
  %v58 = vld [vmem:[%s1 + $0xa8] sm:$0xff]
  %v59 = vld [vmem:[%s1 + $0xb0] sm:$0xff]
  %v60 = vld [vmem:[%s1 + $0xb8] sm:$0xff]
  %v61 = vld [vmem:[%s1 + $0xc0] sm:$0xff]
  %v62 = vld [vmem:[%s1 + $0xc8] sm:$0xff]
  %v63 = vld [vmem:[%s1 + $0xd0] sm:$0xff]
  %v64 = vld [vmem:[%s1 + $0xd8] sm:$0xff]
  %v65 = vld [vmem:[%s1 + $0xe0] sm:$0xff]
  %v66 = vld [vmem:[%s1 + $0xe8] sm:$0xff]
  %v67 = vld [vmem:[%s1 + $0xf0] sm:$0xff]
  %v68 = vld [vmem:[%s1 + $0xf8] sm:$0xff]
  %v101 = vunpack.c.l.b16 %v37
  %v102 = vunpack.c.h.b16 %v37
  %v103 = vunpack.c.l.b16 %v38
  %v104 = vunpack.c.h.b16 %v38
  %v105 = vunpack.c.l.b16 %v39
  %v106 = vunpack.c.h.b16 %v39
  %v107 = vunpack.c.l.b16 %v40
  %v108 = vunpack.c.h.b16 %v40
  %v109 = vunpack.c.l.b16 %v41
  %v110 = vunpack.c.h.b16 %v41
  %v111 = vunpack.c.l.b16 %v42
  %v112 = vunpack.c.h.b16 %v42
  %v113 = vunpack.c.l.b16 %v43
  %v114 = vunpack.c.h.b16 %v43
  %v115 = vunpack.c.l.b16 %v44
  %v116 = vunpack.c.h.b16 %v44
  %v117 = vunpack.c.l.b16 %v45
  %v118 = vunpack.c.h.b16 %v45
  %v119 = vunpack.c.l.b16 %v46
  %v120 = vunpack.c.h.b16 %v46
  %v121 = vunpack.c.l.b16 %v47
  %v122 = vunpack.c.h.b16 %v47
  %v123 = vunpack.c.l.b16 %v48
  %v124 = vunpack.c.h.b16 %v48
  %v125 = vunpack.c.l.b16 %v49
  %v126 = vunpack.c.h.b16 %v49
  %v127 = vunpack.c.l.b16 %v50
  %v128 = vunpack.c.h.b16 %v50
  %v129 = vunpack.c.l.b16 %v51
  %v130 = vunpack.c.h.b16 %v51
  %v131 = vunpack.c.l.b16 %v52
  %v132 = vunpack.c.h.b16 %v52
  %v133 = vunpack.c.l.b16 %v53
  %v134 = vunpack.c.h.b16 %v53
  %v135 = vunpack.c.l.b16 %v54
  %v136 = vunpack.c.h.b16 %v54
  %v137 = vunpack.c.l.b16 %v55
  %v138 = vunpack.c.h.b16 %v55
  %v139 = vunpack.c.l.b16 %v56
  %v140 = vunpack.c.h.b16 %v56
  %v141 = vunpack.c.l.b16 %v57
  %v142 = vunpack.c.h.b16 %v57
  %v143 = vunpack.c.l.b16 %v58
  %v144 = vunpack.c.h.b16 %v58
  %v145 = vunpack.c.l.b16 %v59
  %v146 = vunpack.c.h.b16 %v59
  %v147 = vunpack.c.l.b16 %v60
  %v148 = vunpack.c.h.b16 %v60
  %v149 = vunpack.c.l.b16 %v61
  %v150 = vunpack.c.h.b16 %v61
  %v151 = vunpack.c.l.b16 %v62
  %v152 = vunpack.c.h.b16 %v62
  %v153 = vunpack.c.l.b16 %v63
  %v154 = vunpack.c.h.b16 %v63
  %v155 = vunpack.c.l.b16 %v64
  %v156 = vunpack.c.h.b16 %v64
  %v157 = vunpack.c.l.b16 %v65
  %v158 = vunpack.c.h.b16 %v65
  %v159 = vunpack.c.l.b16 %v66
  %v160 = vunpack.c.h.b16 %v66
  %v161 = vunpack.c.l.b16 %v67
  %v162 = vunpack.c.h.b16 %v67
  %v163 = vunpack.c.l.b16 %v68
  %v164 = vunpack.c.h.b16 %v68
  %v165 = vpack.c.b16 %v105, %v101
  %v166 = vpack.c.b16 %v106, %v102
  %v167 = vpack.c.b16 %v107, %v103
  %v168 = vpack.c.b16 %v108, %v104
  %v169 = vpack.c.b16 %v113, %v109
  %v170 = vpack.c.b16 %v114, %v110
  %v171 = vpack.c.b16 %v115, %v111
  %v172 = vpack.c.b16 %v116, %v112
  %v173 = vpack.c.b16 %v121, %v117
  %v174 = vpack.c.b16 %v122, %v118
  %v175 = vpack.c.b16 %v123, %v119
  %v176 = vpack.c.b16 %v124, %v120
  %v177 = vpack.c.b16 %v129, %v125
  %v178 = vpack.c.b16 %v130, %v126
  %v179 = vpack.c.b16 %v131, %v127
  %v180 = vpack.c.b16 %v132, %v128
  %v181 = vpack.c.b16 %v137, %v133
  %v182 = vpack.c.b16 %v138, %v134
  %v183 = vpack.c.b16 %v139, %v135
  %v184 = vpack.c.b16 %v140, %v136
  %v185 = vpack.c.b16 %v145, %v141
  %v186 = vpack.c.b16 %v146, %v142
  %v187 = vpack.c.b16 %v147, %v143
  %v188 = vpack.c.b16 %v148, %v144
  %v189 = vpack.c.b16 %v153, %v149
  %v190 = vpack.c.b16 %v154, %v150
  %v191 = vpack.c.b16 %v155, %v151
  %v192 = vpack.c.b16 %v156, %v152
  %v193 = vpack.c.b16 %v161, %v157
  %v194 = vpack.c.b16 %v162, %v158
  %v195 = vpack.c.b16 %v163, %v159
  %v196 = vpack.c.b16 %v164, %v160
  %229 = vmatprep.subr.bf16.mxu0 %v166
  %230 = vmatpush1.bf16.msra.mxu0 %v165
  %231 = vmatprep.subr.bf16.mxu0 %v170
  %232 = vmatpush1.bf16.msra.mxu0 %v169
  %233 = vmatprep.subr.bf16.mxu0 %v174
  %234 = vmatpush1.bf16.msra.mxu0 %v173
  %235 = vmatprep.subr.bf16.mxu0 %v178
  %236 = vmatpush1.bf16.msra.mxu0 %v177
  %237 = vmatprep.subr.bf16.mxu0 %v182
  %238 = vmatpush1.bf16.msra.mxu0 %v181
  %239 = vmatprep.subr.bf16.mxu0 %v186
  %240 = vmatpush1.bf16.msra.mxu0 %v185
  %241 = vmatprep.subr.bf16.mxu0 %v190
  %242 = vmatpush1.bf16.msra.mxu0 %v189
  %243 = vmatprep.subr.bf16.mxu0 %v194
  %244 = vmatpush1.bf16.msra.mxu0 %v193
  %245 = vmatprep.subr.bf16.mxu0 0
  %246 = vmatpush1.bf16.msra.mxu0 0
  %247 = vmatprep.subr.bf16.mxu0 0
  %248 = vmatpush1.bf16.msra.mxu0 0
  %249 = vmatprep.subr.bf16.mxu0 0
  %250 = vmatpush1.bf16.msra.mxu0 0
  %251 = vmatprep.subr.bf16.mxu0 0
  %252 = vmatpush1.bf16.msra.mxu0 0
  %253 = vmatprep.subr.bf16.mxu0 0
  %254 = vmatpush1.bf16.msra.mxu0 0
  %255 = vmatprep.subr.bf16.mxu0 0
  %256 = vmatpush1.bf16.msra.mxu0 0
  %257 = vmatprep.subr.bf16.mxu0 0
  %258 = vmatpush1.bf16.msra.mxu0 0
  %259 = vmatprep.subr.bf16.mxu0 0
  %260 = vmatpush1.bf16.msra.mxu0 0
  %261 = vmatprep.mubr.bf16.mxu0 0
  %262 = vmatmul.mubr.bf16.gmra.mrb[0].mxu0 %v36
  %v263 = vpop.f32.mrb[0].mxu0
  %v264 = vadd.f32 0.0, %v263
  %v265 = vpop.f32.mrb[0].mxu0
  %v266 = vadd.f32 0.0, %v265
  %v267 = vpop.f32.mrb[0].mxu0
  %v268 = vpop.f32.mrb[0].mxu0
  %269 = vdwg.mxu0
  %270 = vmatprep.subr.bf16.mxu0 %v168
  %271 = vmatpush1.bf16.msra.mxu0 %v167
  %272 = vmatprep.subr.bf16.mxu0 %v172
  %273 = vmatpush1.bf16.msra.mxu0 %v171
  %274 = vmatprep.subr.bf16.mxu0 %v176
  %275 = vmatpush1.bf16.msra.mxu0 %v175
  %276 = vmatprep.subr.bf16.mxu0 %v180
  %277 = vmatpush1.bf16.msra.mxu0 %v179
  %278 = vmatprep.subr.bf16.mxu0 %v184
  %279 = vmatpush1.bf16.msra.mxu0 %v183
  %280 = vmatprep.subr.bf16.mxu0 %v188
  %281 = vmatpush1.bf16.msra.mxu0 %v187
  %282 = vmatprep.subr.bf16.mxu0 %v192
  %283 = vmatpush1.bf16.msra.mxu0 %v191
  %284 = vmatprep.subr.bf16.mxu0 %v196
  %285 = vmatpush1.bf16.msra.mxu0 %v195
  %286 = vmatprep.subr.bf16.mxu0 0
  %287 = vmatpush1.bf16.msra.mxu0 0
  %288 = vmatprep.subr.bf16.mxu0 0
  %289 = vmatpush1.bf16.msra.mxu0 0
  %290 = vmatprep.subr.bf16.mxu0 0
  %291 = vmatpush1.bf16.msra.mxu0 0
  %292 = vmatprep.subr.bf16.mxu0 0
  %293 = vmatpush1.bf16.msra.mxu0 0
  %294 = vmatprep.subr.bf16.mxu0 0
  %295 = vmatpush1.bf16.msra.mxu0 0
  %296 = vmatprep.subr.bf16.mxu0 0
  %297 = vmatpush1.bf16.msra.mxu0 0
  %298 = vmatprep.subr.bf16.mxu0 0
  %299 = vmatpush1.bf16.msra.mxu0 0
  %300 = vmatprep.subr.bf16.mxu0 0
  %301 = vmatpush1.bf16.msra.mxu0 0
  %302 = vmatprep.mubr.bf16.mxu0 0
  %303 = vmatmul.mubr.bf16.gmra.mrb[0].mxu0 %v36
  %v304 = vpop.f32.mrb[0].mxu0
  %v305 = vadd.f32 0.0, %v304
  %v306 = vpop.f32.mrb[0].mxu0
  %v307 = vadd.f32 0.0, %v306
  %v308 = vpop.f32.mrb[0].mxu0
  %v309 = vpop.f32.mrb[0].mxu0
  %310 = vdwg.mxu0
  %v311 = vadd.f32 %v32, %v264
  %v312 = vadd.f32 %v33, %v266
  %v313 = vadd.f32 %v34, %v305
  %v314 = vadd.f32 %v35, %v307
  %v315 = vxor.u32 %v311, 2147483648
  %v316 = vmul.f32 %v315, 1.442695
  %v317 = vpow.pop %v316
  %v318 = vadd.f32 %v317, 1.0
  %v319 = vrcp.pop %v318
  %v320 = vmul.f32 1.0, %v319
  %v321 = vxor.u32 %v312, 2147483648
  %v322 = vmul.f32 %v321, 1.442695
  %v323 = vpow.pop %v322
  %v324 = vadd.f32 %v323, 1.0
  %v325 = vrcp.pop %v324
  %v326 = vmul.f32 1.0, %v325
  %v327 = vtanh.pop %v313
  %v328 = vxor.u32 %v314, 2147483648
  %v329 = vmul.f32 %v328, 1.442695
  %v330 = vpow.pop %v329
  %v331 = vadd.f32 %v330, 1.0
  %v332 = vrcp.pop %v331
  %v333 = vmul.f32 1.0, %v332
  %v334 = vmul.f32 %v326, %v29
  %v335 = vmul.f32 %v320, %v327
  %v336 = vadd.f32 %v334, %v335
  %v337 = vtanh.pop %v336
  %v338 = vmul.f32 %v333, %v337
  %s339 = scalar_lea.vmem %s0, 16
  %v340 = vld [vmem:[%s339] sm:$0xff]
  %v341 = vld [vmem:[%s339 + $0x8] sm:$0xff]
  %v342 = vunpack.c.l.bf16 %v340
  %v343 = vunpack.c.h.bf16 %v340
  %v344 = vunpack.c.l.bf16 %v341
  %v345 = vunpack.c.h.bf16 %v341
  %v346 = vpack.c.bf16 %v338, %v338
  %347 = vmatprep.subr.bf16.mxu0 %v166
  %348 = vmatpush1.bf16.msra.mxu0 %v165
  %349 = vmatprep.subr.bf16.mxu0 %v170
  %350 = vmatpush1.bf16.msra.mxu0 %v169
  %351 = vmatprep.subr.bf16.mxu0 %v174
  %352 = vmatpush1.bf16.msra.mxu0 %v173
  %353 = vmatprep.subr.bf16.mxu0 %v178
  %354 = vmatpush1.bf16.msra.mxu0 %v177
  %355 = vmatprep.subr.bf16.mxu0 %v182
  %356 = vmatpush1.bf16.msra.mxu0 %v181
  %357 = vmatprep.subr.bf16.mxu0 %v186
  %358 = vmatpush1.bf16.msra.mxu0 %v185
  %359 = vmatprep.subr.bf16.mxu0 %v190
  %360 = vmatpush1.bf16.msra.mxu0 %v189
  %361 = vmatprep.subr.bf16.mxu0 %v194
  %362 = vmatpush1.bf16.msra.mxu0 %v193
  %363 = vmatprep.subr.bf16.mxu0 0
  %364 = vmatpush1.bf16.msra.mxu0 0
  %365 = vmatprep.subr.bf16.mxu0 0
  %366 = vmatpush1.bf16.msra.mxu0 0
  %367 = vmatprep.subr.bf16.mxu0 0
  %368 = vmatpush1.bf16.msra.mxu0 0
  %369 = vmatprep.subr.bf16.mxu0 0
  %370 = vmatpush1.bf16.msra.mxu0 0
  %371 = vmatprep.subr.bf16.mxu0 0
  %372 = vmatpush1.bf16.msra.mxu0 0
  %373 = vmatprep.subr.bf16.mxu0 0
  %374 = vmatpush1.bf16.msra.mxu0 0
  %375 = vmatprep.subr.bf16.mxu0 0
  %376 = vmatpush1.bf16.msra.mxu0 0
  %377 = vmatprep.subr.bf16.mxu0 0
  %378 = vmatpush1.bf16.msra.mxu0 0
  %379 = vmatprep.mubr.bf16.mxu0 0
  %380 = vmatmul.mubr.bf16.gmra.mrb[0].mxu0 %v346
  %v381 = vpop.f32.mrb[0].mxu0
  %v382 = vadd.f32 0.0, %v381
  %v383 = vpop.f32.mrb[0].mxu0
  %v384 = vadd.f32 0.0, %v383
  %v385 = vpop.f32.mrb[0].mxu0
  %v386 = vpop.f32.mrb[0].mxu0
  %387 = vdwg.mxu0
  %388 = vmatprep.subr.bf16.mxu0 %v168
  %389 = vmatpush1.bf16.msra.mxu0 %v167
  %390 = vmatprep.subr.bf16.mxu0 %v172
  %391 = vmatpush1.bf16.msra.mxu0 %v171
  %392 = vmatprep.subr.bf16.mxu0 %v176
  %393 = vmatpush1.bf16.msra.mxu0 %v175
  %394 = vmatprep.subr.bf16.mxu0 %v180
  %395 = vmatpush1.bf16.msra.mxu0 %v179
  %396 = vmatprep.subr.bf16.mxu0 %v184
  %397 = vmatpush1.bf16.msra.mxu0 %v183
  %398 = vmatprep.subr.bf16.mxu0 %v188
  %399 = vmatpush1.bf16.msra.mxu0 %v187
  %400 = vmatprep.subr.bf16.mxu0 %v192
  %401 = vmatpush1.bf16.msra.mxu0 %v191
  %402 = vmatprep.subr.bf16.mxu0 %v196
  %403 = vmatpush1.bf16.msra.mxu0 %v195
  %404 = vmatprep.subr.bf16.mxu0 0
  %405 = vmatpush1.bf16.msra.mxu0 0
  %406 = vmatprep.subr.bf16.mxu0 0
  %407 = vmatpush1.bf16.msra.mxu0 0
  %408 = vmatprep.subr.bf16.mxu0 0
  %409 = vmatpush1.bf16.msra.mxu0 0
  %410 = vmatprep.subr.bf16.mxu0 0
  %411 = vmatpush1.bf16.msra.mxu0 0
  %412 = vmatprep.subr.bf16.mxu0 0
  %413 = vmatpush1.bf16.msra.mxu0 0
  %414 = vmatprep.subr.bf16.mxu0 0
  %415 = vmatpush1.bf16.msra.mxu0 0
  %416 = vmatprep.subr.bf16.mxu0 0
  %417 = vmatpush1.bf16.msra.mxu0 0
  %418 = vmatprep.subr.bf16.mxu0 0
  %419 = vmatpush1.bf16.msra.mxu0 0
  %420 = vmatprep.mubr.bf16.mxu0 0
  %421 = vmatmul.mubr.bf16.gmra.mrb[0].mxu0 %v346
  %v422 = vpop.f32.mrb[0].mxu0
  %v423 = vadd.f32 0.0, %v422
  %v424 = vpop.f32.mrb[0].mxu0
  %v425 = vadd.f32 0.0, %v424
  %v426 = vpop.f32.mrb[0].mxu0
  %v427 = vpop.f32.mrb[0].mxu0
  %428 = vdwg.mxu0
  %v429 = vadd.f32 %v342, %v382
  %v430 = vadd.f32 %v343, %v384
  %v431 = vadd.f32 %v344, %v423
  %v432 = vadd.f32 %v345, %v425
  %v433 = vxor.u32 %v429, 2147483648
  %v434 = vmul.f32 %v433, 1.442695
  %v435 = vpow.pop %v434
  %v436 = vadd.f32 %v435, 1.0
  %v437 = vrcp.pop %v436
  %v438 = vmul.f32 1.0, %v437
  %v439 = vxor.u32 %v430, 2147483648
  %v440 = vmul.f32 %v439, 1.442695
  %v441 = vpow.pop %v440
  %v442 = vadd.f32 %v441, 1.0
  %v443 = vrcp.pop %v442
  %v444 = vmul.f32 1.0, %v443
  %v445 = vtanh.pop %v431
  %v446 = vxor.u32 %v432, 2147483648
  %v447 = vmul.f32 %v446, 1.442695
  %v448 = vpow.pop %v447
  %v449 = vadd.f32 %v448, 1.0
  %v450 = vrcp.pop %v449
  %v451 = vmul.f32 1.0, %v450
  %v452 = vmul.f32 %v444, %v336
  %v453 = vmul.f32 %v438, %v445
  %v454 = vadd.f32 %v452, %v453
  %v455 = vtanh.pop %v454
  %v456 = vmul.f32 %v451, %v455
  %s457 = scalar_lea.vmem %s0, 32
  %v458 = vld [vmem:[%s457] sm:$0xff]
  %v459 = vld [vmem:[%s457 + $0x8] sm:$0xff]
  %v460 = vunpack.c.l.bf16 %v458
  %v461 = vunpack.c.h.bf16 %v458
  %v462 = vunpack.c.l.bf16 %v459
  %v463 = vunpack.c.h.bf16 %v459
  %v464 = vpack.c.bf16 %v456, %v456
  %465 = vmatprep.subr.bf16.mxu0 %v166
  %466 = vmatpush1.bf16.msra.mxu0 %v165
  %467 = vmatprep.subr.bf16.mxu0 %v170
  %468 = vmatpush1.bf16.msra.mxu0 %v169
  %469 = vmatprep.subr.bf16.mxu0 %v174
  %470 = vmatpush1.bf16.msra.mxu0 %v173
  %471 = vmatprep.subr.bf16.mxu0 %v178
  %472 = vmatpush1.bf16.msra.mxu0 %v177
  %473 = vmatprep.subr.bf16.mxu0 %v182
  %474 = vmatpush1.bf16.msra.mxu0 %v181
  %475 = vmatprep.subr.bf16.mxu0 %v186
  %476 = vmatpush1.bf16.msra.mxu0 %v185
  %477 = vmatprep.subr.bf16.mxu0 %v190
  %478 = vmatpush1.bf16.msra.mxu0 %v189
  %479 = vmatprep.subr.bf16.mxu0 %v194
  %480 = vmatpush1.bf16.msra.mxu0 %v193
  %481 = vmatprep.subr.bf16.mxu0 0
  %482 = vmatpush1.bf16.msra.mxu0 0
  %483 = vmatprep.subr.bf16.mxu0 0
  %484 = vmatpush1.bf16.msra.mxu0 0
  %485 = vmatprep.subr.bf16.mxu0 0
  %486 = vmatpush1.bf16.msra.mxu0 0
  %487 = vmatprep.subr.bf16.mxu0 0
  %488 = vmatpush1.bf16.msra.mxu0 0
  %489 = vmatprep.subr.bf16.mxu0 0
  %490 = vmatpush1.bf16.msra.mxu0 0
  %491 = vmatprep.subr.bf16.mxu0 0
  %492 = vmatpush1.bf16.msra.mxu0 0
  %493 = vmatprep.subr.bf16.mxu0 0
  %494 = vmatpush1.bf16.msra.mxu0 0
  %495 = vmatprep.subr.bf16.mxu0 0
  %496 = vmatpush1.bf16.msra.mxu0 0
  %497 = vmatprep.mubr.bf16.mxu0 0
  %498 = vmatmul.mubr.bf16.gmra.mrb[0].mxu0 %v464
  %v499 = vpop.f32.mrb[0].mxu0
  %v500 = vadd.f32 0.0, %v499
  %v501 = vpop.f32.mrb[0].mxu0
  %v502 = vadd.f32 0.0, %v501
  %v503 = vpop.f32.mrb[0].mxu0
  %v504 = vpop.f32.mrb[0].mxu0
  %505 = vdwg.mxu0
  %506 = vmatprep.subr.bf16.mxu0 %v168
  %507 = vmatpush1.bf16.msra.mxu0 %v167
  %508 = vmatprep.subr.bf16.mxu0 %v172
  %509 = vmatpush1.bf16.msra.mxu0 %v171
  %510 = vmatprep.subr.bf16.mxu0 %v176
  %511 = vmatpush1.bf16.msra.mxu0 %v175
  %512 = vmatprep.subr.bf16.mxu0 %v180
  %513 = vmatpush1.bf16.msra.mxu0 %v179
  %514 = vmatprep.subr.bf16.mxu0 %v184
  %515 = vmatpush1.bf16.msra.mxu0 %v183
  %516 = vmatprep.subr.bf16.mxu0 %v188
  %517 = vmatpush1.bf16.msra.mxu0 %v187
  %518 = vmatprep.subr.bf16.mxu0 %v192
  %519 = vmatpush1.bf16.msra.mxu0 %v191
  %520 = vmatprep.subr.bf16.mxu0 %v196
  %521 = vmatpush1.bf16.msra.mxu0 %v195
  %522 = vmatprep.subr.bf16.mxu0 0
  %523 = vmatpush1.bf16.msra.mxu0 0
  %524 = vmatprep.subr.bf16.mxu0 0
  %525 = vmatpush1.bf16.msra.mxu0 0
  %526 = vmatprep.subr.bf16.mxu0 0
  %527 = vmatpush1.bf16.msra.mxu0 0
  %528 = vmatprep.subr.bf16.mxu0 0
  %529 = vmatpush1.bf16.msra.mxu0 0
  %530 = vmatprep.subr.bf16.mxu0 0
  %531 = vmatpush1.bf16.msra.mxu0 0
  %532 = vmatprep.subr.bf16.mxu0 0
  %533 = vmatpush1.bf16.msra.mxu0 0
  %534 = vmatprep.subr.bf16.mxu0 0
  %535 = vmatpush1.bf16.msra.mxu0 0
  %536 = vmatprep.subr.bf16.mxu0 0
  %537 = vmatpush1.bf16.msra.mxu0 0
  %538 = vmatprep.mubr.bf16.mxu0 0
  %539 = vmatmul.mubr.bf16.gmra.mrb[0].mxu0 %v464
  %v540 = vpop.f32.mrb[0].mxu0
  %v541 = vadd.f32 0.0, %v540
  %v542 = vpop.f32.mrb[0].mxu0
  %v543 = vadd.f32 0.0, %v542
  %v544 = vpop.f32.mrb[0].mxu0
  %v545 = vpop.f32.mrb[0].mxu0
  %546 = vdwg.mxu0
  %v547 = vadd.f32 %v460, %v500
  %v548 = vadd.f32 %v461, %v502
  %v549 = vadd.f32 %v462, %v541
  %v550 = vadd.f32 %v463, %v543
  %v551 = vxor.u32 %v547, 2147483648
  %v552 = vmul.f32 %v551, 1.442695
  %v553 = vpow.pop %v552
  %v554 = vadd.f32 %v553, 1.0
  %v555 = vrcp.pop %v554
  %v556 = vmul.f32 1.0, %v555
  %v557 = vxor.u32 %v548, 2147483648
  %v558 = vmul.f32 %v557, 1.442695
  %v559 = vpow.pop %v558
  %v560 = vadd.f32 %v559, 1.0
  %v561 = vrcp.pop %v560
  %v562 = vmul.f32 1.0, %v561
  %v563 = vtanh.pop %v549
  %v564 = vxor.u32 %v550, 2147483648
  %v565 = vmul.f32 %v564, 1.442695
  %v566 = vpow.pop %v565
  %v567 = vadd.f32 %v566, 1.0
  %v568 = vrcp.pop %v567
  %v569 = vmul.f32 1.0, %v568
  %v570 = vmul.f32 %v562, %v454
  %v571 = vmul.f32 %v556, %v563
  %v572 = vadd.f32 %v570, %v571
  %v573 = vtanh.pop %v572
  %v574 = vmul.f32 %v569, %v573
  %s575 = scalar_lea.vmem %s0, 48
  %v576 = vld [vmem:[%s575] sm:$0xff]
  %v577 = vld [vmem:[%s575 + $0x8] sm:$0xff]
  %v578 = vunpack.c.l.bf16 %v576
  %v579 = vunpack.c.h.bf16 %v576
  %v580 = vunpack.c.l.bf16 %v577
  %v581 = vunpack.c.h.bf16 %v577
  %v582 = vpack.c.bf16 %v574, %v574
  %583 = vmatprep.subr.bf16.mxu0 %v166
  %584 = vmatpush1.bf16.msra.mxu0 %v165
  %585 = vmatprep.subr.bf16.mxu0 %v170
  %586 = vmatpush1.bf16.msra.mxu0 %v169
  %587 = vmatprep.subr.bf16.mxu0 %v174
  %588 = vmatpush1.bf16.msra.mxu0 %v173
  %589 = vmatprep.subr.bf16.mxu0 %v178
  %590 = vmatpush1.bf16.msra.mxu0 %v177
  %591 = vmatprep.subr.bf16.mxu0 %v182
  %592 = vmatpush1.bf16.msra.mxu0 %v181
  %593 = vmatprep.subr.bf16.mxu0 %v186
  %594 = vmatpush1.bf16.msra.mxu0 %v185
  %595 = vmatprep.subr.bf16.mxu0 %v190
  %596 = vmatpush1.bf16.msra.mxu0 %v189
  %597 = vmatprep.subr.bf16.mxu0 %v194
  %598 = vmatpush1.bf16.msra.mxu0 %v193
  %599 = vmatprep.subr.bf16.mxu0 0
  %600 = vmatpush1.bf16.msra.mxu0 0
  %601 = vmatprep.subr.bf16.mxu0 0
  %602 = vmatpush1.bf16.msra.mxu0 0
  %603 = vmatprep.subr.bf16.mxu0 0
  %604 = vmatpush1.bf16.msra.mxu0 0
  %605 = vmatprep.subr.bf16.mxu0 0
  %606 = vmatpush1.bf16.msra.mxu0 0
  %607 = vmatprep.subr.bf16.mxu0 0
  %608 = vmatpush1.bf16.msra.mxu0 0
  %609 = vmatprep.subr.bf16.mxu0 0
  %610 = vmatpush1.bf16.msra.mxu0 0
  %611 = vmatprep.subr.bf16.mxu0 0
  %612 = vmatpush1.bf16.msra.mxu0 0
  %613 = vmatprep.subr.bf16.mxu0 0
  %614 = vmatpush1.bf16.msra.mxu0 0
  %615 = vmatprep.mubr.bf16.mxu0 0
  %616 = vmatmul.mubr.bf16.gmra.mrb[0].mxu0 %v582
  %v617 = vpop.f32.mrb[0].mxu0
  %v618 = vadd.f32 0.0, %v617
  %v619 = vpop.f32.mrb[0].mxu0
  %v620 = vadd.f32 0.0, %v619
  %v621 = vpop.f32.mrb[0].mxu0
  %v622 = vpop.f32.mrb[0].mxu0
  %623 = vdwg.mxu0
  %624 = vmatprep.subr.bf16.mxu0 %v168
  %625 = vmatpush1.bf16.msra.mxu0 %v167
  %626 = vmatprep.subr.bf16.mxu0 %v172
  %627 = vmatpush1.bf16.msra.mxu0 %v171
  %628 = vmatprep.subr.bf16.mxu0 %v176
  %629 = vmatpush1.bf16.msra.mxu0 %v175
  %630 = vmatprep.subr.bf16.mxu0 %v180
  %631 = vmatpush1.bf16.msra.mxu0 %v179
  %632 = vmatprep.subr.bf16.mxu0 %v184
  %633 = vmatpush1.bf16.msra.mxu0 %v183
  %634 = vmatprep.subr.bf16.mxu0 %v188
  %635 = vmatpush1.bf16.msra.mxu0 %v187
  %636 = vmatprep.subr.bf16.mxu0 %v192
  %637 = vmatpush1.bf16.msra.mxu0 %v191
  %638 = vmatprep.subr.bf16.mxu0 %v196
  %639 = vmatpush1.bf16.msra.mxu0 %v195
  %640 = vmatprep.subr.bf16.mxu0 0
  %641 = vmatpush1.bf16.msra.mxu0 0
  %642 = vmatprep.subr.bf16.mxu0 0
  %643 = vmatpush1.bf16.msra.mxu0 0
  %644 = vmatprep.subr.bf16.mxu0 0
  %645 = vmatpush1.bf16.msra.mxu0 0
  %646 = vmatprep.subr.bf16.mxu0 0
  %647 = vmatpush1.bf16.msra.mxu0 0
  %648 = vmatprep.subr.bf16.mxu0 0
  %649 = vmatpush1.bf16.msra.mxu0 0
  %650 = vmatprep.subr.bf16.mxu0 0
  %651 = vmatpush1.bf16.msra.mxu0 0
  %652 = vmatprep.subr.bf16.mxu0 0
  %653 = vmatpush1.bf16.msra.mxu0 0
  %654 = vmatprep.subr.bf16.mxu0 0
  %655 = vmatpush1.bf16.msra.mxu0 0
  %656 = vmatprep.mubr.bf16.mxu0 0
  %657 = vmatmul.mubr.bf16.gmra.mrb[0].mxu0 %v582
  %v658 = vpop.f32.mrb[0].mxu0
  %v659 = vadd.f32 0.0, %v658
  %v660 = vpop.f32.mrb[0].mxu0
  %v661 = vadd.f32 0.0, %v660
  %v662 = vpop.f32.mrb[0].mxu0
  %v663 = vpop.f32.mrb[0].mxu0
  %664 = vdwg.mxu0
  %v665 = vadd.f32 %v578, %v618
  %v666 = vadd.f32 %v579, %v620
  %v667 = vadd.f32 %v580, %v659
  %v668 = vadd.f32 %v581, %v661
  %v669 = vxor.u32 %v665, 2147483648
  %v670 = vmul.f32 %v669, 1.442695
  %v671 = vpow.pop %v670
  %v672 = vadd.f32 %v671, 1.0
  %v673 = vrcp.pop %v672
  %v674 = vmul.f32 1.0, %v673
  %v675 = vxor.u32 %v666, 2147483648
  %v676 = vmul.f32 %v675, 1.442695
  %v677 = vpow.pop %v676
  %v678 = vadd.f32 %v677, 1.0
  %v679 = vrcp.pop %v678
  %v680 = vmul.f32 1.0, %v679
  %v681 = vtanh.pop %v667
  %v682 = vxor.u32 %v668, 2147483648
  %v683 = vmul.f32 %v682, 1.442695
  %v684 = vpow.pop %v683
  %v685 = vadd.f32 %v684, 1.0
  %v686 = vrcp.pop %v685
  %v687 = vmul.f32 1.0, %v686
  %v688 = vmul.f32 %v680, %v572
  %v689 = vmul.f32 %v674, %v681
  %v690 = vadd.f32 %v688, %v689
  %v691 = vtanh.pop %v690
  %v692 = vmul.f32 %v687, %v691
  %s693 = scalar_lea.vmem %s0, 64
  %v694 = vld [vmem:[%s693] sm:$0xff]
  %v695 = vld [vmem:[%s693 + $0x8] sm:$0xff]
  %v696 = vunpack.c.l.bf16 %v694
  %v697 = vunpack.c.h.bf16 %v694
  %v698 = vunpack.c.l.bf16 %v695
  %v699 = vunpack.c.h.bf16 %v695
  %v700 = vpack.c.bf16 %v692, %v692
  %701 = vmatprep.subr.bf16.mxu0 %v166
  %702 = vmatpush1.bf16.msra.mxu0 %v165
  %703 = vmatprep.subr.bf16.mxu0 %v170
  %704 = vmatpush1.bf16.msra.mxu0 %v169
  %705 = vmatprep.subr.bf16.mxu0 %v174
  %706 = vmatpush1.bf16.msra.mxu0 %v173
  %707 = vmatprep.subr.bf16.mxu0 %v178
  %708 = vmatpush1.bf16.msra.mxu0 %v177
  %709 = vmatprep.subr.bf16.mxu0 %v182
  %710 = vmatpush1.bf16.msra.mxu0 %v181
  %711 = vmatprep.subr.bf16.mxu0 %v186
  %712 = vmatpush1.bf16.msra.mxu0 %v185
  %713 = vmatprep.subr.bf16.mxu0 %v190
  %714 = vmatpush1.bf16.msra.mxu0 %v189
  %715 = vmatprep.subr.bf16.mxu0 %v194
  %716 = vmatpush1.bf16.msra.mxu0 %v193
  %717 = vmatprep.subr.bf16.mxu0 0
  %718 = vmatpush1.bf16.msra.mxu0 0
  %719 = vmatprep.subr.bf16.mxu0 0
  %720 = vmatpush1.bf16.msra.mxu0 0
  %721 = vmatprep.subr.bf16.mxu0 0
  %722 = vmatpush1.bf16.msra.mxu0 0
  %723 = vmatprep.subr.bf16.mxu0 0
  %724 = vmatpush1.bf16.msra.mxu0 0
  %725 = vmatprep.subr.bf16.mxu0 0
  %726 = vmatpush1.bf16.msra.mxu0 0
  %727 = vmatprep.subr.bf16.mxu0 0
  %728 = vmatpush1.bf16.msra.mxu0 0
  %729 = vmatprep.subr.bf16.mxu0 0
  %730 = vmatpush1.bf16.msra.mxu0 0
  %731 = vmatprep.subr.bf16.mxu0 0
  %732 = vmatpush1.bf16.msra.mxu0 0
  %733 = vmatprep.mubr.bf16.mxu0 0
  %734 = vmatmul.mubr.bf16.gmra.mrb[0].mxu0 %v700
  %v735 = vpop.f32.mrb[0].mxu0
  %v736 = vadd.f32 0.0, %v735
  %v737 = vpop.f32.mrb[0].mxu0
  %v738 = vadd.f32 0.0, %v737
  %v739 = vpop.f32.mrb[0].mxu0
  %v740 = vpop.f32.mrb[0].mxu0
  %741 = vdwg.mxu0
  %742 = vmatprep.subr.bf16.mxu0 %v168
  %743 = vmatpush1.bf16.msra.mxu0 %v167
  %744 = vmatprep.subr.bf16.mxu0 %v172
  %745 = vmatpush1.bf16.msra.mxu0 %v171
  %746 = vmatprep.subr.bf16.mxu0 %v176
  %747 = vmatpush1.bf16.msra.mxu0 %v175
  %748 = vmatprep.subr.bf16.mxu0 %v180
  %749 = vmatpush1.bf16.msra.mxu0 %v179
  %750 = vmatprep.subr.bf16.mxu0 %v184
  %751 = vmatpush1.bf16.msra.mxu0 %v183
  %752 = vmatprep.subr.bf16.mxu0 %v188
  %753 = vmatpush1.bf16.msra.mxu0 %v187
  %754 = vmatprep.subr.bf16.mxu0 %v192
  %755 = vmatpush1.bf16.msra.mxu0 %v191
  %756 = vmatprep.subr.bf16.mxu0 %v196
  %757 = vmatpush1.bf16.msra.mxu0 %v195
  %758 = vmatprep.subr.bf16.mxu0 0
  %759 = vmatpush1.bf16.msra.mxu0 0
  %760 = vmatprep.subr.bf16.mxu0 0
  %761 = vmatpush1.bf16.msra.mxu0 0
  %762 = vmatprep.subr.bf16.mxu0 0
  %763 = vmatpush1.bf16.msra.mxu0 0
  %764 = vmatprep.subr.bf16.mxu0 0
  %765 = vmatpush1.bf16.msra.mxu0 0
  %766 = vmatprep.subr.bf16.mxu0 0
  %767 = vmatpush1.bf16.msra.mxu0 0
  %768 = vmatprep.subr.bf16.mxu0 0
  %769 = vmatpush1.bf16.msra.mxu0 0
  %770 = vmatprep.subr.bf16.mxu0 0
  %771 = vmatpush1.bf16.msra.mxu0 0
  %772 = vmatprep.subr.bf16.mxu0 0
  %773 = vmatpush1.bf16.msra.mxu0 0
  %774 = vmatprep.mubr.bf16.mxu0 0
  %775 = vmatmul.mubr.bf16.gmra.mrb[0].mxu0 %v700
  %v776 = vpop.f32.mrb[0].mxu0
  %v777 = vadd.f32 0.0, %v776
  %v778 = vpop.f32.mrb[0].mxu0
  %v779 = vadd.f32 0.0, %v778
  %v780 = vpop.f32.mrb[0].mxu0
  %v781 = vpop.f32.mrb[0].mxu0
  %782 = vdwg.mxu0
  %v783 = vadd.f32 %v696, %v736
  %v784 = vadd.f32 %v697, %v738
  %v785 = vadd.f32 %v698, %v777
  %v786 = vadd.f32 %v699, %v779
  %v787 = vxor.u32 %v783, 2147483648
  %v788 = vmul.f32 %v787, 1.442695
  %v789 = vpow.pop %v788
  %v790 = vadd.f32 %v789, 1.0
  %v791 = vrcp.pop %v790
  %v792 = vmul.f32 1.0, %v791
  %v793 = vxor.u32 %v784, 2147483648
  %v794 = vmul.f32 %v793, 1.442695
  %v795 = vpow.pop %v794
  %v796 = vadd.f32 %v795, 1.0
  %v797 = vrcp.pop %v796
  %v798 = vmul.f32 1.0, %v797
  %v799 = vtanh.pop %v785
  %v800 = vxor.u32 %v786, 2147483648
  %v801 = vmul.f32 %v800, 1.442695
  %v802 = vpow.pop %v801
  %v803 = vadd.f32 %v802, 1.0
  %v804 = vrcp.pop %v803
  %v805 = vmul.f32 1.0, %v804
  %v806 = vmul.f32 %v798, %v690
  %v807 = vmul.f32 %v792, %v799
  %v808 = vadd.f32 %v806, %v807
  %v809 = vtanh.pop %v808
  %v810 = vmul.f32 %v805, %v809
  %s811 = scalar_lea.vmem %s0, 80
  %v812 = vld [vmem:[%s811] sm:$0xff]
  %v813 = vld [vmem:[%s811 + $0x8] sm:$0xff]
  %v814 = vunpack.c.l.bf16 %v812
  %v815 = vunpack.c.h.bf16 %v812
  %v816 = vunpack.c.l.bf16 %v813
  %v817 = vunpack.c.h.bf16 %v813
  %v818 = vpack.c.bf16 %v810, %v810
  %819 = vmatprep.subr.bf16.mxu0 %v166
  %820 = vmatpush1.bf16.msra.mxu0 %v165
  %821 = vmatprep.subr.bf16.mxu0 %v170
  %822 = vmatpush1.bf16.msra.mxu0 %v169
  %823 = vmatprep.subr.bf16.mxu0 %v174
  %824 = vmatpush1.bf16.msra.mxu0 %v173
  %825 = vmatprep.subr.bf16.mxu0 %v178
  %826 = vmatpush1.bf16.msra.mxu0 %v177
  %827 = vmatprep.subr.bf16.mxu0 %v182
  %828 = vmatpush1.bf16.msra.mxu0 %v181
  %829 = vmatprep.subr.bf16.mxu0 %v186
  %830 = vmatpush1.bf16.msra.mxu0 %v185
  %831 = vmatprep.subr.bf16.mxu0 %v190
  %832 = vmatpush1.bf16.msra.mxu0 %v189
  %833 = vmatprep.subr.bf16.mxu0 %v194
  %834 = vmatpush1.bf16.msra.mxu0 %v193
  %835 = vmatprep.subr.bf16.mxu0 0
  %836 = vmatpush1.bf16.msra.mxu0 0
  %837 = vmatprep.subr.bf16.mxu0 0
  %838 = vmatpush1.bf16.msra.mxu0 0
  %839 = vmatprep.subr.bf16.mxu0 0
  %840 = vmatpush1.bf16.msra.mxu0 0
  %841 = vmatprep.subr.bf16.mxu0 0
  %842 = vmatpush1.bf16.msra.mxu0 0
  %843 = vmatprep.subr.bf16.mxu0 0
  %844 = vmatpush1.bf16.msra.mxu0 0
  %845 = vmatprep.subr.bf16.mxu0 0
  %846 = vmatpush1.bf16.msra.mxu0 0
  %847 = vmatprep.subr.bf16.mxu0 0
  %848 = vmatpush1.bf16.msra.mxu0 0
  %849 = vmatprep.subr.bf16.mxu0 0
  %850 = vmatpush1.bf16.msra.mxu0 0
  %851 = vmatprep.mubr.bf16.mxu0 0
  %852 = vmatmul.mubr.bf16.gmra.mrb[0].mxu0 %v818
  %v853 = vpop.f32.mrb[0].mxu0
  %v854 = vadd.f32 0.0, %v853
  %v855 = vpop.f32.mrb[0].mxu0
  %v856 = vadd.f32 0.0, %v855
  %v857 = vpop.f32.mrb[0].mxu0
  %v858 = vpop.f32.mrb[0].mxu0
  %859 = vdwg.mxu0
  %860 = vmatprep.subr.bf16.mxu0 %v168
  %861 = vmatpush1.bf16.msra.mxu0 %v167
  %862 = vmatprep.subr.bf16.mxu0 %v172
  %863 = vmatpush1.bf16.msra.mxu0 %v171
  %864 = vmatprep.subr.bf16.mxu0 %v176
  %865 = vmatpush1.bf16.msra.mxu0 %v175
  %866 = vmatprep.subr.bf16.mxu0 %v180
  %867 = vmatpush1.bf16.msra.mxu0 %v179
  %868 = vmatprep.subr.bf16.mxu0 %v184
  %869 = vmatpush1.bf16.msra.mxu0 %v183
  %870 = vmatprep.subr.bf16.mxu0 %v188
  %871 = vmatpush1.bf16.msra.mxu0 %v187
  %872 = vmatprep.subr.bf16.mxu0 %v192
  %873 = vmatpush1.bf16.msra.mxu0 %v191
  %874 = vmatprep.subr.bf16.mxu0 %v196
  %875 = vmatpush1.bf16.msra.mxu0 %v195
  %876 = vmatprep.subr.bf16.mxu0 0
  %877 = vmatpush1.bf16.msra.mxu0 0
  %878 = vmatprep.subr.bf16.mxu0 0
  %879 = vmatpush1.bf16.msra.mxu0 0
  %880 = vmatprep.subr.bf16.mxu0 0
  %881 = vmatpush1.bf16.msra.mxu0 0
  %882 = vmatprep.subr.bf16.mxu0 0
  %883 = vmatpush1.bf16.msra.mxu0 0
  %884 = vmatprep.subr.bf16.mxu0 0
  %885 = vmatpush1.bf16.msra.mxu0 0
  %886 = vmatprep.subr.bf16.mxu0 0
  %887 = vmatpush1.bf16.msra.mxu0 0
  %888 = vmatprep.subr.bf16.mxu0 0
  %889 = vmatpush1.bf16.msra.mxu0 0
  %890 = vmatprep.subr.bf16.mxu0 0
  %891 = vmatpush1.bf16.msra.mxu0 0
  %892 = vmatprep.mubr.bf16.mxu0 0
  %893 = vmatmul.mubr.bf16.gmra.mrb[0].mxu0 %v818
  %v894 = vpop.f32.mrb[0].mxu0
  %v895 = vadd.f32 0.0, %v894
  %v896 = vpop.f32.mrb[0].mxu0
  %v897 = vadd.f32 0.0, %v896
  %v898 = vpop.f32.mrb[0].mxu0
  %v899 = vpop.f32.mrb[0].mxu0
  %900 = vdwg.mxu0
  %v901 = vadd.f32 %v814, %v854
  %v902 = vadd.f32 %v815, %v856
  %v903 = vadd.f32 %v816, %v895
  %v904 = vadd.f32 %v817, %v897
  %v905 = vxor.u32 %v901, 2147483648
  %v906 = vmul.f32 %v905, 1.442695
  %v907 = vpow.pop %v906
  %v908 = vadd.f32 %v907, 1.0
  %v909 = vrcp.pop %v908
  %v910 = vmul.f32 1.0, %v909
  %v911 = vxor.u32 %v902, 2147483648
  %v912 = vmul.f32 %v911, 1.442695
  %v913 = vpow.pop %v912
  %v914 = vadd.f32 %v913, 1.0
  %v915 = vrcp.pop %v914
  %v916 = vmul.f32 1.0, %v915
  %v917 = vtanh.pop %v903
  %v918 = vxor.u32 %v904, 2147483648
  %v919 = vmul.f32 %v918, 1.442695
  %v920 = vpow.pop %v919
  %v921 = vadd.f32 %v920, 1.0
  %v922 = vrcp.pop %v921
  %v923 = vmul.f32 1.0, %v922
  %v924 = vmul.f32 %v916, %v808
  %v925 = vmul.f32 %v910, %v917
  %v926 = vadd.f32 %v924, %v925
  %v927 = vtanh.pop %v926
  %v928 = vmul.f32 %v923, %v927
  %s929 = scalar_lea.vmem %s0, 96
  %v930 = vld [vmem:[%s929] sm:$0xff]
  %v931 = vld [vmem:[%s929 + $0x8] sm:$0xff]
  %v932 = vunpack.c.l.bf16 %v930
  %v933 = vunpack.c.h.bf16 %v930
  %v934 = vunpack.c.l.bf16 %v931
  %v935 = vunpack.c.h.bf16 %v931
  %v936 = vpack.c.bf16 %v928, %v928
  %937 = vmatprep.subr.bf16.mxu0 %v166
  %938 = vmatpush1.bf16.msra.mxu0 %v165
  %939 = vmatprep.subr.bf16.mxu0 %v170
  %940 = vmatpush1.bf16.msra.mxu0 %v169
  %941 = vmatprep.subr.bf16.mxu0 %v174
  %942 = vmatpush1.bf16.msra.mxu0 %v173
  %943 = vmatprep.subr.bf16.mxu0 %v178
  %944 = vmatpush1.bf16.msra.mxu0 %v177
  %945 = vmatprep.subr.bf16.mxu0 %v182
  %946 = vmatpush1.bf16.msra.mxu0 %v181
  %947 = vmatprep.subr.bf16.mxu0 %v186
  %948 = vmatpush1.bf16.msra.mxu0 %v185
  %949 = vmatprep.subr.bf16.mxu0 %v190
  %950 = vmatpush1.bf16.msra.mxu0 %v189
  %951 = vmatprep.subr.bf16.mxu0 %v194
  %952 = vmatpush1.bf16.msra.mxu0 %v193
  %953 = vmatprep.subr.bf16.mxu0 0
  %954 = vmatpush1.bf16.msra.mxu0 0
  %955 = vmatprep.subr.bf16.mxu0 0
  %956 = vmatpush1.bf16.msra.mxu0 0
  %957 = vmatprep.subr.bf16.mxu0 0
  %958 = vmatpush1.bf16.msra.mxu0 0
  %959 = vmatprep.subr.bf16.mxu0 0
  %960 = vmatpush1.bf16.msra.mxu0 0
  %961 = vmatprep.subr.bf16.mxu0 0
  %962 = vmatpush1.bf16.msra.mxu0 0
  %963 = vmatprep.subr.bf16.mxu0 0
  %964 = vmatpush1.bf16.msra.mxu0 0
  %965 = vmatprep.subr.bf16.mxu0 0
  %966 = vmatpush1.bf16.msra.mxu0 0
  %967 = vmatprep.subr.bf16.mxu0 0
  %968 = vmatpush1.bf16.msra.mxu0 0
  %969 = vmatprep.mubr.bf16.mxu0 0
  %970 = vmatmul.mubr.bf16.gmra.mrb[0].mxu0 %v936
  %v971 = vpop.f32.mrb[0].mxu0
  %v972 = vadd.f32 0.0, %v971
  %v973 = vpop.f32.mrb[0].mxu0
  %v974 = vadd.f32 0.0, %v973
  %v975 = vpop.f32.mrb[0].mxu0
  %v976 = vpop.f32.mrb[0].mxu0
  %977 = vdwg.mxu0
  %978 = vmatprep.subr.bf16.mxu0 %v168
  %979 = vmatpush1.bf16.msra.mxu0 %v167
  %980 = vmatprep.subr.bf16.mxu0 %v172
  %981 = vmatpush1.bf16.msra.mxu0 %v171
  %982 = vmatprep.subr.bf16.mxu0 %v176
  %983 = vmatpush1.bf16.msra.mxu0 %v175
  %984 = vmatprep.subr.bf16.mxu0 %v180
  %985 = vmatpush1.bf16.msra.mxu0 %v179
  %986 = vmatprep.subr.bf16.mxu0 %v184
  %987 = vmatpush1.bf16.msra.mxu0 %v183
  %988 = vmatprep.subr.bf16.mxu0 %v188
  %989 = vmatpush1.bf16.msra.mxu0 %v187
  %990 = vmatprep.subr.bf16.mxu0 %v192
  %991 = vmatpush1.bf16.msra.mxu0 %v191
  %992 = vmatprep.subr.bf16.mxu0 %v196
  %993 = vmatpush1.bf16.msra.mxu0 %v195
  %994 = vmatprep.subr.bf16.mxu0 0
  %995 = vmatpush1.bf16.msra.mxu0 0
  %996 = vmatprep.subr.bf16.mxu0 0
  %997 = vmatpush1.bf16.msra.mxu0 0
  %998 = vmatprep.subr.bf16.mxu0 0
  %999 = vmatpush1.bf16.msra.mxu0 0
  %1000 = vmatprep.subr.bf16.mxu0 0
  %1001 = vmatpush1.bf16.msra.mxu0 0
  %1002 = vmatprep.subr.bf16.mxu0 0
  %1003 = vmatpush1.bf16.msra.mxu0 0
  %1004 = vmatprep.subr.bf16.mxu0 0
  %1005 = vmatpush1.bf16.msra.mxu0 0
  %1006 = vmatprep.subr.bf16.mxu0 0
  %1007 = vmatpush1.bf16.msra.mxu0 0
  %1008 = vmatprep.subr.bf16.mxu0 0
  %1009 = vmatpush1.bf16.msra.mxu0 0
  %1010 = vmatprep.mubr.bf16.mxu0 0
  %1011 = vmatmul.mubr.bf16.gmra.mrb[0].mxu0 %v936
  %v1012 = vpop.f32.mrb[0].mxu0
  %v1013 = vadd.f32 0.0, %v1012
  %v1014 = vpop.f32.mrb[0].mxu0
  %v1015 = vadd.f32 0.0, %v1014
  %v1016 = vpop.f32.mrb[0].mxu0
  %v1017 = vpop.f32.mrb[0].mxu0
  %1018 = vdwg.mxu0
  %v1019 = vadd.f32 %v932, %v972
  %v1020 = vadd.f32 %v933, %v974
  %v1021 = vadd.f32 %v934, %v1013
  %v1022 = vadd.f32 %v935, %v1015
  %v1023 = vxor.u32 %v1019, 2147483648
  %v1024 = vmul.f32 %v1023, 1.442695
  %v1025 = vpow.pop %v1024
  %v1026 = vadd.f32 %v1025, 1.0
  %v1027 = vrcp.pop %v1026
  %v1028 = vmul.f32 1.0, %v1027
  %v1029 = vxor.u32 %v1020, 2147483648
  %v1030 = vmul.f32 %v1029, 1.442695
  %v1031 = vpow.pop %v1030
  %v1032 = vadd.f32 %v1031, 1.0
  %v1033 = vrcp.pop %v1032
  %v1034 = vmul.f32 1.0, %v1033
  %v1035 = vtanh.pop %v1021
  %v1036 = vxor.u32 %v1022, 2147483648
  %v1037 = vmul.f32 %v1036, 1.442695
  %v1038 = vpow.pop %v1037
  %v1039 = vadd.f32 %v1038, 1.0
  %v1040 = vrcp.pop %v1039
  %v1041 = vmul.f32 1.0, %v1040
  %v1042 = vmul.f32 %v1034, %v926
  %v1043 = vmul.f32 %v1028, %v1035
  %v1044 = vadd.f32 %v1042, %v1043
  %v1045 = vtanh.pop %v1044
  %v1046 = vmul.f32 %v1041, %v1045
  %s1047 = scalar_lea.vmem %s0, 112
  %v1048 = vld [vmem:[%s1047] sm:$0xff]
  %v1049 = vld [vmem:[%s1047 + $0x8] sm:$0xff]
  %v1050 = vunpack.c.l.bf16 %v1048
  %v1051 = vunpack.c.h.bf16 %v1048
  %v1052 = vunpack.c.l.bf16 %v1049
  %v1053 = vunpack.c.h.bf16 %v1049
  %v1054 = vpack.c.bf16 %v1046, %v1046
  %1055 = vmatprep.subr.bf16.mxu0 %v166
  %1056 = vmatpush1.bf16.msra.mxu0 %v165
  %1057 = vmatprep.subr.bf16.mxu0 %v170
  %1058 = vmatpush1.bf16.msra.mxu0 %v169
  %1059 = vmatprep.subr.bf16.mxu0 %v174
  %1060 = vmatpush1.bf16.msra.mxu0 %v173
  %1061 = vmatprep.subr.bf16.mxu0 %v178
  %1062 = vmatpush1.bf16.msra.mxu0 %v177
  %1063 = vmatprep.subr.bf16.mxu0 %v182
  %1064 = vmatpush1.bf16.msra.mxu0 %v181
  %1065 = vmatprep.subr.bf16.mxu0 %v186
  %1066 = vmatpush1.bf16.msra.mxu0 %v185
  %1067 = vmatprep.subr.bf16.mxu0 %v190
  %1068 = vmatpush1.bf16.msra.mxu0 %v189
  %1069 = vmatprep.subr.bf16.mxu0 %v194
  %1070 = vmatpush1.bf16.msra.mxu0 %v193
  %1071 = vmatprep.subr.bf16.mxu0 0
  %1072 = vmatpush1.bf16.msra.mxu0 0
  %1073 = vmatprep.subr.bf16.mxu0 0
  %1074 = vmatpush1.bf16.msra.mxu0 0
  %1075 = vmatprep.subr.bf16.mxu0 0
  %1076 = vmatpush1.bf16.msra.mxu0 0
  %1077 = vmatprep.subr.bf16.mxu0 0
  %1078 = vmatpush1.bf16.msra.mxu0 0
  %1079 = vmatprep.subr.bf16.mxu0 0
  %1080 = vmatpush1.bf16.msra.mxu0 0
  %1081 = vmatprep.subr.bf16.mxu0 0
  %1082 = vmatpush1.bf16.msra.mxu0 0
  %1083 = vmatprep.subr.bf16.mxu0 0
  %1084 = vmatpush1.bf16.msra.mxu0 0
  %1085 = vmatprep.subr.bf16.mxu0 0
  %1086 = vmatpush1.bf16.msra.mxu0 0
  %1087 = vmatprep.mubr.bf16.mxu0 0
  %1088 = vmatmul.mubr.bf16.gmra.mrb[0].mxu0 %v1054
  %v1089 = vpop.f32.mrb[0].mxu0
  %v1090 = vadd.f32 0.0, %v1089
  %v1091 = vpop.f32.mrb[0].mxu0
  %v1092 = vadd.f32 0.0, %v1091
  %v1093 = vpop.f32.mrb[0].mxu0
  %v1094 = vpop.f32.mrb[0].mxu0
  %1095 = vdwg.mxu0
  %1096 = vmatprep.subr.bf16.mxu0 %v168
  %1097 = vmatpush1.bf16.msra.mxu0 %v167
  %1098 = vmatprep.subr.bf16.mxu0 %v172
  %1099 = vmatpush1.bf16.msra.mxu0 %v171
  %1100 = vmatprep.subr.bf16.mxu0 %v176
  %1101 = vmatpush1.bf16.msra.mxu0 %v175
  %1102 = vmatprep.subr.bf16.mxu0 %v180
  %1103 = vmatpush1.bf16.msra.mxu0 %v179
  %1104 = vmatprep.subr.bf16.mxu0 %v184
  %1105 = vmatpush1.bf16.msra.mxu0 %v183
  %1106 = vmatprep.subr.bf16.mxu0 %v188
  %1107 = vmatpush1.bf16.msra.mxu0 %v187
  %1108 = vmatprep.subr.bf16.mxu0 %v192
  %1109 = vmatpush1.bf16.msra.mxu0 %v191
  %1110 = vmatprep.subr.bf16.mxu0 %v196
  %1111 = vmatpush1.bf16.msra.mxu0 %v195
  %1112 = vmatprep.subr.bf16.mxu0 0
  %1113 = vmatpush1.bf16.msra.mxu0 0
  %1114 = vmatprep.subr.bf16.mxu0 0
  %1115 = vmatpush1.bf16.msra.mxu0 0
  %1116 = vmatprep.subr.bf16.mxu0 0
  %1117 = vmatpush1.bf16.msra.mxu0 0
  %1118 = vmatprep.subr.bf16.mxu0 0
  %1119 = vmatpush1.bf16.msra.mxu0 0
  %1120 = vmatprep.subr.bf16.mxu0 0
  %1121 = vmatpush1.bf16.msra.mxu0 0
  %1122 = vmatprep.subr.bf16.mxu0 0
  %1123 = vmatpush1.bf16.msra.mxu0 0
  %1124 = vmatprep.subr.bf16.mxu0 0
  %1125 = vmatpush1.bf16.msra.mxu0 0
  %1126 = vmatprep.subr.bf16.mxu0 0
  %1127 = vmatpush1.bf16.msra.mxu0 0
  %1128 = vmatprep.mubr.bf16.mxu0 0
  %1129 = vmatmul.mubr.bf16.gmra.mrb[0].mxu0 %v1054
  %v1130 = vpop.f32.mrb[0].mxu0
  %v1131 = vadd.f32 0.0, %v1130
  %v1132 = vpop.f32.mrb[0].mxu0
  %v1133 = vadd.f32 0.0, %v1132
  %v1134 = vpop.f32.mrb[0].mxu0
  %v1135 = vpop.f32.mrb[0].mxu0
  %1136 = vdwg.mxu0
  %v1137 = vadd.f32 %v1050, %v1090
  %v1138 = vadd.f32 %v1051, %v1092
  %v1139 = vadd.f32 %v1052, %v1131
  %v1140 = vadd.f32 %v1053, %v1133
  %v1141 = vxor.u32 %v1137, 2147483648
  %v1142 = vmul.f32 %v1141, 1.442695
  %v1143 = vpow.pop %v1142
  %v1144 = vadd.f32 %v1143, 1.0
  %v1145 = vrcp.pop %v1144
  %v1146 = vmul.f32 1.0, %v1145
  %v1147 = vxor.u32 %v1138, 2147483648
  %v1148 = vmul.f32 %v1147, 1.442695
  %v1149 = vpow.pop %v1148
  %v1150 = vadd.f32 %v1149, 1.0
  %v1151 = vrcp.pop %v1150
  %v1152 = vmul.f32 1.0, %v1151
  %v1153 = vtanh.pop %v1139
  %v1154 = vxor.u32 %v1140, 2147483648
  %v1155 = vmul.f32 %v1154, 1.442695
  %v1156 = vpow.pop %v1155
  %v1157 = vadd.f32 %v1156, 1.0
  %v1158 = vrcp.pop %v1157
  %v1159 = vmul.f32 1.0, %v1158
  %v1160 = vmul.f32 %v1152, %v1044
  %v1161 = vmul.f32 %v1146, %v1153
  %v1162 = vadd.f32 %v1160, %v1161
  %v1163 = vtanh.pop %v1162
  %v1164 = vmul.f32 %v1159, %v1163
  %1165 = vst [vmem:[#allocation2] sm:$0xff] %v1164
  %1166 = vst [vmem:[#allocation3] sm:$0xff] %v1162
  // Predicated region
  $region22: #{seq2seq_forward.6} parent=0 // pred_check
    %p1167 = pneg %p20
  $region23: #{seq2seq_forward.6} parent=0 // pred_check_branch
    %1169 = sbr.rel (%p1167) target = $region25
  $region24: #{seq2seq_forward.6} parent=0 // pred_region
    %1170 = vst [vmem:[%s4] sm:$0xff] %v1164
    %1171 = vst [vmem:[%s5] sm:$0xff] %v1162
  $region25: #{seq2seq_forward.6} parent=0 // pred_fallthru
    _
  // Predicated region
  $region26: #{seq2seq_forward.6} parent=0 // pred_check
    _
  $region27: #{seq2seq_forward.6} parent=0 // pred_check_branch
    %1173 = sbr.rel (0) target = $region29
  $region28: #{seq2seq_forward.6} parent=0 // pred_region
    _
  $region29: #{seq2seq_forward.6} parent=0 // pred_fallthru
    _
  // Predicated region
  $region30: #{seq2seq_forward.6} parent=0 // pred_check
    _
  $region31: #{seq2seq_forward.6} parent=0 // pred_check_branch
    %1175 = sbr.rel (0) target = $region33
  $region32: #{seq2seq_forward.6} parent=0 // pred_region
    _
  $region33: #{seq2seq_forward.6} parent=0 // pred_fallthru
    _
  // Predicated region
  $region34: #{seq2seq_forward.6} parent=0 // pred_check
    _
  $region35: #{seq2seq_forward.6} parent=0 // pred_check_branch
    %1177 = sbr.rel (0) target = $region37
  $region36: #{seq2seq_forward.6} parent=0 // pred_region
    _
  $region37: #{seq2seq_forward.6} parent=0 // pred_fallthru
    _
  // Predicated region
  $region38: #{seq2seq_forward.6} parent=0 // pred_check
    _
  $region39: #{seq2seq_forward.6} parent=0 // pred_check_branch
    %1179 = sbr.rel (0) target = $region41
  $region40: #{seq2seq_forward.6} parent=0 // pred_region
    _
  $region41: #{seq2seq_forward.6} parent=0 // pred_fallthru
    _

// kernel: seq2seq_forward.8
$region0: #{seq2seq_forward.8}
  #allocation0 [shape = 'u32[]', space=smem, size = 0x4, offset = 0x4, fixed_abs, tag = 'smem constant byte address 0x4 - core index']
  #allocation1 [shape = 'u32[144,128]{1,0:T(1,128)}', space=vmem, size = 0x12000, scoped, tag = 'internal scratch']
  #allocation2 [shape = 'f32[8,128]{1,0:T(8,128)}', space=vmem, size = 0x1000, scoped, tag = 'scratch operand']
  #allocation3 [shape = 'f32[8,128]{1,0:T(8,128)}', space=vmem, size = 0x1000, scoped, tag = 'scratch operand']
  %s0 = inlined_call_operand.vmem [shape: bf16[8,8,512], index: 0, kind: input, shape index: {}]
  %s1 = inlined_call_operand.vmem [shape: bf16[128,512], index: 1, kind: input, shape index: {}]
  %s2 = inlined_call_operand.vmem [shape: f32[8,128], index: 2, kind: input, shape index: {}]
  %s3 = inlined_call_operand.vmem [shape: f32[8,128], index: 3, kind: input, shape index: {}]
  %s4 = inlined_call_operand.vmem [shape: bf16[8,8,128], index: 4, kind: output, shape index: {0}]
  %s5 = inlined_call_operand.hbm [shape: f32[8,128], index: 5, kind: output, shape index: {1}]
  %s6 = inlined_call_operand.hbm [shape: f32[8,128], index: 6, kind: output, shape index: {2}]
  %7 = xla_tuple %s4, %s5, %s6
  %s8 = sld [smem:[#allocation0]]
  $region50: #{seq2seq_forward.8} parent=0
    _
  %s10 = ssub.s32 1, %s8
  %s11 = scalar_select 0, %s10, %s8
  $region1: #{seq2seq_forward.8} parent=0
    #allocation4 [shape = 'u8[4096]{0}', space=vmem, size = 0x1000, scoped, tag = 'output window, operand 1, single buffered']
    #allocation5 [shape = 's32[1]{0}', space=sflag, size = 0x4, scoped, tag = 'scoped memory for seq2seq_forward.8']
    #allocation6 [shape = 'u8[4096]{0}', space=vmem, size = 0x1000, scoped, tag = 'output window, operand 2, single buffered']
    #allocation7 [shape = 's32[1]{0}', space=sflag, size = 0x4, scoped, tag = 'scoped memory for seq2seq_forward.8']
    %12 = vsyncpa [#allocation5], 0
    %13 = vsyncpa [#allocation7], 0
    // Predicated region
    $region2: #{seq2seq_forward.8} parent=1 // pred_check
      _
    $region3: #{seq2seq_forward.8} parent=1 // pred_check_branch
      %15 = sbr.rel (0) target = $region5
    $region4: #{seq2seq_forward.8} parent=1 // pred_region
      _
    $region5: #{seq2seq_forward.8} parent=1 // pred_fallthru
      _
    // Predicated region
    $region6: #{seq2seq_forward.8} parent=1 // pred_check
      _
    $region7: #{seq2seq_forward.8} parent=1 // pred_check_branch
      %17 = sbr.rel (0) target = $region9
    $region8: #{seq2seq_forward.8} parent=1 // pred_region
      _
    $region9: #{seq2seq_forward.8} parent=1 // pred_fallthru
      _
    // Predicated region
    $region10: #{seq2seq_forward.8} parent=1 // pred_check
      _
    $region11: #{seq2seq_forward.8} parent=1 // pred_check_branch
      %19 = sbr.rel (0) target = $region13
    $region12: #{seq2seq_forward.8} parent=1 // pred_region
      _
    $region13: #{seq2seq_forward.8} parent=1 // pred_fallthru
      _
    // Predicated region
    $region14: #{seq2seq_forward.8} parent=1 // pred_check
      _
    $region15: #{seq2seq_forward.8} parent=1 // pred_check_branch
      %21 = sbr.rel (0) target = $region17
    $region16: #{seq2seq_forward.8} parent=1 // pred_region
      _
    $region17: #{seq2seq_forward.8} parent=1 // pred_fallthru
      _
    %p23 = scmp.eq.s32.totalorder 0, 0
    // Predicated region
    $region18: #{seq2seq_forward.8} parent=1 // pred_check
      %p24 = pneg %p23
    $region19: #{seq2seq_forward.8} parent=1 // pred_check_branch
      %26 = sbr.rel (%p24) target = $region21
    $region20: #{seq2seq_forward.8} parent=1 // pred_region
      %v27 = vld [vmem:[%s2] sm:$0xff]
      %28 = vst [vmem:[#allocation2] sm:$0xff] %v27
      %v29 = vld [vmem:[%s3] sm:$0xff]
      %30 = vst [vmem:[#allocation3] sm:$0xff] %v29
    $region21: #{seq2seq_forward.8} parent=1 // pred_fallthru
      _
    %v31 = vld [vmem:[#allocation2] sm:$0xff]
    %v32 = vld [vmem:[#allocation3] sm:$0xff]
    %v33 = vld [vmem:[%s0] sm:$0xff]
    %v34 = vld [vmem:[%s0 + $0x8] sm:$0xff]
    %v35 = vunpack.c.l.bf16 %v33
    %v36 = vunpack.c.h.bf16 %v33
    %v37 = vunpack.c.l.bf16 %v34
    %v38 = vunpack.c.h.bf16 %v34
    %v39 = vpack.c.bf16 %v31, %v31
    %v40 = vld [vmem:[%s1] sm:$0xff]
    %v41 = vld [vmem:[%s1 + $0x8] sm:$0xff]
    %v42 = vld [vmem:[%s1 + $0x10] sm:$0xff]
    %v43 = vld [vmem:[%s1 + $0x18] sm:$0xff]
    %v44 = vld [vmem:[%s1 + $0x20] sm:$0xff]
    %v45 = vld [vmem:[%s1 + $0x28] sm:$0xff]
    %v46 = vld [vmem:[%s1 + $0x30] sm:$0xff]
    %v47 = vld [vmem:[%s1 + $0x38] sm:$0xff]
    %v48 = vld [vmem:[%s1 + $0x40] sm:$0xff]
    %v49 = vld [vmem:[%s1 + $0x48] sm:$0xff]
    %v50 = vld [vmem:[%s1 + $0x50] sm:$0xff]
    %v51 = vld [vmem:[%s1 + $0x58] sm:$0xff]
    %v52 = vld [vmem:[%s1 + $0x60] sm:$0xff]
    %v53 = vld [vmem:[%s1 + $0x68] sm:$0xff]
    %v54 = vld [vmem:[%s1 + $0x70] sm:$0xff]
    %v55 = vld [vmem:[%s1 + $0x78] sm:$0xff]
    %v56 = vld [vmem:[%s1 + $0x80] sm:$0xff]
    %v57 = vld [vmem:[%s1 + $0x88] sm:$0xff]
    %v58 = vld [vmem:[%s1 + $0x90] sm:$0xff]
    %v59 = vld [vmem:[%s1 + $0x98] sm:$0xff]
    %v60 = vld [vmem:[%s1 + $0xa0] sm:$0xff]
    %v61 = vld [vmem:[%s1 + $0xa8] sm:$0xff]
    %v62 = vld [vmem:[%s1 + $0xb0] sm:$0xff]
    %v63 = vld [vmem:[%s1 + $0xb8] sm:$0xff]
    %v64 = vld [vmem:[%s1 + $0xc0] sm:$0xff]
    %v65 = vld [vmem:[%s1 + $0xc8] sm:$0xff]
    %v66 = vld [vmem:[%s1 + $0xd0] sm:$0xff]
    %v67 = vld [vmem:[%s1 + $0xd8] sm:$0xff]
    %v68 = vld [vmem:[%s1 + $0xe0] sm:$0xff]
    %v69 = vld [vmem:[%s1 + $0xe8] sm:$0xff]
    %v70 = vld [vmem:[%s1 + $0xf0] sm:$0xff]
    %v71 = vld [vmem:[%s1 + $0xf8] sm:$0xff]
    %v104 = vunpack.c.l.b16 %v40
    %v105 = vunpack.c.h.b16 %v40
    %v106 = vunpack.c.l.b16 %v41
    %v107 = vunpack.c.h.b16 %v41
    %v108 = vunpack.c.l.b16 %v42
    %v109 = vunpack.c.h.b16 %v42
    %v110 = vunpack.c.l.b16 %v43
    %v111 = vunpack.c.h.b16 %v43
    %v112 = vunpack.c.l.b16 %v44
    %v113 = vunpack.c.h.b16 %v44
    %v114 = vunpack.c.l.b16 %v45
    %v115 = vunpack.c.h.b16 %v45
    %v116 = vunpack.c.l.b16 %v46
    %v117 = vunpack.c.h.b16 %v46
    %v118 = vunpack.c.l.b16 %v47
    %v119 = vunpack.c.h.b16 %v47
    %v120 = vunpack.c.l.b16 %v48
    %v121 = vunpack.c.h.b16 %v48
    %v122 = vunpack.c.l.b16 %v49
    %v123 = vunpack.c.h.b16 %v49
    %v124 = vunpack.c.l.b16 %v50
    %v125 = vunpack.c.h.b16 %v50
    %v126 = vunpack.c.l.b16 %v51
    %v127 = vunpack.c.h.b16 %v51
    %v128 = vunpack.c.l.b16 %v52
    %v129 = vunpack.c.h.b16 %v52
    %v130 = vunpack.c.l.b16 %v53
    %v131 = vunpack.c.h.b16 %v53
    %v132 = vunpack.c.l.b16 %v54
    %v133 = vunpack.c.h.b16 %v54
    %v134 = vunpack.c.l.b16 %v55
    %v135 = vunpack.c.h.b16 %v55
    %v136 = vunpack.c.l.b16 %v56
    %v137 = vunpack.c.h.b16 %v56
    %v138 = vunpack.c.l.b16 %v57
    %v139 = vunpack.c.h.b16 %v57
    %v140 = vunpack.c.l.b16 %v58
    %v141 = vunpack.c.h.b16 %v58
    %v142 = vunpack.c.l.b16 %v59
    %v143 = vunpack.c.h.b16 %v59
    %v144 = vunpack.c.l.b16 %v60
    %v145 = vunpack.c.h.b16 %v60
    %v146 = vunpack.c.l.b16 %v61
    %v147 = vunpack.c.h.b16 %v61
    %v148 = vunpack.c.l.b16 %v62
    %v149 = vunpack.c.h.b16 %v62
    %v150 = vunpack.c.l.b16 %v63
    %v151 = vunpack.c.h.b16 %v63
    %v152 = vunpack.c.l.b16 %v64
    %v153 = vunpack.c.h.b16 %v64
    %v154 = vunpack.c.l.b16 %v65
    %v155 = vunpack.c.h.b16 %v65
    %v156 = vunpack.c.l.b16 %v66
    %v157 = vunpack.c.h.b16 %v66
    %v158 = vunpack.c.l.b16 %v67
    %v159 = vunpack.c.h.b16 %v67
    %v160 = vunpack.c.l.b16 %v68
    %v161 = vunpack.c.h.b16 %v68
    %v162 = vunpack.c.l.b16 %v69
    %v163 = vunpack.c.h.b16 %v69
    %v164 = vunpack.c.l.b16 %v70
    %v165 = vunpack.c.h.b16 %v70
    %v166 = vunpack.c.l.b16 %v71
    %v167 = vunpack.c.h.b16 %v71
    %v168 = vpack.c.b16 %v108, %v104
    %v169 = vpack.c.b16 %v109, %v105
    %v170 = vpack.c.b16 %v110, %v106
    %v171 = vpack.c.b16 %v111, %v107
    %v172 = vpack.c.b16 %v116, %v112
    %v173 = vpack.c.b16 %v117, %v113
    %v174 = vpack.c.b16 %v118, %v114
    %v175 = vpack.c.b16 %v119, %v115
    %v176 = vpack.c.b16 %v124, %v120
    %v177 = vpack.c.b16 %v125, %v121
    %v178 = vpack.c.b16 %v126, %v122
    %v179 = vpack.c.b16 %v127, %v123
    %v180 = vpack.c.b16 %v132, %v128
    %v181 = vpack.c.b16 %v133, %v129
    %v182 = vpack.c.b16 %v134, %v130
    %v183 = vpack.c.b16 %v135, %v131
    %v184 = vpack.c.b16 %v140, %v136
    %v185 = vpack.c.b16 %v141, %v137
    %v186 = vpack.c.b16 %v142, %v138
    %v187 = vpack.c.b16 %v143, %v139
    %v188 = vpack.c.b16 %v148, %v144
    %v189 = vpack.c.b16 %v149, %v145
    %v190 = vpack.c.b16 %v150, %v146
    %v191 = vpack.c.b16 %v151, %v147
    %v192 = vpack.c.b16 %v156, %v152
    %v193 = vpack.c.b16 %v157, %v153
    %v194 = vpack.c.b16 %v158, %v154
    %v195 = vpack.c.b16 %v159, %v155
    %v196 = vpack.c.b16 %v164, %v160
    %v197 = vpack.c.b16 %v165, %v161
    %v198 = vpack.c.b16 %v166, %v162
    %v199 = vpack.c.b16 %v167, %v163
    %232 = vmatprep.subr.bf16.mxu0 %v169
    %233 = vmatpush1.bf16.msra.mxu0 %v168
    %234 = vmatprep.subr.bf16.mxu0 %v173
    %235 = vmatpush1.bf16.msra.mxu0 %v172
    %236 = vmatprep.subr.bf16.mxu0 %v177
    %237 = vmatpush1.bf16.msra.mxu0 %v176
    %238 = vmatprep.subr.bf16.mxu0 %v181
    %239 = vmatpush1.bf16.msra.mxu0 %v180
    %240 = vmatprep.subr.bf16.mxu0 %v185
    %241 = vmatpush1.bf16.msra.mxu0 %v184
    %242 = vmatprep.subr.bf16.mxu0 %v189
    %243 = vmatpush1.bf16.msra.mxu0 %v188
    %244 = vmatprep.subr.bf16.mxu0 %v193
    %245 = vmatpush1.bf16.msra.mxu0 %v192
    %246 = vmatprep.subr.bf16.mxu0 %v197
    %247 = vmatpush1.bf16.msra.mxu0 %v196
    %248 = vmatprep.subr.bf16.mxu0 0
    %249 = vmatpush1.bf16.msra.mxu0 0
    %250 = vmatprep.subr.bf16.mxu0 0
    %251 = vmatpush1.bf16.msra.mxu0 0
    %252 = vmatprep.subr.bf16.mxu0 0
    %253 = vmatpush1.bf16.msra.mxu0 0
    %254 = vmatprep.subr.bf16.mxu0 0
    %255 = vmatpush1.bf16.msra.mxu0 0
    %256 = vmatprep.subr.bf16.mxu0 0
    %257 = vmatpush1.bf16.msra.mxu0 0
    %258 = vmatprep.subr.bf16.mxu0 0
    %259 = vmatpush1.bf16.msra.mxu0 0
    %260 = vmatprep.subr.bf16.mxu0 0
    %261 = vmatpush1.bf16.msra.mxu0 0
    %262 = vmatprep.subr.bf16.mxu0 0
    %263 = vmatpush1.bf16.msra.mxu0 0
    %264 = vmatprep.mubr.bf16.mxu0 0
    %265 = vmatmul.mubr.bf16.gmra.mrb[0].mxu0 %v39
    %v266 = vpop.f32.mrb[0].mxu0
    %v267 = vadd.f32 0.0, %v266
    %v268 = vpop.f32.mrb[0].mxu0
    %v269 = vadd.f32 0.0, %v268
    %v270 = vpop.f32.mrb[0].mxu0
    %v271 = vpop.f32.mrb[0].mxu0
    %272 = vdwg.mxu0
    %273 = vmatprep.subr.bf16.mxu0 %v171
    %274 = vmatpush1.bf16.msra.mxu0 %v170
    %275 = vmatprep.subr.bf16.mxu0 %v175
    %276 = vmatpush1.bf16.msra.mxu0 %v174
    %277 = vmatprep.subr.bf16.mxu0 %v179
    %278 = vmatpush1.bf16.msra.mxu0 %v178
    %279 = vmatprep.subr.bf16.mxu0 %v183
    %280 = vmatpush1.bf16.msra.mxu0 %v182
    %281 = vmatprep.subr.bf16.mxu0 %v187
    %282 = vmatpush1.bf16.msra.mxu0 %v186
    %283 = vmatprep.subr.bf16.mxu0 %v191
    %284 = vmatpush1.bf16.msra.mxu0 %v190
    %285 = vmatprep.subr.bf16.mxu0 %v195
    %286 = vmatpush1.bf16.msra.mxu0 %v194
    %287 = vmatprep.subr.bf16.mxu0 %v199
    %288 = vmatpush1.bf16.msra.mxu0 %v198
    %289 = vmatprep.subr.bf16.mxu0 0
    %290 = vmatpush1.bf16.msra.mxu0 0
    %291 = vmatprep.subr.bf16.mxu0 0
    %292 = vmatpush1.bf16.msra.mxu0 0
    %293 = vmatprep.subr.bf16.mxu0 0
    %294 = vmatpush1.bf16.msra.mxu0 0
    %295 = vmatprep.subr.bf16.mxu0 0
    %296 = vmatpush1.bf16.msra.mxu0 0
    %297 = vmatprep.subr.bf16.mxu0 0
    %298 = vmatpush1.bf16.msra.mxu0 0
    %299 = vmatprep.subr.bf16.mxu0 0
    %300 = vmatpush1.bf16.msra.mxu0 0
    %301 = vmatprep.subr.bf16.mxu0 0
    %302 = vmatpush1.bf16.msra.mxu0 0
    %303 = vmatprep.subr.bf16.mxu0 0
    %304 = vmatpush1.bf16.msra.mxu0 0
    %305 = vmatprep.mubr.bf16.mxu0 0
    %306 = vmatmul.mubr.bf16.gmra.mrb[0].mxu0 %v39
    %v307 = vpop.f32.mrb[0].mxu0
    %v308 = vadd.f32 0.0, %v307
    %v309 = vpop.f32.mrb[0].mxu0
    %v310 = vadd.f32 0.0, %v309
    %v311 = vpop.f32.mrb[0].mxu0
    %v312 = vpop.f32.mrb[0].mxu0
    %313 = vdwg.mxu0
    %v314 = vadd.f32 %v35, %v267
    %v315 = vadd.f32 %v36, %v269
    %v316 = vadd.f32 %v37, %v308
    %v317 = vadd.f32 %v38, %v310
    %v318 = vxor.u32 %v314, 2147483648
    %v319 = vmul.f32 %v318, 1.442695
    %v320 = vpow.pop %v319
    %v321 = vadd.f32 %v320, 1.0
    %v322 = vrcp.pop %v321
    %v323 = vmul.f32 1.0, %v322
    %v324 = vxor.u32 %v315, 2147483648
    %v325 = vmul.f32 %v324, 1.442695
    %v326 = vpow.pop %v325
    %v327 = vadd.f32 %v326, 1.0
    %v328 = vrcp.pop %v327
    %v329 = vmul.f32 1.0, %v328
    %v330 = vtanh.pop %v316
    %v331 = vxor.u32 %v317, 2147483648
    %v332 = vmul.f32 %v331, 1.442695
    %v333 = vpow.pop %v332
    %v334 = vadd.f32 %v333, 1.0
    %v335 = vrcp.pop %v334
    %v336 = vmul.f32 1.0, %v335
    %v337 = vmul.f32 %v329, %v32
    %v338 = vmul.f32 %v323, %v330
    %v339 = vadd.f32 %v337, %v338
    %v340 = vtanh.pop %v339
    %v341 = vmul.f32 %v336, %v340
    %v342 = vpack.c.bf16 %v341, %v341
    %343 = vst [vmem:[%s4] sm:$0xf] %v342
    %s344 = scalar_lea.vmem %s0, 16
    %v345 = vld [vmem:[%s344] sm:$0xff]
    %v346 = vld [vmem:[%s344 + $0x8] sm:$0xff]
    %v347 = vunpack.c.l.bf16 %v345
    %v348 = vunpack.c.h.bf16 %v345
    %v349 = vunpack.c.l.bf16 %v346
    %v350 = vunpack.c.h.bf16 %v346
    %v351 = vld [vmem:[%s1] sm:$0xff]
    %v352 = vld [vmem:[%s1 + $0x8] sm:$0xff]
    %v353 = vld [vmem:[%s1 + $0x10] sm:$0xff]
    %v354 = vld [vmem:[%s1 + $0x18] sm:$0xff]
    %v355 = vld [vmem:[%s1 + $0x20] sm:$0xff]
    %v356 = vld [vmem:[%s1 + $0x28] sm:$0xff]
    %v357 = vld [vmem:[%s1 + $0x30] sm:$0xff]
    %v358 = vld [vmem:[%s1 + $0x38] sm:$0xff]
    %v359 = vld [vmem:[%s1 + $0x40] sm:$0xff]
    %v360 = vld [vmem:[%s1 + $0x48] sm:$0xff]
    %v361 = vld [vmem:[%s1 + $0x50] sm:$0xff]
    %v362 = vld [vmem:[%s1 + $0x58] sm:$0xff]
    %v363 = vld [vmem:[%s1 + $0x60] sm:$0xff]
    %v364 = vld [vmem:[%s1 + $0x68] sm:$0xff]
    %v365 = vld [vmem:[%s1 + $0x70] sm:$0xff]
    %v366 = vld [vmem:[%s1 + $0x78] sm:$0xff]
    %v367 = vld [vmem:[%s1 + $0x80] sm:$0xff]
    %v368 = vld [vmem:[%s1 + $0x88] sm:$0xff]
    %v369 = vld [vmem:[%s1 + $0x90] sm:$0xff]
    %v370 = vld [vmem:[%s1 + $0x98] sm:$0xff]
    %v371 = vld [vmem:[%s1 + $0xa0] sm:$0xff]
    %v372 = vld [vmem:[%s1 + $0xa8] sm:$0xff]
    %v373 = vld [vmem:[%s1 + $0xb0] sm:$0xff]
    %v374 = vld [vmem:[%s1 + $0xb8] sm:$0xff]
    %v375 = vld [vmem:[%s1 + $0xc0] sm:$0xff]
    %v376 = vld [vmem:[%s1 + $0xc8] sm:$0xff]
    %v377 = vld [vmem:[%s1 + $0xd0] sm:$0xff]
    %v378 = vld [vmem:[%s1 + $0xd8] sm:$0xff]
    %v379 = vld [vmem:[%s1 + $0xe0] sm:$0xff]
    %v380 = vld [vmem:[%s1 + $0xe8] sm:$0xff]
    %v381 = vld [vmem:[%s1 + $0xf0] sm:$0xff]
    %v382 = vld [vmem:[%s1 + $0xf8] sm:$0xff]
    %v415 = vunpack.c.l.b16 %v351
    %v416 = vunpack.c.h.b16 %v351
    %v417 = vunpack.c.l.b16 %v352
    %v418 = vunpack.c.h.b16 %v352
    %v419 = vunpack.c.l.b16 %v353
    %v420 = vunpack.c.h.b16 %v353
    %v421 = vunpack.c.l.b16 %v354
    %v422 = vunpack.c.h.b16 %v354
    %v423 = vunpack.c.l.b16 %v355
    %v424 = vunpack.c.h.b16 %v355
    %v425 = vunpack.c.l.b16 %v356
    %v426 = vunpack.c.h.b16 %v356
    %v427 = vunpack.c.l.b16 %v357
    %v428 = vunpack.c.h.b16 %v357
    %v429 = vunpack.c.l.b16 %v358
    %v430 = vunpack.c.h.b16 %v358
    %v431 = vunpack.c.l.b16 %v359
    %v432 = vunpack.c.h.b16 %v359
    %v433 = vunpack.c.l.b16 %v360
    %v434 = vunpack.c.h.b16 %v360
    %v435 = vunpack.c.l.b16 %v361
    %v436 = vunpack.c.h.b16 %v361
    %v437 = vunpack.c.l.b16 %v362
    %v438 = vunpack.c.h.b16 %v362
    %v439 = vunpack.c.l.b16 %v363
    %v440 = vunpack.c.h.b16 %v363
    %v441 = vunpack.c.l.b16 %v364
    %v442 = vunpack.c.h.b16 %v364
    %v443 = vunpack.c.l.b16 %v365
    %v444 = vunpack.c.h.b16 %v365
    %v445 = vunpack.c.l.b16 %v366
    %v446 = vunpack.c.h.b16 %v366
    %v447 = vunpack.c.l.b16 %v367
    %v448 = vunpack.c.h.b16 %v367
    %v449 = vunpack.c.l.b16 %v368
    %v450 = vunpack.c.h.b16 %v368
    %v451 = vunpack.c.l.b16 %v369
    %v452 = vunpack.c.h.b16 %v369
    %v453 = vunpack.c.l.b16 %v370
    %v454 = vunpack.c.h.b16 %v370
    %v455 = vunpack.c.l.b16 %v371
    %v456 = vunpack.c.h.b16 %v371
    %v457 = vunpack.c.l.b16 %v372
    %v458 = vunpack.c.h.b16 %v372
    %v459 = vunpack.c.l.b16 %v373
    %v460 = vunpack.c.h.b16 %v373
    %v461 = vunpack.c.l.b16 %v374
    %v462 = vunpack.c.h.b16 %v374
    %v463 = vunpack.c.l.b16 %v375
    %v464 = vunpack.c.h.b16 %v375
    %v465 = vunpack.c.l.b16 %v376
    %v466 = vunpack.c.h.b16 %v376
    %v467 = vunpack.c.l.b16 %v377
    %v468 = vunpack.c.h.b16 %v377
    %v469 = vunpack.c.l.b16 %v378
    %v470 = vunpack.c.h.b16 %v378
    %v471 = vunpack.c.l.b16 %v379
    %v472 = vunpack.c.h.b16 %v379
    %v473 = vunpack.c.l.b16 %v380
    %v474 = vunpack.c.h.b16 %v380
    %v475 = vunpack.c.l.b16 %v381
    %v476 = vunpack.c.h.b16 %v381
    %v477 = vunpack.c.l.b16 %v382
    %v478 = vunpack.c.h.b16 %v382
    %v479 = vpack.c.b16 %v419, %v415
    %v480 = vpack.c.b16 %v420, %v416
    %v481 = vpack.c.b16 %v421, %v417
    %v482 = vpack.c.b16 %v422, %v418
    %v483 = vpack.c.b16 %v427, %v423
    %v484 = vpack.c.b16 %v428, %v424
    %v485 = vpack.c.b16 %v429, %v425
    %v486 = vpack.c.b16 %v430, %v426
    %v487 = vpack.c.b16 %v435, %v431
    %v488 = vpack.c.b16 %v436, %v432
    %v489 = vpack.c.b16 %v437, %v433
    %v490 = vpack.c.b16 %v438, %v434
    %v491 = vpack.c.b16 %v443, %v439
    %v492 = vpack.c.b16 %v444, %v440
    %v493 = vpack.c.b16 %v445, %v441
    %v494 = vpack.c.b16 %v446, %v442
    %v495 = vpack.c.b16 %v451, %v447
    %v496 = vpack.c.b16 %v452, %v448
    %v497 = vpack.c.b16 %v453, %v449
    %v498 = vpack.c.b16 %v454, %v450
    %v499 = vpack.c.b16 %v459, %v455
    %v500 = vpack.c.b16 %v460, %v456
    %v501 = vpack.c.b16 %v461, %v457
    %v502 = vpack.c.b16 %v462, %v458
    %v503 = vpack.c.b16 %v467, %v463
    %v504 = vpack.c.b16 %v468, %v464
    %v505 = vpack.c.b16 %v469, %v465
    %v506 = vpack.c.b16 %v470, %v466
    %v507 = vpack.c.b16 %v475, %v471
    %v508 = vpack.c.b16 %v476, %v472
    %v509 = vpack.c.b16 %v477, %v473
    %v510 = vpack.c.b16 %v478, %v474
    %543 = vmatprep.subr.bf16.mxu0 %v480
    %544 = vmatpush1.bf16.msra.mxu0 %v479
    %545 = vmatprep.subr.bf16.mxu0 %v484
    %546 = vmatpush1.bf16.msra.mxu0 %v483
    %547 = vmatprep.subr.bf16.mxu0 %v488
    %548 = vmatpush1.bf16.msra.mxu0 %v487
    %549 = vmatprep.subr.bf16.mxu0 %v492
    %550 = vmatpush1.bf16.msra.mxu0 %v491
    %551 = vmatprep.subr.bf16.mxu0 %v496
    %552 = vmatpush1.bf16.msra.mxu0 %v495
    %553 = vmatprep.subr.bf16.mxu0 %v500
    %554 = vmatpush1.bf16.msra.mxu0 %v499
    %555 = vmatprep.subr.bf16.mxu0 %v504
    %556 = vmatpush1.bf16.msra.mxu0 %v503
    %557 = vmatprep.subr.bf16.mxu0 %v508
    %558 = vmatpush1.bf16.msra.mxu0 %v507
    %559 = vmatprep.subr.bf16.mxu0 0
    %560 = vmatpush1.bf16.msra.mxu0 0
    %561 = vmatprep.subr.bf16.mxu0 0
    %562 = vmatpush1.bf16.msra.mxu0 0
    %563 = vmatprep.subr.bf16.mxu0 0
    %564 = vmatpush1.bf16.msra.mxu0 0
    %565 = vmatprep.subr.bf16.mxu0 0
    %566 = vmatpush1.bf16.msra.mxu0 0
    %567 = vmatprep.subr.bf16.mxu0 0
    %568 = vmatpush1.bf16.msra.mxu0 0
    %569 = vmatprep.subr.bf16.mxu0 0
    %570 = vmatpush1.bf16.msra.mxu0 0
    %571 = vmatprep.subr.bf16.mxu0 0
    %572 = vmatpush1.bf16.msra.mxu0 0
    %573 = vmatprep.subr.bf16.mxu0 0
    %574 = vmatpush1.bf16.msra.mxu0 0
    %575 = vmatprep.mubr.bf16.mxu0 0
    %576 = vmatmul.mubr.bf16.gmra.mrb[0].mxu0 %v342
    %v577 = vpop.f32.mrb[0].mxu0
    %v578 = vadd.f32 0.0, %v577
    %v579 = vpop.f32.mrb[0].mxu0
    %v580 = vadd.f32 0.0, %v579
    %v581 = vpop.f32.mrb[0].mxu0
    %v582 = vpop.f32.mrb[0].mxu0
    %583 = vdwg.mxu0
    %584 = vmatprep.subr.bf16.mxu0 %v482
    %585 = vmatpush1.bf16.msra.mxu0 %v481
    %586 = vmatprep.subr.bf16.mxu0 %v486
    %587 = vmatpush1.bf16.msra.mxu0 %v485
    %588 = vmatprep.subr.bf16.mxu0 %v490
    %589 = vmatpush1.bf16.msra.mxu0 %v489
    %590 = vmatprep.subr.bf16.mxu0 %v494
    %591 = vmatpush1.bf16.msra.mxu0 %v493
    %592 = vmatprep.subr.bf16.mxu0 %v498
    %593 = vmatpush1.bf16.msra.mxu0 %v497
    %594 = vmatprep.subr.bf16.mxu0 %v502
    %595 = vmatpush1.bf16.msra.mxu0 %v501
    %596 = vmatprep.subr.bf16.mxu0 %v506
    %597 = vmatpush1.bf16.msra.mxu0 %v505
    %598 = vmatprep.subr.bf16.mxu0 %v510
    %599 = vmatpush1.bf16.msra.mxu0 %v509
    %600 = vmatprep.subr.bf16.mxu0 0
    %601 = vmatpush1.bf16.msra.mxu0 0
    %602 = vmatprep.subr.bf16.mxu0 0
    %603 = vmatpush1.bf16.msra.mxu0 0
    %604 = vmatprep.subr.bf16.mxu0 0
    %605 = vmatpush1.bf16.msra.mxu0 0
    %606 = vmatprep.subr.bf16.mxu0 0
    %607 = vmatpush1.bf16.msra.mxu0 0
    %608 = vmatprep.subr.bf16.mxu0 0
    %609 = vmatpush1.bf16.msra.mxu0 0
    %610 = vmatprep.subr.bf16.mxu0 0
    %611 = vmatpush1.bf16.msra.mxu0 0
    %612 = vmatprep.subr.bf16.mxu0 0
    %613 = vmatpush1.bf16.msra.mxu0 0
    %614 = vmatprep.subr.bf16.mxu0 0
    %615 = vmatpush1.bf16.msra.mxu0 0
    %616 = vmatprep.mubr.bf16.mxu0 0
    %617 = vmatmul.mubr.bf16.gmra.mrb[0].mxu0 %v342
    %v618 = vpop.f32.mrb[0].mxu0
    %v619 = vadd.f32 0.0, %v618
    %v620 = vpop.f32.mrb[0].mxu0
    %v621 = vadd.f32 0.0, %v620
    %v622 = vpop.f32.mrb[0].mxu0
    %v623 = vpop.f32.mrb[0].mxu0
    %624 = vdwg.mxu0
    %v625 = vadd.f32 %v347, %v578
    %v626 = vadd.f32 %v348, %v580
    %v627 = vadd.f32 %v349, %v619
    %v628 = vadd.f32 %v350, %v621
    %v629 = vxor.u32 %v625, 2147483648
    %v630 = vmul.f32 %v629, 1.442695
    %v631 = vpow.pop %v630
    %v632 = vadd.f32 %v631, 1.0
    %v633 = vrcp.pop %v632
    %v634 = vmul.f32 1.0, %v633
    %v635 = vxor.u32 %v626, 2147483648
    %v636 = vmul.f32 %v635, 1.442695
    %v637 = vpow.pop %v636
    %v638 = vadd.f32 %v637, 1.0
    %v639 = vrcp.pop %v638
    %v640 = vmul.f32 1.0, %v639
    %v641 = vtanh.pop %v627
    %v642 = vxor.u32 %v628, 2147483648
    %v643 = vmul.f32 %v642, 1.442695
    %v644 = vpow.pop %v643
    %v645 = vadd.f32 %v644, 1.0
    %v646 = vrcp.pop %v645
    %v647 = vmul.f32 1.0, %v646
    %v648 = vmul.f32 %v640, %v339
    %v649 = vmul.f32 %v634, %v641
    %v650 = vadd.f32 %v648, %v649
    %v651 = vtanh.pop %v650
    %v652 = vmul.f32 %v647, %v651
    %v653 = vpack.c.bf16 %v652, %v652
    %s654 = scalar_lea.vmem %s4, 4
    %655 = vst [vmem:[%s654] sm:$0xf] %v653
    %s656 = scalar_lea.vmem %s0, 32
    %v657 = vld [vmem:[%s656] sm:$0xff]
    %v658 = vld [vmem:[%s656 + $0x8] sm:$0xff]
    %v659 = vunpack.c.l.bf16 %v657
    %v660 = vunpack.c.h.bf16 %v657
    %v661 = vunpack.c.l.bf16 %v658
    %v662 = vunpack.c.h.bf16 %v658
    %v663 = vld [vmem:[%s1] sm:$0xff]
    %v664 = vld [vmem:[%s1 + $0x8] sm:$0xff]
    %v665 = vld [vmem:[%s1 + $0x10] sm:$0xff]
    %v666 = vld [vmem:[%s1 + $0x18] sm:$0xff]
    %v667 = vld [vmem:[%s1 + $0x20] sm:$0xff]
    %v668 = vld [vmem:[%s1 + $0x28] sm:$0xff]
    %v669 = vld [vmem:[%s1 + $0x30] sm:$0xff]
    %v670 = vld [vmem:[%s1 + $0x38] sm:$0xff]
    %v671 = vld [vmem:[%s1 + $0x40] sm:$0xff]
    %v672 = vld [vmem:[%s1 + $0x48] sm:$0xff]
    %v673 = vld [vmem:[%s1 + $0x50] sm:$0xff]
    %v674 = vld [vmem:[%s1 + $0x58] sm:$0xff]
    %v675 = vld [vmem:[%s1 + $0x60] sm:$0xff]
    %v676 = vld [vmem:[%s1 + $0x68] sm:$0xff]
    %v677 = vld [vmem:[%s1 + $0x70] sm:$0xff]
    %v678 = vld [vmem:[%s1 + $0x78] sm:$0xff]
    %v679 = vld [vmem:[%s1 + $0x80] sm:$0xff]
    %v680 = vld [vmem:[%s1 + $0x88] sm:$0xff]
    %v681 = vld [vmem:[%s1 + $0x90] sm:$0xff]
    %v682 = vld [vmem:[%s1 + $0x98] sm:$0xff]
    %v683 = vld [vmem:[%s1 + $0xa0] sm:$0xff]
    %v684 = vld [vmem:[%s1 + $0xa8] sm:$0xff]
    %v685 = vld [vmem:[%s1 + $0xb0] sm:$0xff]
    %v686 = vld [vmem:[%s1 + $0xb8] sm:$0xff]
    %v687 = vld [vmem:[%s1 + $0xc0] sm:$0xff]
    %v688 = vld [vmem:[%s1 + $0xc8] sm:$0xff]
    %v689 = vld [vmem:[%s1 + $0xd0] sm:$0xff]
    %v690 = vld [vmem:[%s1 + $0xd8] sm:$0xff]
    %v691 = vld [vmem:[%s1 + $0xe0] sm:$0xff]
    %v692 = vld [vmem:[%s1 + $0xe8] sm:$0xff]
    %v693 = vld [vmem:[%s1 + $0xf0] sm:$0xff]
    %v694 = vld [vmem:[%s1 + $0xf8] sm:$0xff]
    %v727 = vunpack.c.l.b16 %v663
    %v728 = vunpack.c.h.b16 %v663
    %v729 = vunpack.c.l.b16 %v664
    %v730 = vunpack.c.h.b16 %v664
    %v731 = vunpack.c.l.b16 %v665
    %v732 = vunpack.c.h.b16 %v665
    %v733 = vunpack.c.l.b16 %v666
    %v734 = vunpack.c.h.b16 %v666
    %v735 = vunpack.c.l.b16 %v667
    %v736 = vunpack.c.h.b16 %v667
    %v737 = vunpack.c.l.b16 %v668
    %v738 = vunpack.c.h.b16 %v668
    %v739 = vunpack.c.l.b16 %v669
    %v740 = vunpack.c.h.b16 %v669
    %v741 = vunpack.c.l.b16 %v670
    %v742 = vunpack.c.h.b16 %v670
    %v743 = vunpack.c.l.b16 %v671
    %v744 = vunpack.c.h.b16 %v671
    %v745 = vunpack.c.l.b16 %v672
    %v746 = vunpack.c.h.b16 %v672
    %v747 = vunpack.c.l.b16 %v673
    %v748 = vunpack.c.h.b16 %v673
    %v749 = vunpack.c.l.b16 %v674
    %v750 = vunpack.c.h.b16 %v674
    %v751 = vunpack.c.l.b16 %v675
    %v752 = vunpack.c.h.b16 %v675
    %v753 = vunpack.c.l.b16 %v676
    %v754 = vunpack.c.h.b16 %v676
    %v755 = vunpack.c.l.b16 %v677
    %v756 = vunpack.c.h.b16 %v677
    %v757 = vunpack.c.l.b16 %v678
    %v758 = vunpack.c.h.b16 %v678
    %v759 = vunpack.c.l.b16 %v679
    %v760 = vunpack.c.h.b16 %v679
    %v761 = vunpack.c.l.b16 %v680
    %v762 = vunpack.c.h.b16 %v680
    %v763 = vunpack.c.l.b16 %v681
    %v764 = vunpack.c.h.b16 %v681
    %v765 = vunpack.c.l.b16 %v682
    %v766 = vunpack.c.h.b16 %v682
    %v767 = vunpack.c.l.b16 %v683
    %v768 = vunpack.c.h.b16 %v683
    %v769 = vunpack.c.l.b16 %v684
    %v770 = vunpack.c.h.b16 %v684
    %v771 = vunpack.c.l.b16 %v685
    %v772 = vunpack.c.h.b16 %v685
    %v773 = vunpack.c.l.b16 %v686
    %v774 = vunpack.c.h.b16 %v686
    %v775 = vunpack.c.l.b16 %v687
    %v776 = vunpack.c.h.b16 %v687
    %v777 = vunpack.c.l.b16 %v688
    %v778 = vunpack.c.h.b16 %v688
    %v779 = vunpack.c.l.b16 %v689
    %v780 = vunpack.c.h.b16 %v689
    %v781 = vunpack.c.l.b16 %v690
    %v782 = vunpack.c.h.b16 %v690
    %v783 = vunpack.c.l.b16 %v691
    %v784 = vunpack.c.h.b16 %v691
    %v785 = vunpack.c.l.b16 %v692
    %v786 = vunpack.c.h.b16 %v692
    %v787 = vunpack.c.l.b16 %v693
    %v788 = vunpack.c.h.b16 %v693
    %v789 = vunpack.c.l.b16 %v694
    %v790 = vunpack.c.h.b16 %v694
    %v791 = vpack.c.b16 %v731, %v727
    %v792 = vpack.c.b16 %v732, %v728
    %v793 = vpack.c.b16 %v733, %v729
    %v794 = vpack.c.b16 %v734, %v730
    %v795 = vpack.c.b16 %v739, %v735
    %v796 = vpack.c.b16 %v740, %v736
    %v797 = vpack.c.b16 %v741, %v737
    %v798 = vpack.c.b16 %v742, %v738
    %v799 = vpack.c.b16 %v747, %v743
    %v800 = vpack.c.b16 %v748, %v744
    %v801 = vpack.c.b16 %v749, %v745
    %v802 = vpack.c.b16 %v750, %v746
    %v803 = vpack.c.b16 %v755, %v751
    %v804 = vpack.c.b16 %v756, %v752
    %v805 = vpack.c.b16 %v757, %v753
    %v806 = vpack.c.b16 %v758, %v754
    %v807 = vpack.c.b16 %v763, %v759
    %v808 = vpack.c.b16 %v764, %v760
    %v809 = vpack.c.b16 %v765, %v761
    %v810 = vpack.c.b16 %v766, %v762
    %v811 = vpack.c.b16 %v771, %v767
    %v812 = vpack.c.b16 %v772, %v768
    %v813 = vpack.c.b16 %v773, %v769
    %v814 = vpack.c.b16 %v774, %v770
    %v815 = vpack.c.b16 %v779, %v775
    %v816 = vpack.c.b16 %v780, %v776
    %v817 = vpack.c.b16 %v781, %v777
    %v818 = vpack.c.b16 %v782, %v778
    %v819 = vpack.c.b16 %v787, %v783
    %v820 = vpack.c.b16 %v788, %v784
    %v821 = vpack.c.b16 %v789, %v785
    %v822 = vpack.c.b16 %v790, %v786
    %855 = vmatprep.subr.bf16.mxu0 %v792
    %856 = vmatpush1.bf16.msra.mxu0 %v791
    %857 = vmatprep.subr.bf16.mxu0 %v796
    %858 = vmatpush1.bf16.msra.mxu0 %v795
    %859 = vmatprep.subr.bf16.mxu0 %v800
    %860 = vmatpush1.bf16.msra.mxu0 %v799
    %861 = vmatprep.subr.bf16.mxu0 %v804
    %862 = vmatpush1.bf16.msra.mxu0 %v803
    %863 = vmatprep.subr.bf16.mxu0 %v808
    %864 = vmatpush1.bf16.msra.mxu0 %v807
    %865 = vmatprep.subr.bf16.mxu0 %v812
    %866 = vmatpush1.bf16.msra.mxu0 %v811
    %867 = vmatprep.subr.bf16.mxu0 %v816
    %868 = vmatpush1.bf16.msra.mxu0 %v815
    %869 = vmatprep.subr.bf16.mxu0 %v820
    %870 = vmatpush1.bf16.msra.mxu0 %v819
    %871 = vmatprep.subr.bf16.mxu0 0
    %872 = vmatpush1.bf16.msra.mxu0 0
    %873 = vmatprep.subr.bf16.mxu0 0
    %874 = vmatpush1.bf16.msra.mxu0 0
    %875 = vmatprep.subr.bf16.mxu0 0
    %876 = vmatpush1.bf16.msra.mxu0 0
    %877 = vmatprep.subr.bf16.mxu0 0
    %878 = vmatpush1.bf16.msra.mxu0 0
    %879 = vmatprep.subr.bf16.mxu0 0
    %880 = vmatpush1.bf16.msra.mxu0 0
    %881 = vmatprep.subr.bf16.mxu0 0
    %882 = vmatpush1.bf16.msra.mxu0 0
    %883 = vmatprep.subr.bf16.mxu0 0
    %884 = vmatpush1.bf16.msra.mxu0 0
    %885 = vmatprep.subr.bf16.mxu0 0
    %886 = vmatpush1.bf16.msra.mxu0 0
    %887 = vmatprep.mubr.bf16.mxu0 0
    %888 = vmatmul.mubr.bf16.gmra.mrb[0].mxu0 %v653
    %v889 = vpop.f32.mrb[0].mxu0
    %v890 = vadd.f32 0.0, %v889
    %v891 = vpop.f32.mrb[0].mxu0
    %v892 = vadd.f32 0.0, %v891
    %v893 = vpop.f32.mrb[0].mxu0
    %v894 = vpop.f32.mrb[0].mxu0
    %895 = vdwg.mxu0
    %896 = vmatprep.subr.bf16.mxu0 %v794
    %897 = vmatpush1.bf16.msra.mxu0 %v793
    %898 = vmatprep.subr.bf16.mxu0 %v798
    %899 = vmatpush1.bf16.msra.mxu0 %v797
    %900 = vmatprep.subr.bf16.mxu0 %v802
    %901 = vmatpush1.bf16.msra.mxu0 %v801
    %902 = vmatprep.subr.bf16.mxu0 %v806
    %903 = vmatpush1.bf16.msra.mxu0 %v805
    %904 = vmatprep.subr.bf16.mxu0 %v810
    %905 = vmatpush1.bf16.msra.mxu0 %v809
    %906 = vmatprep.subr.bf16.mxu0 %v814
    %907 = vmatpush1.bf16.msra.mxu0 %v813
    %908 = vmatprep.subr.bf16.mxu0 %v818
    %909 = vmatpush1.bf16.msra.mxu0 %v817
    %910 = vmatprep.subr.bf16.mxu0 %v822
    %911 = vmatpush1.bf16.msra.mxu0 %v821
    %912 = vmatprep.subr.bf16.mxu0 0
    %913 = vmatpush1.bf16.msra.mxu0 0
    %914 = vmatprep.subr.bf16.mxu0 0
    %915 = vmatpush1.bf16.msra.mxu0 0
    %916 = vmatprep.subr.bf16.mxu0 0
    %917 = vmatpush1.bf16.msra.mxu0 0
    %918 = vmatprep.subr.bf16.mxu0 0
    %919 = vmatpush1.bf16.msra.mxu0 0
    %920 = vmatprep.subr.bf16.mxu0 0
    %921 = vmatpush1.bf16.msra.mxu0 0
    %922 = vmatprep.subr.bf16.mxu0 0
    %923 = vmatpush1.bf16.msra.mxu0 0
    %924 = vmatprep.subr.bf16.mxu0 0
    %925 = vmatpush1.bf16.msra.mxu0 0
    %926 = vmatprep.subr.bf16.mxu0 0
    %927 = vmatpush1.bf16.msra.mxu0 0
    %928 = vmatprep.mubr.bf16.mxu0 0
    %929 = vmatmul.mubr.bf16.gmra.mrb[0].mxu0 %v653
    %v930 = vpop.f32.mrb[0].mxu0
    %v931 = vadd.f32 0.0, %v930
    %v932 = vpop.f32.mrb[0].mxu0
    %v933 = vadd.f32 0.0, %v932
    %v934 = vpop.f32.mrb[0].mxu0
    %v935 = vpop.f32.mrb[0].mxu0
    %936 = vdwg.mxu0
    %v937 = vadd.f32 %v659, %v890
    %v938 = vadd.f32 %v660, %v892
    %v939 = vadd.f32 %v661, %v931
    %v940 = vadd.f32 %v662, %v933
    %v941 = vxor.u32 %v937, 2147483648
    %v942 = vmul.f32 %v941, 1.442695
    %v943 = vpow.pop %v942
    %v944 = vadd.f32 %v943, 1.0
    %v945 = vrcp.pop %v944
    %v946 = vmul.f32 1.0, %v945
    %v947 = vxor.u32 %v938, 2147483648
    %v948 = vmul.f32 %v947, 1.442695
    %v949 = vpow.pop %v948
    %v950 = vadd.f32 %v949, 1.0
    %v951 = vrcp.pop %v950
    %v952 = vmul.f32 1.0, %v951
    %v953 = vtanh.pop %v939
    %v954 = vxor.u32 %v940, 2147483648
    %v955 = vmul.f32 %v954, 1.442695
    %v956 = vpow.pop %v955
    %v957 = vadd.f32 %v956, 1.0
    %v958 = vrcp.pop %v957
    %v959 = vmul.f32 1.0, %v958
    %v960 = vmul.f32 %v952, %v650
    %v961 = vmul.f32 %v946, %v953
    %v962 = vadd.f32 %v960, %v961
    %v963 = vtanh.pop %v962
    %v964 = vmul.f32 %v959, %v963
    %v965 = vpack.c.bf16 %v964, %v964
    %s966 = scalar_lea.vmem %s4, 8
    %967 = vst [vmem:[%s966] sm:$0xf] %v965
    %s968 = scalar_lea.vmem %s0, 48
    %v969 = vld [vmem:[%s968] sm:$0xff]
    %v970 = vld [vmem:[%s968 + $0x8] sm:$0xff]
    %v971 = vunpack.c.l.bf16 %v969
    %v972 = vunpack.c.h.bf16 %v969
    %v973 = vunpack.c.l.bf16 %v970
    %v974 = vunpack.c.h.bf16 %v970
    %v975 = vld [vmem:[%s1] sm:$0xff]
    %v976 = vld [vmem:[%s1 + $0x8] sm:$0xff]
    %v977 = vld [vmem:[%s1 + $0x10] sm:$0xff]
    %v978 = vld [vmem:[%s1 + $0x18] sm:$0xff]
    %v979 = vld [vmem:[%s1 + $0x20] sm:$0xff]
    %v980 = vld [vmem:[%s1 + $0x28] sm:$0xff]
    %v981 = vld [vmem:[%s1 + $0x30] sm:$0xff]
    %v982 = vld [vmem:[%s1 + $0x38] sm:$0xff]
    %v983 = vld [vmem:[%s1 + $0x40] sm:$0xff]
    %v984 = vld [vmem:[%s1 + $0x48] sm:$0xff]
    %v985 = vld [vmem:[%s1 + $0x50] sm:$0xff]
    %v986 = vld [vmem:[%s1 + $0x58] sm:$0xff]
    %v987 = vld [vmem:[%s1 + $0x60] sm:$0xff]
    %v988 = vld [vmem:[%s1 + $0x68] sm:$0xff]
    %v989 = vld [vmem:[%s1 + $0x70] sm:$0xff]
    %v990 = vld [vmem:[%s1 + $0x78] sm:$0xff]
    %v991 = vld [vmem:[%s1 + $0x80] sm:$0xff]
    %v992 = vld [vmem:[%s1 + $0x88] sm:$0xff]
    %v993 = vld [vmem:[%s1 + $0x90] sm:$0xff]
    %v994 = vld [vmem:[%s1 + $0x98] sm:$0xff]
    %v995 = vld [vmem:[%s1 + $0xa0] sm:$0xff]
    %v996 = vld [vmem:[%s1 + $0xa8] sm:$0xff]
    %v997 = vld [vmem:[%s1 + $0xb0] sm:$0xff]
    %v998 = vld [vmem:[%s1 + $0xb8] sm:$0xff]
    %v999 = vld [vmem:[%s1 + $0xc0] sm:$0xff]
    %v1000 = vld [vmem:[%s1 + $0xc8] sm:$0xff]
    %v1001 = vld [vmem:[%s1 + $0xd0] sm:$0xff]
    %v1002 = vld [vmem:[%s1 + $0xd8] sm:$0xff]
    %v1003 = vld [vmem:[%s1 + $0xe0] sm:$0xff]
    %v1004 = vld [vmem:[%s1 + $0xe8] sm:$0xff]
    %v1005 = vld [vmem:[%s1 + $0xf0] sm:$0xff]
    %v1006 = vld [vmem:[%s1 + $0xf8] sm:$0xff]
    %v1039 = vunpack.c.l.b16 %v975
    %v1040 = vunpack.c.h.b16 %v975
    %v1041 = vunpack.c.l.b16 %v976
    %v1042 = vunpack.c.h.b16 %v976
    %v1043 = vunpack.c.l.b16 %v977
    %v1044 = vunpack.c.h.b16 %v977
    %v1045 = vunpack.c.l.b16 %v978
    %v1046 = vunpack.c.h.b16 %v978
    %v1047 = vunpack.c.l.b16 %v979
    %v1048 = vunpack.c.h.b16 %v979
    %v1049 = vunpack.c.l.b16 %v980
    %v1050 = vunpack.c.h.b16 %v980
    %v1051 = vunpack.c.l.b16 %v981
    %v1052 = vunpack.c.h.b16 %v981
    %v1053 = vunpack.c.l.b16 %v982
    %v1054 = vunpack.c.h.b16 %v982
    %v1055 = vunpack.c.l.b16 %v983
    %v1056 = vunpack.c.h.b16 %v983
    %v1057 = vunpack.c.l.b16 %v984
    %v1058 = vunpack.c.h.b16 %v984
    %v1059 = vunpack.c.l.b16 %v985
    %v1060 = vunpack.c.h.b16 %v985
    %v1061 = vunpack.c.l.b16 %v986
    %v1062 = vunpack.c.h.b16 %v986
    %v1063 = vunpack.c.l.b16 %v987
    %v1064 = vunpack.c.h.b16 %v987
    %v1065 = vunpack.c.l.b16 %v988
    %v1066 = vunpack.c.h.b16 %v988
    %v1067 = vunpack.c.l.b16 %v989
    %v1068 = vunpack.c.h.b16 %v989
    %v1069 = vunpack.c.l.b16 %v990
    %v1070 = vunpack.c.h.b16 %v990
    %v1071 = vunpack.c.l.b16 %v991
    %v1072 = vunpack.c.h.b16 %v991
    %v1073 = vunpack.c.l.b16 %v992
    %v1074 = vunpack.c.h.b16 %v992
    %v1075 = vunpack.c.l.b16 %v993
    %v1076 = vunpack.c.h.b16 %v993
    %v1077 = vunpack.c.l.b16 %v994
    %v1078 = vunpack.c.h.b16 %v994
    %v1079 = vunpack.c.l.b16 %v995
    %v1080 = vunpack.c.h.b16 %v995
    %v1081 = vunpack.c.l.b16 %v996
    %v1082 = vunpack.c.h.b16 %v996
    %v1083 = vunpack.c.l.b16 %v997
    %v1084 = vunpack.c.h.b16 %v997
    %v1085 = vunpack.c.l.b16 %v998
    %v1086 = vunpack.c.h.b16 %v998
    %v1087 = vunpack.c.l.b16 %v999
    %v1088 = vunpack.c.h.b16 %v999
    %v1089 = vunpack.c.l.b16 %v1000
    %v1090 = vunpack.c.h.b16 %v1000
    %v1091 = vunpack.c.l.b16 %v1001
    %v1092 = vunpack.c.h.b16 %v1001
    %v1093 = vunpack.c.l.b16 %v1002
    %v1094 = vunpack.c.h.b16 %v1002
    %v1095 = vunpack.c.l.b16 %v1003
    %v1096 = vunpack.c.h.b16 %v1003
    %v1097 = vunpack.c.l.b16 %v1004
    %v1098 = vunpack.c.h.b16 %v1004
    %v1099 = vunpack.c.l.b16 %v1005
    %v1100 = vunpack.c.h.b16 %v1005
    %v1101 = vunpack.c.l.b16 %v1006
    %v1102 = vunpack.c.h.b16 %v1006
    %v1103 = vpack.c.b16 %v1043, %v1039
    %v1104 = vpack.c.b16 %v1044, %v1040
    %v1105 = vpack.c.b16 %v1045, %v1041
    %v1106 = vpack.c.b16 %v1046, %v1042
    %v1107 = vpack.c.b16 %v1051, %v1047
    %v1108 = vpack.c.b16 %v1052, %v1048
    %v1109 = vpack.c.b16 %v1053, %v1049
    %v1110 = vpack.c.b16 %v1054, %v1050
    %v1111 = vpack.c.b16 %v1059, %v1055
    %v1112 = vpack.c.b16 %v1060, %v1056
    %v1113 = vpack.c.b16 %v1061, %v1057
    %v1114 = vpack.c.b16 %v1062, %v1058
    %v1115 = vpack.c.b16 %v1067, %v1063
    %v1116 = vpack.c.b16 %v1068, %v1064
    %v1117 = vpack.c.b16 %v1069, %v1065
    %v1118 = vpack.c.b16 %v1070, %v1066
    %v1119 = vpack.c.b16 %v1075, %v1071
    %v1120 = vpack.c.b16 %v1076, %v1072
    %v1121 = vpack.c.b16 %v1077, %v1073
    %v1122 = vpack.c.b16 %v1078, %v1074
    %v1123 = vpack.c.b16 %v1083, %v1079
    %v1124 = vpack.c.b16 %v1084, %v1080
    %v1125 = vpack.c.b16 %v1085, %v1081
    %v1126 = vpack.c.b16 %v1086, %v1082
    %v1127 = vpack.c.b16 %v1091, %v1087
    %v1128 = vpack.c.b16 %v1092, %v1088
    %v1129 = vpack.c.b16 %v1093, %v1089
    %v1130 = vpack.c.b16 %v1094, %v1090
    %v1131 = vpack.c.b16 %v1099, %v1095
    %v1132 = vpack.c.b16 %v1100, %v1096
    %v1133 = vpack.c.b16 %v1101, %v1097
    %v1134 = vpack.c.b16 %v1102, %v1098
    %1167 = vmatprep.subr.bf16.mxu0 %v1104
    %1168 = vmatpush1.bf16.msra.mxu0 %v1103
    %1169 = vmatprep.subr.bf16.mxu0 %v1108
    %1170 = vmatpush1.bf16.msra.mxu0 %v1107
    %1171 = vmatprep.subr.bf16.mxu0 %v1112
    %1172 = vmatpush1.bf16.msra.mxu0 %v1111
    %1173 = vmatprep.subr.bf16.mxu0 %v1116
    %1174 = vmatpush1.bf16.msra.mxu0 %v1115
    %1175 = vmatprep.subr.bf16.mxu0 %v1120
    %1176 = vmatpush1.bf16.msra.mxu0 %v1119
    %1177 = vmatprep.subr.bf16.mxu0 %v1124
    %1178 = vmatpush1.bf16.msra.mxu0 %v1123
    %1179 = vmatprep.subr.bf16.mxu0 %v1128
    %1180 = vmatpush1.bf16.msra.mxu0 %v1127
    %1181 = vmatprep.subr.bf16.mxu0 %v1132
    %1182 = vmatpush1.bf16.msra.mxu0 %v1131
    %1183 = vmatprep.subr.bf16.mxu0 0
    %1184 = vmatpush1.bf16.msra.mxu0 0
    %1185 = vmatprep.subr.bf16.mxu0 0
    %1186 = vmatpush1.bf16.msra.mxu0 0
    %1187 = vmatprep.subr.bf16.mxu0 0
    %1188 = vmatpush1.bf16.msra.mxu0 0
    %1189 = vmatprep.subr.bf16.mxu0 0
    %1190 = vmatpush1.bf16.msra.mxu0 0
    %1191 = vmatprep.subr.bf16.mxu0 0
    %1192 = vmatpush1.bf16.msra.mxu0 0
    %1193 = vmatprep.subr.bf16.mxu0 0
    %1194 = vmatpush1.bf16.msra.mxu0 0
    %1195 = vmatprep.subr.bf16.mxu0 0
    %1196 = vmatpush1.bf16.msra.mxu0 0
    %1197 = vmatprep.subr.bf16.mxu0 0
    %1198 = vmatpush1.bf16.msra.mxu0 0
    %1199 = vmatprep.mubr.bf16.mxu0 0
    %1200 = vmatmul.mubr.bf16.gmra.mrb[0].mxu0 %v965
    %v1201 = vpop.f32.mrb[0].mxu0
    %v1202 = vadd.f32 0.0, %v1201
    %v1203 = vpop.f32.mrb[0].mxu0
    %v1204 = vadd.f32 0.0, %v1203
    %v1205 = vpop.f32.mrb[0].mxu0
    %v1206 = vpop.f32.mrb[0].mxu0
    %1207 = vdwg.mxu0
    %1208 = vmatprep.subr.bf16.mxu0 %v1106
    %1209 = vmatpush1.bf16.msra.mxu0 %v1105
    %1210 = vmatprep.subr.bf16.mxu0 %v1110
    %1211 = vmatpush1.bf16.msra.mxu0 %v1109
    %1212 = vmatprep.subr.bf16.mxu0 %v1114
    %1213 = vmatpush1.bf16.msra.mxu0 %v1113
    %1214 = vmatprep.subr.bf16.mxu0 %v1118
    %1215 = vmatpush1.bf16.msra.mxu0 %v1117
    %1216 = vmatprep.subr.bf16.mxu0 %v1122
    %1217 = vmatpush1.bf16.msra.mxu0 %v1121
    %1218 = vmatprep.subr.bf16.mxu0 %v1126
    %1219 = vmatpush1.bf16.msra.mxu0 %v1125
    %1220 = vmatprep.subr.bf16.mxu0 %v1130
    %1221 = vmatpush1.bf16.msra.mxu0 %v1129
    %1222 = vmatprep.subr.bf16.mxu0 %v1134
    %1223 = vmatpush1.bf16.msra.mxu0 %v1133
    %1224 = vmatprep.subr.bf16.mxu0 0
    %1225 = vmatpush1.bf16.msra.mxu0 0
    %1226 = vmatprep.subr.bf16.mxu0 0
    %1227 = vmatpush1.bf16.msra.mxu0 0
    %1228 = vmatprep.subr.bf16.mxu0 0
    %1229 = vmatpush1.bf16.msra.mxu0 0
    %1230 = vmatprep.subr.bf16.mxu0 0
    %1231 = vmatpush1.bf16.msra.mxu0 0
    %1232 = vmatprep.subr.bf16.mxu0 0
    %1233 = vmatpush1.bf16.msra.mxu0 0
    %1234 = vmatprep.subr.bf16.mxu0 0
    %1235 = vmatpush1.bf16.msra.mxu0 0
    %1236 = vmatprep.subr.bf16.mxu0 0
    %1237 = vmatpush1.bf16.msra.mxu0 0
    %1238 = vmatprep.subr.bf16.mxu0 0
    %1239 = vmatpush1.bf16.msra.mxu0 0
    %1240 = vmatprep.mubr.bf16.mxu0 0
    %1241 = vmatmul.mubr.bf16.gmra.mrb[0].mxu0 %v965
    %v1242 = vpop.f32.mrb[0].mxu0
    %v1243 = vadd.f32 0.0, %v1242
    %v1244 = vpop.f32.mrb[0].mxu0
    %v1245 = vadd.f32 0.0, %v1244
    %v1246 = vpop.f32.mrb[0].mxu0
    %v1247 = vpop.f32.mrb[0].mxu0
    %1248 = vdwg.mxu0
    %v1249 = vadd.f32 %v971, %v1202
    %v1250 = vadd.f32 %v972, %v1204
    %v1251 = vadd.f32 %v973, %v1243
    %v1252 = vadd.f32 %v974, %v1245
    %v1253 = vxor.u32 %v1249, 2147483648
    %v1254 = vmul.f32 %v1253, 1.442695
    %v1255 = vpow.pop %v1254
    %v1256 = vadd.f32 %v1255, 1.0
    %v1257 = vrcp.pop %v1256
    %v1258 = vmul.f32 1.0, %v1257
    %v1259 = vxor.u32 %v1250, 2147483648
    %v1260 = vmul.f32 %v1259, 1.442695
    %v1261 = vpow.pop %v1260
    %v1262 = vadd.f32 %v1261, 1.0
    %v1263 = vrcp.pop %v1262
    %v1264 = vmul.f32 1.0, %v1263
    %v1265 = vtanh.pop %v1251
    %v1266 = vxor.u32 %v1252, 2147483648
    %v1267 = vmul.f32 %v1266, 1.442695
    %v1268 = vpow.pop %v1267
    %v1269 = vadd.f32 %v1268, 1.0
    %v1270 = vrcp.pop %v1269
    %v1271 = vmul.f32 1.0, %v1270
    %v1272 = vmul.f32 %v1264, %v962
    %v1273 = vmul.f32 %v1258, %v1265
    %v1274 = vadd.f32 %v1272, %v1273
    %v1275 = vtanh.pop %v1274
    %v1276 = vmul.f32 %v1271, %v1275
    %v1277 = vpack.c.bf16 %v1276, %v1276
    %s1278 = scalar_lea.vmem %s4, 12
    %1279 = vst [vmem:[%s1278] sm:$0xf] %v1277
    %s1280 = scalar_lea.vmem %s0, 64
    %v1281 = vld [vmem:[%s1280] sm:$0xff]
    %v1282 = vld [vmem:[%s1280 + $0x8] sm:$0xff]
    %v1283 = vunpack.c.l.bf16 %v1281
    %v1284 = vunpack.c.h.bf16 %v1281
    %v1285 = vunpack.c.l.bf16 %v1282
    %v1286 = vunpack.c.h.bf16 %v1282
    %v1287 = vld [vmem:[%s1] sm:$0xff]
    %v1288 = vld [vmem:[%s1 + $0x8] sm:$0xff]
    %v1289 = vld [vmem:[%s1 + $0x10] sm:$0xff]
    %v1290 = vld [vmem:[%s1 + $0x18] sm:$0xff]
    %v1291 = vld [vmem:[%s1 + $0x20] sm:$0xff]
    %v1292 = vld [vmem:[%s1 + $0x28] sm:$0xff]
    %v1293 = vld [vmem:[%s1 + $0x30] sm:$0xff]
    %v1294 = vld [vmem:[%s1 + $0x38] sm:$0xff]
    %v1295 = vld [vmem:[%s1 + $0x40] sm:$0xff]
    %v1296 = vld [vmem:[%s1 + $0x48] sm:$0xff]
    %v1297 = vld [vmem:[%s1 + $0x50] sm:$0xff]
    %v1298 = vld [vmem:[%s1 + $0x58] sm:$0xff]
    %v1299 = vld [vmem:[%s1 + $0x60] sm:$0xff]
    %v1300 = vld [vmem:[%s1 + $0x68] sm:$0xff]
    %v1301 = vld [vmem:[%s1 + $0x70] sm:$0xff]
    %v1302 = vld [vmem:[%s1 + $0x78] sm:$0xff]
    %v1303 = vld [vmem:[%s1 + $0x80] sm:$0xff]
    %v1304 = vld [vmem:[%s1 + $0x88] sm:$0xff]
    %v1305 = vld [vmem:[%s1 + $0x90] sm:$0xff]
    %v1306 = vld [vmem:[%s1 + $0x98] sm:$0xff]
    %v1307 = vld [vmem:[%s1 + $0xa0] sm:$0xff]
    %v1308 = vld [vmem:[%s1 + $0xa8] sm:$0xff]
    %v1309 = vld [vmem:[%s1 + $0xb0] sm:$0xff]
    %v1310 = vld [vmem:[%s1 + $0xb8] sm:$0xff]
    %v1311 = vld [vmem:[%s1 + $0xc0] sm:$0xff]
    %v1312 = vld [vmem:[%s1 + $0xc8] sm:$0xff]
    %v1313 = vld [vmem:[%s1 + $0xd0] sm:$0xff]
    %v1314 = vld [vmem:[%s1 + $0xd8] sm:$0xff]
    %v1315 = vld [vmem:[%s1 + $0xe0] sm:$0xff]
    %v1316 = vld [vmem:[%s1 + $0xe8] sm:$0xff]
    %v1317 = vld [vmem:[%s1 + $0xf0] sm:$0xff]
    %v1318 = vld [vmem:[%s1 + $0xf8] sm:$0xff]
    %v1351 = vunpack.c.l.b16 %v1287
    %v1352 = vunpack.c.h.b16 %v1287
    %v1353 = vunpack.c.l.b16 %v1288
    %v1354 = vunpack.c.h.b16 %v1288
    %v1355 = vunpack.c.l.b16 %v1289
    %v1356 = vunpack.c.h.b16 %v1289
    %v1357 = vunpack.c.l.b16 %v1290
    %v1358 = vunpack.c.h.b16 %v1290
    %v1359 = vunpack.c.l.b16 %v1291
    %v1360 = vunpack.c.h.b16 %v1291
    %v1361 = vunpack.c.l.b16 %v1292
    %v1362 = vunpack.c.h.b16 %v1292
    %v1363 = vunpack.c.l.b16 %v1293
    %v1364 = vunpack.c.h.b16 %v1293
    %v1365 = vunpack.c.l.b16 %v1294
    %v1366 = vunpack.c.h.b16 %v1294
    %v1367 = vunpack.c.l.b16 %v1295
    %v1368 = vunpack.c.h.b16 %v1295
    %v1369 = vunpack.c.l.b16 %v1296
    %v1370 = vunpack.c.h.b16 %v1296
    %v1371 = vunpack.c.l.b16 %v1297
    %v1372 = vunpack.c.h.b16 %v1297
    %v1373 = vunpack.c.l.b16 %v1298
    %v1374 = vunpack.c.h.b16 %v1298
    %v1375 = vunpack.c.l.b16 %v1299
    %v1376 = vunpack.c.h.b16 %v1299
    %v1377 = vunpack.c.l.b16 %v1300
    %v1378 = vunpack.c.h.b16 %v1300
    %v1379 = vunpack.c.l.b16 %v1301
    %v1380 = vunpack.c.h.b16 %v1301
    %v1381 = vunpack.c.l.b16 %v1302
    %v1382 = vunpack.c.h.b16 %v1302
    %v1383 = vunpack.c.l.b16 %v1303
    %v1384 = vunpack.c.h.b16 %v1303
    %v1385 = vunpack.c.l.b16 %v1304
    %v1386 = vunpack.c.h.b16 %v1304
    %v1387 = vunpack.c.l.b16 %v1305
    %v1388 = vunpack.c.h.b16 %v1305
    %v1389 = vunpack.c.l.b16 %v1306
    %v1390 = vunpack.c.h.b16 %v1306
    %v1391 = vunpack.c.l.b16 %v1307
    %v1392 = vunpack.c.h.b16 %v1307
    %v1393 = vunpack.c.l.b16 %v1308
    %v1394 = vunpack.c.h.b16 %v1308
    %v1395 = vunpack.c.l.b16 %v1309
    %v1396 = vunpack.c.h.b16 %v1309
    %v1397 = vunpack.c.l.b16 %v1310
    %v1398 = vunpack.c.h.b16 %v1310
    %v1399 = vunpack.c.l.b16 %v1311
    %v1400 = vunpack.c.h.b16 %v1311
    %v1401 = vunpack.c.l.b16 %v1312
    %v1402 = vunpack.c.h.b16 %v1312
    %v1403 = vunpack.c.l.b16 %v1313
    %v1404 = vunpack.c.h.b16 %v1313
    %v1405 = vunpack.c.l.b16 %v1314
    %v1406 = vunpack.c.h.b16 %v1314
    %v1407 = vunpack.c.l.b16 %v1315
    %v1408 = vunpack.c.h.b16 %v1315
    %v1409 = vunpack.c.l.b16 %v1316
    %v1410 = vunpack.c.h.b16 %v1316
    %v1411 = vunpack.c.l.b16 %v1317
    %v1412 = vunpack.c.h.b16 %v1317
    %v1413 = vunpack.c.l.b16 %v1318
    %v1414 = vunpack.c.h.b16 %v1318
    %v1415 = vpack.c.b16 %v1355, %v1351
    %v1416 = vpack.c.b16 %v1356, %v1352
    %v1417 = vpack.c.b16 %v1357, %v1353
    %v1418 = vpack.c.b16 %v1358, %v1354
    %v1419 = vpack.c.b16 %v1363, %v1359
    %v1420 = vpack.c.b16 %v1364, %v1360
    %v1421 = vpack.c.b16 %v1365, %v1361
    %v1422 = vpack.c.b16 %v1366, %v1362
    %v1423 = vpack.c.b16 %v1371, %v1367
    %v1424 = vpack.c.b16 %v1372, %v1368
    %v1425 = vpack.c.b16 %v1373, %v1369
    %v1426 = vpack.c.b16 %v1374, %v1370
    %v1427 = vpack.c.b16 %v1379, %v1375
    %v1428 = vpack.c.b16 %v1380, %v1376
    %v1429 = vpack.c.b16 %v1381, %v1377
    %v1430 = vpack.c.b16 %v1382, %v1378
    %v1431 = vpack.c.b16 %v1387, %v1383
    %v1432 = vpack.c.b16 %v1388, %v1384
    %v1433 = vpack.c.b16 %v1389, %v1385
    %v1434 = vpack.c.b16 %v1390, %v1386
    %v1435 = vpack.c.b16 %v1395, %v1391
    %v1436 = vpack.c.b16 %v1396, %v1392
    %v1437 = vpack.c.b16 %v1397, %v1393
    %v1438 = vpack.c.b16 %v1398, %v1394
    %v1439 = vpack.c.b16 %v1403, %v1399
    %v1440 = vpack.c.b16 %v1404, %v1400
    %v1441 = vpack.c.b16 %v1405, %v1401
    %v1442 = vpack.c.b16 %v1406, %v1402
    %v1443 = vpack.c.b16 %v1411, %v1407
    %v1444 = vpack.c.b16 %v1412, %v1408
    %v1445 = vpack.c.b16 %v1413, %v1409
    %v1446 = vpack.c.b16 %v1414, %v1410
    %1479 = vmatprep.subr.bf16.mxu0 %v1416
    %1480 = vmatpush1.bf16.msra.mxu0 %v1415
    %1481 = vmatprep.subr.bf16.mxu0 %v1420
    %1482 = vmatpush1.bf16.msra.mxu0 %v1419
    %1483 = vmatprep.subr.bf16.mxu0 %v1424
    %1484 = vmatpush1.bf16.msra.mxu0 %v1423
    %1485 = vmatprep.subr.bf16.mxu0 %v1428
    %1486 = vmatpush1.bf16.msra.mxu0 %v1427
    %1487 = vmatprep.subr.bf16.mxu0 %v1432
    %1488 = vmatpush1.bf16.msra.mxu0 %v1431
    %1489 = vmatprep.subr.bf16.mxu0 %v1436
    %1490 = vmatpush1.bf16.msra.mxu0 %v1435
    %1491 = vmatprep.subr.bf16.mxu0 %v1440
    %1492 = vmatpush1.bf16.msra.mxu0 %v1439
    %1493 = vmatprep.subr.bf16.mxu0 %v1444
    %1494 = vmatpush1.bf16.msra.mxu0 %v1443
    %1495 = vmatprep.subr.bf16.mxu0 0
    %1496 = vmatpush1.bf16.msra.mxu0 0
    %1497 = vmatprep.subr.bf16.mxu0 0
    %1498 = vmatpush1.bf16.msra.mxu0 0
    %1499 = vmatprep.subr.bf16.mxu0 0
    %1500 = vmatpush1.bf16.msra.mxu0 0
    %1501 = vmatprep.subr.bf16.mxu0 0
    %1502 = vmatpush1.bf16.msra.mxu0 0
    %1503 = vmatprep.subr.bf16.mxu0 0
    %1504 = vmatpush1.bf16.msra.mxu0 0
    %1505 = vmatprep.subr.bf16.mxu0 0
    %1506 = vmatpush1.bf16.msra.mxu0 0
    %1507 = vmatprep.subr.bf16.mxu0 0
    %1508 = vmatpush1.bf16.msra.mxu0 0
    %1509 = vmatprep.subr.bf16.mxu0 0
    %1510 = vmatpush1.bf16.msra.mxu0 0
    %1511 = vmatprep.mubr.bf16.mxu0 0
    %1512 = vmatmul.mubr.bf16.gmra.mrb[0].mxu0 %v1277
    %v1513 = vpop.f32.mrb[0].mxu0
    %v1514 = vadd.f32 0.0, %v1513
    %v1515 = vpop.f32.mrb[0].mxu0
    %v1516 = vadd.f32 0.0, %v1515
    %v1517 = vpop.f32.mrb[0].mxu0
    %v1518 = vpop.f32.mrb[0].mxu0
    %1519 = vdwg.mxu0
    %1520 = vmatprep.subr.bf16.mxu0 %v1418
    %1521 = vmatpush1.bf16.msra.mxu0 %v1417
    %1522 = vmatprep.subr.bf16.mxu0 %v1422
    %1523 = vmatpush1.bf16.msra.mxu0 %v1421
    %1524 = vmatprep.subr.bf16.mxu0 %v1426
    %1525 = vmatpush1.bf16.msra.mxu0 %v1425
    %1526 = vmatprep.subr.bf16.mxu0 %v1430
    %1527 = vmatpush1.bf16.msra.mxu0 %v1429
    %1528 = vmatprep.subr.bf16.mxu0 %v1434
    %1529 = vmatpush1.bf16.msra.mxu0 %v1433
    %1530 = vmatprep.subr.bf16.mxu0 %v1438
    %1531 = vmatpush1.bf16.msra.mxu0 %v1437
    %1532 = vmatprep.subr.bf16.mxu0 %v1442
    %1533 = vmatpush1.bf16.msra.mxu0 %v1441
    %1534 = vmatprep.subr.bf16.mxu0 %v1446
    %1535 = vmatpush1.bf16.msra.mxu0 %v1445
    %1536 = vmatprep.subr.bf16.mxu0 0
    %1537 = vmatpush1.bf16.msra.mxu0 0
    %1538 = vmatprep.subr.bf16.mxu0 0
    %1539 = vmatpush1.bf16.msra.mxu0 0
    %1540 = vmatprep.subr.bf16.mxu0 0
    %1541 = vmatpush1.bf16.msra.mxu0 0
    %1542 = vmatprep.subr.bf16.mxu0 0
    %1543 = vmatpush1.bf16.msra.mxu0 0
    %1544 = vmatprep.subr.bf16.mxu0 0
    %1545 = vmatpush1.bf16.msra.mxu0 0
    %1546 = vmatprep.subr.bf16.mxu0 0
    %1547 = vmatpush1.bf16.msra.mxu0 0
    %1548 = vmatprep.subr.bf16.mxu0 0
    %1549 = vmatpush1.bf16.msra.mxu0 0
    %1550 = vmatprep.subr.bf16.mxu0 0
    %1551 = vmatpush1.bf16.msra.mxu0 0
    %1552 = vmatprep.mubr.bf16.mxu0 0
    %1553 = vmatmul.mubr.bf16.gmra.mrb[0].mxu0 %v1277
    %v1554 = vpop.f32.mrb[0].mxu0
    %v1555 = vadd.f32 0.0, %v1554
    %v1556 = vpop.f32.mrb[0].mxu0
    %v1557 = vadd.f32 0.0, %v1556
    %v1558 = vpop.f32.mrb[0].mxu0
    %v1559 = vpop.f32.mrb[0].mxu0
    %1560 = vdwg.mxu0
    %v1561 = vadd.f32 %v1283, %v1514
    %v1562 = vadd.f32 %v1284, %v1516
    %v1563 = vadd.f32 %v1285, %v1555
    %v1564 = vadd.f32 %v1286, %v1557
    %v1565 = vxor.u32 %v1561, 2147483648
    %v1566 = vmul.f32 %v1565, 1.442695
    %v1567 = vpow.pop %v1566
    %v1568 = vadd.f32 %v1567, 1.0
    %v1569 = vrcp.pop %v1568
    %v1570 = vmul.f32 1.0, %v1569
    %v1571 = vxor.u32 %v1562, 2147483648
    %v1572 = vmul.f32 %v1571, 1.442695
    %v1573 = vpow.pop %v1572
    %v1574 = vadd.f32 %v1573, 1.0
    %v1575 = vrcp.pop %v1574
    %v1576 = vmul.f32 1.0, %v1575
    %v1577 = vtanh.pop %v1563
    %v1578 = vxor.u32 %v1564, 2147483648
    %v1579 = vmul.f32 %v1578, 1.442695
    %v1580 = vpow.pop %v1579
    %v1581 = vadd.f32 %v1580, 1.0
    %v1582 = vrcp.pop %v1581
    %v1583 = vmul.f32 1.0, %v1582
    %v1584 = vmul.f32 %v1576, %v1274
    %v1585 = vmul.f32 %v1570, %v1577
    %v1586 = vadd.f32 %v1584, %v1585
    %v1587 = vtanh.pop %v1586
    %v1588 = vmul.f32 %v1583, %v1587
    %v1589 = vpack.c.bf16 %v1588, %v1588
    %s1590 = scalar_lea.vmem %s4, 16
    %1591 = vst [vmem:[%s1590] sm:$0xf] %v1589
    %s1592 = scalar_lea.vmem %s0, 80
    %v1593 = vld [vmem:[%s1592] sm:$0xff]
    %v1594 = vld [vmem:[%s1592 + $0x8] sm:$0xff]
    %v1595 = vunpack.c.l.bf16 %v1593
    %v1596 = vunpack.c.h.bf16 %v1593
    %v1597 = vunpack.c.l.bf16 %v1594
    %v1598 = vunpack.c.h.bf16 %v1594
    %v1599 = vld [vmem:[%s1] sm:$0xff]
    %v1600 = vld [vmem:[%s1 + $0x8] sm:$0xff]
    %v1601 = vld [vmem:[%s1 + $0x10] sm:$0xff]
    %v1602 = vld [vmem:[%s1 + $0x18] sm:$0xff]
    %v1603 = vld [vmem:[%s1 + $0x20] sm:$0xff]
    %v1604 = vld [vmem:[%s1 + $0x28] sm:$0xff]
    %v1605 = vld [vmem:[%s1 + $0x30] sm:$0xff]
    %v1606 = vld [vmem:[%s1 + $0x38] sm:$0xff]
    %v1607 = vld [vmem:[%s1 + $0x40] sm:$0xff]
    %v1608 = vld [vmem:[%s1 + $0x48] sm:$0xff]
    %v1609 = vld [vmem:[%s1 + $0x50] sm:$0xff]
    %v1610 = vld [vmem:[%s1 + $0x58] sm:$0xff]
    %v1611 = vld [vmem:[%s1 + $0x60] sm:$0xff]
    %v1612 = vld [vmem:[%s1 + $0x68] sm:$0xff]
    %v1613 = vld [vmem:[%s1 + $0x70] sm:$0xff]
    %v1614 = vld [vmem:[%s1 + $0x78] sm:$0xff]
    %v1615 = vld [vmem:[%s1 + $0x80] sm:$0xff]
    %v1616 = vld [vmem:[%s1 + $0x88] sm:$0xff]
    %v1617 = vld [vmem:[%s1 + $0x90] sm:$0xff]
    %v1618 = vld [vmem:[%s1 + $0x98] sm:$0xff]
    %v1619 = vld [vmem:[%s1 + $0xa0] sm:$0xff]
    %v1620 = vld [vmem:[%s1 + $0xa8] sm:$0xff]
    %v1621 = vld [vmem:[%s1 + $0xb0] sm:$0xff]
    %v1622 = vld [vmem:[%s1 + $0xb8] sm:$0xff]
    %v1623 = vld [vmem:[%s1 + $0xc0] sm:$0xff]
    %v1624 = vld [vmem:[%s1 + $0xc8] sm:$0xff]
    %v1625 = vld [vmem:[%s1 + $0xd0] sm:$0xff]
    %v1626 = vld [vmem:[%s1 + $0xd8] sm:$0xff]
    %v1627 = vld [vmem:[%s1 + $0xe0] sm:$0xff]
    %v1628 = vld [vmem:[%s1 + $0xe8] sm:$0xff]
    %v1629 = vld [vmem:[%s1 + $0xf0] sm:$0xff]
    %v1630 = vld [vmem:[%s1 + $0xf8] sm:$0xff]
    %v1663 = vunpack.c.l.b16 %v1599
    %v1664 = vunpack.c.h.b16 %v1599
    %v1665 = vunpack.c.l.b16 %v1600
    %v1666 = vunpack.c.h.b16 %v1600
    %v1667 = vunpack.c.l.b16 %v1601
    %v1668 = vunpack.c.h.b16 %v1601
    %v1669 = vunpack.c.l.b16 %v1602
    %v1670 = vunpack.c.h.b16 %v1602
    %v1671 = vunpack.c.l.b16 %v1603
    %v1672 = vunpack.c.h.b16 %v1603
    %v1673 = vunpack.c.l.b16 %v1604
    %v1674 = vunpack.c.h.b16 %v1604
    %v1675 = vunpack.c.l.b16 %v1605
    %v1676 = vunpack.c.h.b16 %v1605
    %v1677 = vunpack.c.l.b16 %v1606
    %v1678 = vunpack.c.h.b16 %v1606
    %v1679 = vunpack.c.l.b16 %v1607
    %v1680 = vunpack.c.h.b16 %v1607
    %v1681 = vunpack.c.l.b16 %v1608
    %v1682 = vunpack.c.h.b16 %v1608
    %v1683 = vunpack.c.l.b16 %v1609
    %v1684 = vunpack.c.h.b16 %v1609
    %v1685 = vunpack.c.l.b16 %v1610
    %v1686 = vunpack.c.h.b16 %v1610
    %v1687 = vunpack.c.l.b16 %v1611
    %v1688 = vunpack.c.h.b16 %v1611
    %v1689 = vunpack.c.l.b16 %v1612
    %v1690 = vunpack.c.h.b16 %v1612
    %v1691 = vunpack.c.l.b16 %v1613
    %v1692 = vunpack.c.h.b16 %v1613
    %v1693 = vunpack.c.l.b16 %v1614
    %v1694 = vunpack.c.h.b16 %v1614
    %v1695 = vunpack.c.l.b16 %v1615
    %v1696 = vunpack.c.h.b16 %v1615
    %v1697 = vunpack.c.l.b16 %v1616
    %v1698 = vunpack.c.h.b16 %v1616
    %v1699 = vunpack.c.l.b16 %v1617
    %v1700 = vunpack.c.h.b16 %v1617
    %v1701 = vunpack.c.l.b16 %v1618
    %v1702 = vunpack.c.h.b16 %v1618
    %v1703 = vunpack.c.l.b16 %v1619
    %v1704 = vunpack.c.h.b16 %v1619
    %v1705 = vunpack.c.l.b16 %v1620
    %v1706 = vunpack.c.h.b16 %v1620
    %v1707 = vunpack.c.l.b16 %v1621
    %v1708 = vunpack.c.h.b16 %v1621
    %v1709 = vunpack.c.l.b16 %v1622
    %v1710 = vunpack.c.h.b16 %v1622
    %v1711 = vunpack.c.l.b16 %v1623
    %v1712 = vunpack.c.h.b16 %v1623
    %v1713 = vunpack.c.l.b16 %v1624
    %v1714 = vunpack.c.h.b16 %v1624
    %v1715 = vunpack.c.l.b16 %v1625
    %v1716 = vunpack.c.h.b16 %v1625
    %v1717 = vunpack.c.l.b16 %v1626
    %v1718 = vunpack.c.h.b16 %v1626
    %v1719 = vunpack.c.l.b16 %v1627
    %v1720 = vunpack.c.h.b16 %v1627
    %v1721 = vunpack.c.l.b16 %v1628
    %v1722 = vunpack.c.h.b16 %v1628
    %v1723 = vunpack.c.l.b16 %v1629
    %v1724 = vunpack.c.h.b16 %v1629
    %v1725 = vunpack.c.l.b16 %v1630
    %v1726 = vunpack.c.h.b16 %v1630
    %v1727 = vpack.c.b16 %v1667, %v1663
    %v1728 = vpack.c.b16 %v1668, %v1664
    %v1729 = vpack.c.b16 %v1669, %v1665
    %v1730 = vpack.c.b16 %v1670, %v1666
    %v1731 = vpack.c.b16 %v1675, %v1671
    %v1732 = vpack.c.b16 %v1676, %v1672
    %v1733 = vpack.c.b16 %v1677, %v1673
    %v1734 = vpack.c.b16 %v1678, %v1674
    %v1735 = vpack.c.b16 %v1683, %v1679
    %v1736 = vpack.c.b16 %v1684, %v1680
    %v1737 = vpack.c.b16 %v1685, %v1681
    %v1738 = vpack.c.b16 %v1686, %v1682
    %v1739 = vpack.c.b16 %v1691, %v1687
    %v1740 = vpack.c.b16 %v1692, %v1688
    %v1741 = vpack.c.b16 %v1693, %v1689
    %v1742 = vpack.c.b16 %v1694, %v1690
    %v1743 = vpack.c.b16 %v1699, %v1695
    %v1744 = vpack.c.b16 %v1700, %v1696
    %v1745 = vpack.c.b16 %v1701, %v1697
    %v1746 = vpack.c.b16 %v1702, %v1698
    %v1747 = vpack.c.b16 %v1707, %v1703
    %v1748 = vpack.c.b16 %v1708, %v1704
    %v1749 = vpack.c.b16 %v1709, %v1705
    %v1750 = vpack.c.b16 %v1710, %v1706
    %v1751 = vpack.c.b16 %v1715, %v1711
    %v1752 = vpack.c.b16 %v1716, %v1712
    %v1753 = vpack.c.b16 %v1717, %v1713
    %v1754 = vpack.c.b16 %v1718, %v1714
    %v1755 = vpack.c.b16 %v1723, %v1719
    %v1756 = vpack.c.b16 %v1724, %v1720
    %v1757 = vpack.c.b16 %v1725, %v1721
    %v1758 = vpack.c.b16 %v1726, %v1722
    %1791 = vmatprep.subr.bf16.mxu0 %v1728
    %1792 = vmatpush1.bf16.msra.mxu0 %v1727
    %1793 = vmatprep.subr.bf16.mxu0 %v1732
    %1794 = vmatpush1.bf16.msra.mxu0 %v1731
    %1795 = vmatprep.subr.bf16.mxu0 %v1736
    %1796 = vmatpush1.bf16.msra.mxu0 %v1735
    %1797 = vmatprep.subr.bf16.mxu0 %v1740
    %1798 = vmatpush1.bf16.msra.mxu0 %v1739
    %1799 = vmatprep.subr.bf16.mxu0 %v1744
    %1800 = vmatpush1.bf16.msra.mxu0 %v1743
    %1801 = vmatprep.subr.bf16.mxu0 %v1748
    %1802 = vmatpush1.bf16.msra.mxu0 %v1747
    %1803 = vmatprep.subr.bf16.mxu0 %v1752
    %1804 = vmatpush1.bf16.msra.mxu0 %v1751
    %1805 = vmatprep.subr.bf16.mxu0 %v1756
    %1806 = vmatpush1.bf16.msra.mxu0 %v1755
    %1807 = vmatprep.subr.bf16.mxu0 0
    %1808 = vmatpush1.bf16.msra.mxu0 0
    %1809 = vmatprep.subr.bf16.mxu0 0
    %1810 = vmatpush1.bf16.msra.mxu0 0
    %1811 = vmatprep.subr.bf16.mxu0 0
    %1812 = vmatpush1.bf16.msra.mxu0 0
    %1813 = vmatprep.subr.bf16.mxu0 0
    %1814 = vmatpush1.bf16.msra.mxu0 0
    %1815 = vmatprep.subr.bf16.mxu0 0
    %1816 = vmatpush1.bf16.msra.mxu0 0
    %1817 = vmatprep.subr.bf16.mxu0 0
    %1818 = vmatpush1.bf16.msra.mxu0 0
    %1819 = vmatprep.subr.bf16.mxu0 0
    %1820 = vmatpush1.bf16.msra.mxu0 0
    %1821 = vmatprep.subr.bf16.mxu0 0
    %1822 = vmatpush1.bf16.msra.mxu0 0
    %1823 = vmatprep.mubr.bf16.mxu0 0
    %1824 = vmatmul.mubr.bf16.gmra.mrb[0].mxu0 %v1589
    %v1825 = vpop.f32.mrb[0].mxu0
    %v1826 = vadd.f32 0.0, %v1825
    %v1827 = vpop.f32.mrb[0].mxu0
    %v1828 = vadd.f32 0.0, %v1827
    %v1829 = vpop.f32.mrb[0].mxu0
    %v1830 = vpop.f32.mrb[0].mxu0
    %1831 = vdwg.mxu0
    %1832 = vmatprep.subr.bf16.mxu0 %v1730
    %1833 = vmatpush1.bf16.msra.mxu0 %v1729
    %1834 = vmatprep.subr.bf16.mxu0 %v1734
    %1835 = vmatpush1.bf16.msra.mxu0 %v1733
    %1836 = vmatprep.subr.bf16.mxu0 %v1738
    %1837 = vmatpush1.bf16.msra.mxu0 %v1737
    %1838 = vmatprep.subr.bf16.mxu0 %v1742
    %1839 = vmatpush1.bf16.msra.mxu0 %v1741
    %1840 = vmatprep.subr.bf16.mxu0 %v1746
    %1841 = vmatpush1.bf16.msra.mxu0 %v1745
    %1842 = vmatprep.subr.bf16.mxu0 %v1750
    %1843 = vmatpush1.bf16.msra.mxu0 %v1749
    %1844 = vmatprep.subr.bf16.mxu0 %v1754
    %1845 = vmatpush1.bf16.msra.mxu0 %v1753
    %1846 = vmatprep.subr.bf16.mxu0 %v1758
    %1847 = vmatpush1.bf16.msra.mxu0 %v1757
    %1848 = vmatprep.subr.bf16.mxu0 0
    %1849 = vmatpush1.bf16.msra.mxu0 0
    %1850 = vmatprep.subr.bf16.mxu0 0
    %1851 = vmatpush1.bf16.msra.mxu0 0
    %1852 = vmatprep.subr.bf16.mxu0 0
    %1853 = vmatpush1.bf16.msra.mxu0 0
    %1854 = vmatprep.subr.bf16.mxu0 0
    %1855 = vmatpush1.bf16.msra.mxu0 0
    %1856 = vmatprep.subr.bf16.mxu0 0
    %1857 = vmatpush1.bf16.msra.mxu0 0
    %1858 = vmatprep.subr.bf16.mxu0 0
    %1859 = vmatpush1.bf16.msra.mxu0 0
    %1860 = vmatprep.subr.bf16.mxu0 0
    %1861 = vmatpush1.bf16.msra.mxu0 0
    %1862 = vmatprep.subr.bf16.mxu0 0
    %1863 = vmatpush1.bf16.msra.mxu0 0
    %1864 = vmatprep.mubr.bf16.mxu0 0
    %1865 = vmatmul.mubr.bf16.gmra.mrb[0].mxu0 %v1589
    %v1866 = vpop.f32.mrb[0].mxu0
    %v1867 = vadd.f32 0.0, %v1866
    %v1868 = vpop.f32.mrb[0].mxu0
    %v1869 = vadd.f32 0.0, %v1868
    %v1870 = vpop.f32.mrb[0].mxu0
    %v1871 = vpop.f32.mrb[0].mxu0
    %1872 = vdwg.mxu0
    %v1873 = vadd.f32 %v1595, %v1826
    %v1874 = vadd.f32 %v1596, %v1828
    %v1875 = vadd.f32 %v1597, %v1867
    %v1876 = vadd.f32 %v1598, %v1869
    %v1877 = vxor.u32 %v1873, 2147483648
    %v1878 = vmul.f32 %v1877, 1.442695
    %v1879 = vpow.pop %v1878
    %v1880 = vadd.f32 %v1879, 1.0
    %v1881 = vrcp.pop %v1880
    %v1882 = vmul.f32 1.0, %v1881
    %v1883 = vxor.u32 %v1874, 2147483648
    %v1884 = vmul.f32 %v1883, 1.442695
    %v1885 = vpow.pop %v1884
    %v1886 = vadd.f32 %v1885, 1.0
    %v1887 = vrcp.pop %v1886
    %v1888 = vmul.f32 1.0, %v1887
    %v1889 = vtanh.pop %v1875
    %v1890 = vxor.u32 %v1876, 2147483648
    %v1891 = vmul.f32 %v1890, 1.442695
    %v1892 = vpow.pop %v1891
    %v1893 = vadd.f32 %v1892, 1.0
    %v1894 = vrcp.pop %v1893
    %v1895 = vmul.f32 1.0, %v1894
    %v1896 = vmul.f32 %v1888, %v1586
    %v1897 = vmul.f32 %v1882, %v1889
    %v1898 = vadd.f32 %v1896, %v1897
    %v1899 = vtanh.pop %v1898
    %v1900 = vmul.f32 %v1895, %v1899
    %v1901 = vpack.c.bf16 %v1900, %v1900
    %s1902 = scalar_lea.vmem %s4, 20
    %1903 = vst [vmem:[%s1902] sm:$0xf] %v1901
    %s1904 = scalar_lea.vmem %s0, 96
    %v1905 = vld [vmem:[%s1904] sm:$0xff]
    %v1906 = vld [vmem:[%s1904 + $0x8] sm:$0xff]
    %v1907 = vunpack.c.l.bf16 %v1905
    %v1908 = vunpack.c.h.bf16 %v1905
    %v1909 = vunpack.c.l.bf16 %v1906
    %v1910 = vunpack.c.h.bf16 %v1906
    %v1911 = vld [vmem:[%s1] sm:$0xff]
    %v1912 = vld [vmem:[%s1 + $0x8] sm:$0xff]
    %v1913 = vld [vmem:[%s1 + $0x10] sm:$0xff]
    %v1914 = vld [vmem:[%s1 + $0x18] sm:$0xff]
    %v1915 = vld [vmem:[%s1 + $0x20] sm:$0xff]
    %v1916 = vld [vmem:[%s1 + $0x28] sm:$0xff]
    %v1917 = vld [vmem:[%s1 + $0x30] sm:$0xff]
    %v1918 = vld [vmem:[%s1 + $0x38] sm:$0xff]
    %v1919 = vld [vmem:[%s1 + $0x40] sm:$0xff]
    %v1920 = vld [vmem:[%s1 + $0x48] sm:$0xff]
    %v1921 = vld [vmem:[%s1 + $0x50] sm:$0xff]
    %v1922 = vld [vmem:[%s1 + $0x58] sm:$0xff]
    %v1923 = vld [vmem:[%s1 + $0x60] sm:$0xff]
    %v1924 = vld [vmem:[%s1 + $0x68] sm:$0xff]
    %v1925 = vld [vmem:[%s1 + $0x70] sm:$0xff]
    %v1926 = vld [vmem:[%s1 + $0x78] sm:$0xff]
    %v1927 = vld [vmem:[%s1 + $0x80] sm:$0xff]
    %v1928 = vld [vmem:[%s1 + $0x88] sm:$0xff]
    %v1929 = vld [vmem:[%s1 + $0x90] sm:$0xff]
    %v1930 = vld [vmem:[%s1 + $0x98] sm:$0xff]
    %v1931 = vld [vmem:[%s1 + $0xa0] sm:$0xff]
    %v1932 = vld [vmem:[%s1 + $0xa8] sm:$0xff]
    %v1933 = vld [vmem:[%s1 + $0xb0] sm:$0xff]
    %v1934 = vld [vmem:[%s1 + $0xb8] sm:$0xff]
    %v1935 = vld [vmem:[%s1 + $0xc0] sm:$0xff]
    %v1936 = vld [vmem:[%s1 + $0xc8] sm:$0xff]
    %v1937 = vld [vmem:[%s1 + $0xd0] sm:$0xff]
    %v1938 = vld [vmem:[%s1 + $0xd8] sm:$0xff]
    %v1939 = vld [vmem:[%s1 + $0xe0] sm:$0xff]
    %v1940 = vld [vmem:[%s1 + $0xe8] sm:$0xff]
    %v1941 = vld [vmem:[%s1 + $0xf0] sm:$0xff]
    %v1942 = vld [vmem:[%s1 + $0xf8] sm:$0xff]
    %v1975 = vunpack.c.l.b16 %v1911
    %v1976 = vunpack.c.h.b16 %v1911
    %v1977 = vunpack.c.l.b16 %v1912
    %v1978 = vunpack.c.h.b16 %v1912
    %v1979 = vunpack.c.l.b16 %v1913
    %v1980 = vunpack.c.h.b16 %v1913
    %v1981 = vunpack.c.l.b16 %v1914
    %v1982 = vunpack.c.h.b16 %v1914
    %v1983 = vunpack.c.l.b16 %v1915
    %v1984 = vunpack.c.h.b16 %v1915
    %v1985 = vunpack.c.l.b16 %v1916
    %v1986 = vunpack.c.h.b16 %v1916
    %v1987 = vunpack.c.l.b16 %v1917
    %v1988 = vunpack.c.h.b16 %v1917
    %v1989 = vunpack.c.l.b16 %v1918
    %v1990 = vunpack.c.h.b16 %v1918
    %v1991 = vunpack.c.l.b16 %v1919
    %v1992 = vunpack.c.h.b16 %v1919
    %v1993 = vunpack.c.l.b16 %v1920
    %v1994 = vunpack.c.h.b16 %v1920
    %v1995 = vunpack.c.l.b16 %v1921
    %v1996 = vunpack.c.h.b16 %v1921
    %v1997 = vunpack.c.l.b16 %v1922
    %v1998 = vunpack.c.h.b16 %v1922
    %v1999 = vunpack.c.l.b16 %v1923
    %v2000 = vunpack.c.h.b16 %v1923
    %v2001 = vunpack.c.l.b16 %v1924
    %v2002 = vunpack.c.h.b16 %v1924
    %v2003 = vunpack.c.l.b16 %v1925
    %v2004 = vunpack.c.h.b16 %v1925
    %v2005 = vunpack.c.l.b16 %v1926
    %v2006 = vunpack.c.h.b16 %v1926
    %v2007 = vunpack.c.l.b16 %v1927
    %v2008 = vunpack.c.h.b16 %v1927
    %v2009 = vunpack.c.l.b16 %v1928
    %v2010 = vunpack.c.h.b16 %v1928
    %v2011 = vunpack.c.l.b16 %v1929
    %v2012 = vunpack.c.h.b16 %v1929
    %v2013 = vunpack.c.l.b16 %v1930
    %v2014 = vunpack.c.h.b16 %v1930
    %v2015 = vunpack.c.l.b16 %v1931
    %v2016 = vunpack.c.h.b16 %v1931
    %v2017 = vunpack.c.l.b16 %v1932
    %v2018 = vunpack.c.h.b16 %v1932
    %v2019 = vunpack.c.l.b16 %v1933
    %v2020 = vunpack.c.h.b16 %v1933
    %v2021 = vunpack.c.l.b16 %v1934
    %v2022 = vunpack.c.h.b16 %v1934
    %v2023 = vunpack.c.l.b16 %v1935
    %v2024 = vunpack.c.h.b16 %v1935
    %v2025 = vunpack.c.l.b16 %v1936
    %v2026 = vunpack.c.h.b16 %v1936
    %v2027 = vunpack.c.l.b16 %v1937
    %v2028 = vunpack.c.h.b16 %v1937
    %v2029 = vunpack.c.l.b16 %v1938
    %v2030 = vunpack.c.h.b16 %v1938
    %v2031 = vunpack.c.l.b16 %v1939
    %v2032 = vunpack.c.h.b16 %v1939
    %v2033 = vunpack.c.l.b16 %v1940
    %v2034 = vunpack.c.h.b16 %v1940
    %v2035 = vunpack.c.l.b16 %v1941
    %v2036 = vunpack.c.h.b16 %v1941
    %v2037 = vunpack.c.l.b16 %v1942
    %v2038 = vunpack.c.h.b16 %v1942
    %v2039 = vpack.c.b16 %v1979, %v1975
    %v2040 = vpack.c.b16 %v1980, %v1976
    %v2041 = vpack.c.b16 %v1981, %v1977
    %v2042 = vpack.c.b16 %v1982, %v1978
    %v2043 = vpack.c.b16 %v1987, %v1983
    %v2044 = vpack.c.b16 %v1988, %v1984
    %v2045 = vpack.c.b16 %v1989, %v1985
    %v2046 = vpack.c.b16 %v1990, %v1986
    %v2047 = vpack.c.b16 %v1995, %v1991
    %v2048 = vpack.c.b16 %v1996, %v1992
    %v2049 = vpack.c.b16 %v1997, %v1993
    %v2050 = vpack.c.b16 %v1998, %v1994
    %v2051 = vpack.c.b16 %v2003, %v1999
    %v2052 = vpack.c.b16 %v2004, %v2000
    %v2053 = vpack.c.b16 %v2005, %v2001
    %v2054 = vpack.c.b16 %v2006, %v2002
    %v2055 = vpack.c.b16 %v2011, %v2007
    %v2056 = vpack.c.b16 %v2012, %v2008
    %v2057 = vpack.c.b16 %v2013, %v2009
    %v2058 = vpack.c.b16 %v2014, %v2010
    %v2059 = vpack.c.b16 %v2019, %v2015
    %v2060 = vpack.c.b16 %v2020, %v2016
    %v2061 = vpack.c.b16 %v2021, %v2017
    %v2062 = vpack.c.b16 %v2022, %v2018
    %v2063 = vpack.c.b16 %v2027, %v2023
    %v2064 = vpack.c.b16 %v2028, %v2024
    %v2065 = vpack.c.b16 %v2029, %v2025
    %v2066 = vpack.c.b16 %v2030, %v2026
    %v2067 = vpack.c.b16 %v2035, %v2031
    %v2068 = vpack.c.b16 %v2036, %v2032
    %v2069 = vpack.c.b16 %v2037, %v2033
    %v2070 = vpack.c.b16 %v2038, %v2034
    %2103 = vmatprep.subr.bf16.mxu0 %v2040
    %2104 = vmatpush1.bf16.msra.mxu0 %v2039
    %2105 = vmatprep.subr.bf16.mxu0 %v2044
    %2106 = vmatpush1.bf16.msra.mxu0 %v2043
    %2107 = vmatprep.subr.bf16.mxu0 %v2048
    %2108 = vmatpush1.bf16.msra.mxu0 %v2047
    %2109 = vmatprep.subr.bf16.mxu0 %v2052
    %2110 = vmatpush1.bf16.msra.mxu0 %v2051
    %2111 = vmatprep.subr.bf16.mxu0 %v2056
    %2112 = vmatpush1.bf16.msra.mxu0 %v2055
    %2113 = vmatprep.subr.bf16.mxu0 %v2060
    %2114 = vmatpush1.bf16.msra.mxu0 %v2059
    %2115 = vmatprep.subr.bf16.mxu0 %v2064
    %2116 = vmatpush1.bf16.msra.mxu0 %v2063
    %2117 = vmatprep.subr.bf16.mxu0 %v2068
    %2118 = vmatpush1.bf16.msra.mxu0 %v2067
    %2119 = vmatprep.subr.bf16.mxu0 0
    %2120 = vmatpush1.bf16.msra.mxu0 0
    %2121 = vmatprep.subr.bf16.mxu0 0
    %2122 = vmatpush1.bf16.msra.mxu0 0
    %2123 = vmatprep.subr.bf16.mxu0 0
    %2124 = vmatpush1.bf16.msra.mxu0 0
    %2125 = vmatprep.subr.bf16.mxu0 0
    %2126 = vmatpush1.bf16.msra.mxu0 0
    %2127 = vmatprep.subr.bf16.mxu0 0
    %2128 = vmatpush1.bf16.msra.mxu0 0
    %2129 = vmatprep.subr.bf16.mxu0 0
    %2130 = vmatpush1.bf16.msra.mxu0 0
    %2131 = vmatprep.subr.bf16.mxu0 0
    %2132 = vmatpush1.bf16.msra.mxu0 0
    %2133 = vmatprep.subr.bf16.mxu0 0
    %2134 = vmatpush1.bf16.msra.mxu0 0
    %2135 = vmatprep.mubr.bf16.mxu0 0
    %2136 = vmatmul.mubr.bf16.gmra.mrb[0].mxu0 %v1901
    %v2137 = vpop.f32.mrb[0].mxu0
    %v2138 = vadd.f32 0.0, %v2137
    %v2139 = vpop.f32.mrb[0].mxu0
    %v2140 = vadd.f32 0.0, %v2139
    %v2141 = vpop.f32.mrb[0].mxu0
    %v2142 = vpop.f32.mrb[0].mxu0
    %2143 = vdwg.mxu0
    %2144 = vmatprep.subr.bf16.mxu0 %v2042
    %2145 = vmatpush1.bf16.msra.mxu0 %v2041
    %2146 = vmatprep.subr.bf16.mxu0 %v2046
    %2147 = vmatpush1.bf16.msra.mxu0 %v2045
    %2148 = vmatprep.subr.bf16.mxu0 %v2050
    %2149 = vmatpush1.bf16.msra.mxu0 %v2049
    %2150 = vmatprep.subr.bf16.mxu0 %v2054
    %2151 = vmatpush1.bf16.msra.mxu0 %v2053
    %2152 = vmatprep.subr.bf16.mxu0 %v2058
    %2153 = vmatpush1.bf16.msra.mxu0 %v2057
    %2154 = vmatprep.subr.bf16.mxu0 %v2062
    %2155 = vmatpush1.bf16.msra.mxu0 %v2061
    %2156 = vmatprep.subr.bf16.mxu0 %v2066
    %2157 = vmatpush1.bf16.msra.mxu0 %v2065
    %2158 = vmatprep.subr.bf16.mxu0 %v2070
    %2159 = vmatpush1.bf16.msra.mxu0 %v2069
    %2160 = vmatprep.subr.bf16.mxu0 0
    %2161 = vmatpush1.bf16.msra.mxu0 0
    %2162 = vmatprep.subr.bf16.mxu0 0
    %2163 = vmatpush1.bf16.msra.mxu0 0
    %2164 = vmatprep.subr.bf16.mxu0 0
    %2165 = vmatpush1.bf16.msra.mxu0 0
    %2166 = vmatprep.subr.bf16.mxu0 0
    %2167 = vmatpush1.bf16.msra.mxu0 0
    %2168 = vmatprep.subr.bf16.mxu0 0
    %2169 = vmatpush1.bf16.msra.mxu0 0
    %2170 = vmatprep.subr.bf16.mxu0 0
    %2171 = vmatpush1.bf16.msra.mxu0 0
    %2172 = vmatprep.subr.bf16.mxu0 0
    %2173 = vmatpush1.bf16.msra.mxu0 0
    %2174 = vmatprep.subr.bf16.mxu0 0
    %2175 = vmatpush1.bf16.msra.mxu0 0
    %2176 = vmatprep.mubr.bf16.mxu0 0
    %2177 = vmatmul.mubr.bf16.gmra.mrb[0].mxu0 %v1901
    %v2178 = vpop.f32.mrb[0].mxu0
    %v2179 = vadd.f32 0.0, %v2178
    %v2180 = vpop.f32.mrb[0].mxu0
    %v2181 = vadd.f32 0.0, %v2180
    %v2182 = vpop.f32.mrb[0].mxu0
    %v2183 = vpop.f32.mrb[0].mxu0
    %2184 = vdwg.mxu0
    %v2185 = vadd.f32 %v1907, %v2138
    %v2186 = vadd.f32 %v1908, %v2140
    %v2187 = vadd.f32 %v1909, %v2179
    %v2188 = vadd.f32 %v1910, %v2181
    %v2189 = vxor.u32 %v2185, 2147483648
    %v2190 = vmul.f32 %v2189, 1.442695
    %v2191 = vpow.pop %v2190
    %v2192 = vadd.f32 %v2191, 1.0
    %v2193 = vrcp.pop %v2192
    %v2194 = vmul.f32 1.0, %v2193
    %v2195 = vxor.u32 %v2186, 2147483648
    %v2196 = vmul.f32 %v2195, 1.442695
    %v2197 = vpow.pop %v2196
    %v2198 = vadd.f32 %v2197, 1.0
    %v2199 = vrcp.pop %v2198
    %v2200 = vmul.f32 1.0, %v2199
    %v2201 = vtanh.pop %v2187
    %v2202 = vxor.u32 %v2188, 2147483648
    %v2203 = vmul.f32 %v2202, 1.442695
    %v2204 = vpow.pop %v2203
    %v2205 = vadd.f32 %v2204, 1.0
    %v2206 = vrcp.pop %v2205
    %v2207 = vmul.f32 1.0, %v2206
    %v2208 = vmul.f32 %v2200, %v1898
    %v2209 = vmul.f32 %v2194, %v2201
    %v2210 = vadd.f32 %v2208, %v2209
    %v2211 = vtanh.pop %v2210
    %v2212 = vmul.f32 %v2207, %v2211
    %v2213 = vpack.c.bf16 %v2212, %v2212
    %s2214 = scalar_lea.vmem %s4, 24
    %2215 = vst [vmem:[%s2214] sm:$0xf] %v2213
    %s2216 = scalar_lea.vmem %s0, 112
    %v2217 = vld [vmem:[%s2216] sm:$0xff]
    %v2218 = vld [vmem:[%s2216 + $0x8] sm:$0xff]
    %v2219 = vunpack.c.l.bf16 %v2217
    %v2220 = vunpack.c.h.bf16 %v2217
    %v2221 = vunpack.c.l.bf16 %v2218
    %v2222 = vunpack.c.h.bf16 %v2218
    %v2223 = vld [vmem:[%s1] sm:$0xff]
    %v2224 = vld [vmem:[%s1 + $0x8] sm:$0xff]
    %v2225 = vld [vmem:[%s1 + $0x10] sm:$0xff]
    %v2226 = vld [vmem:[%s1 + $0x18] sm:$0xff]
    %v2227 = vld [vmem:[%s1 + $0x20] sm:$0xff]
    %v2228 = vld [vmem:[%s1 + $0x28] sm:$0xff]
    %v2229 = vld [vmem:[%s1 + $0x30] sm:$0xff]
    %v2230 = vld [vmem:[%s1 + $0x38] sm:$0xff]
    %v2231 = vld [vmem:[%s1 + $0x40] sm:$0xff]
    %v2232 = vld [vmem:[%s1 + $0x48] sm:$0xff]
    %v2233 = vld [vmem:[%s1 + $0x50] sm:$0xff]
    %v2234 = vld [vmem:[%s1 + $0x58] sm:$0xff]
    %v2235 = vld [vmem:[%s1 + $0x60] sm:$0xff]
    %v2236 = vld [vmem:[%s1 + $0x68] sm:$0xff]
    %v2237 = vld [vmem:[%s1 + $0x70] sm:$0xff]
    %v2238 = vld [vmem:[%s1 + $0x78] sm:$0xff]
    %v2239 = vld [vmem:[%s1 + $0x80] sm:$0xff]
    %v2240 = vld [vmem:[%s1 + $0x88] sm:$0xff]
    %v2241 = vld [vmem:[%s1 + $0x90] sm:$0xff]
    %v2242 = vld [vmem:[%s1 + $0x98] sm:$0xff]
    %v2243 = vld [vmem:[%s1 + $0xa0] sm:$0xff]
    %v2244 = vld [vmem:[%s1 + $0xa8] sm:$0xff]
    %v2245 = vld [vmem:[%s1 + $0xb0] sm:$0xff]
    %v2246 = vld [vmem:[%s1 + $0xb8] sm:$0xff]
    %v2247 = vld [vmem:[%s1 + $0xc0] sm:$0xff]
    %v2248 = vld [vmem:[%s1 + $0xc8] sm:$0xff]
    %v2249 = vld [vmem:[%s1 + $0xd0] sm:$0xff]
    %v2250 = vld [vmem:[%s1 + $0xd8] sm:$0xff]
    %v2251 = vld [vmem:[%s1 + $0xe0] sm:$0xff]
    %v2252 = vld [vmem:[%s1 + $0xe8] sm:$0xff]
    %v2253 = vld [vmem:[%s1 + $0xf0] sm:$0xff]
    %v2254 = vld [vmem:[%s1 + $0xf8] sm:$0xff]
    %v2287 = vunpack.c.l.b16 %v2223
    %v2288 = vunpack.c.h.b16 %v2223
    %v2289 = vunpack.c.l.b16 %v2224
    %v2290 = vunpack.c.h.b16 %v2224
    %v2291 = vunpack.c.l.b16 %v2225
    %v2292 = vunpack.c.h.b16 %v2225
    %v2293 = vunpack.c.l.b16 %v2226
    %v2294 = vunpack.c.h.b16 %v2226
    %v2295 = vunpack.c.l.b16 %v2227
    %v2296 = vunpack.c.h.b16 %v2227
    %v2297 = vunpack.c.l.b16 %v2228
    %v2298 = vunpack.c.h.b16 %v2228
    %v2299 = vunpack.c.l.b16 %v2229
    %v2300 = vunpack.c.h.b16 %v2229
    %v2301 = vunpack.c.l.b16 %v2230
    %v2302 = vunpack.c.h.b16 %v2230
    %v2303 = vunpack.c.l.b16 %v2231
    %v2304 = vunpack.c.h.b16 %v2231
    %v2305 = vunpack.c.l.b16 %v2232
    %v2306 = vunpack.c.h.b16 %v2232
    %v2307 = vunpack.c.l.b16 %v2233
    %v2308 = vunpack.c.h.b16 %v2233
    %v2309 = vunpack.c.l.b16 %v2234
    %v2310 = vunpack.c.h.b16 %v2234
    %v2311 = vunpack.c.l.b16 %v2235
    %v2312 = vunpack.c.h.b16 %v2235
    %v2313 = vunpack.c.l.b16 %v2236
    %v2314 = vunpack.c.h.b16 %v2236
    %v2315 = vunpack.c.l.b16 %v2237
    %v2316 = vunpack.c.h.b16 %v2237
    %v2317 = vunpack.c.l.b16 %v2238
    %v2318 = vunpack.c.h.b16 %v2238
    %v2319 = vunpack.c.l.b16 %v2239
    %v2320 = vunpack.c.h.b16 %v2239
    %v2321 = vunpack.c.l.b16 %v2240
    %v2322 = vunpack.c.h.b16 %v2240
    %v2323 = vunpack.c.l.b16 %v2241
    %v2324 = vunpack.c.h.b16 %v2241
    %v2325 = vunpack.c.l.b16 %v2242
    %v2326 = vunpack.c.h.b16 %v2242
    %v2327 = vunpack.c.l.b16 %v2243
    %v2328 = vunpack.c.h.b16 %v2243
    %v2329 = vunpack.c.l.b16 %v2244
    %v2330 = vunpack.c.h.b16 %v2244
    %v2331 = vunpack.c.l.b16 %v2245
    %v2332 = vunpack.c.h.b16 %v2245
    %v2333 = vunpack.c.l.b16 %v2246
    %v2334 = vunpack.c.h.b16 %v2246
    %v2335 = vunpack.c.l.b16 %v2247
    %v2336 = vunpack.c.h.b16 %v2247
    %v2337 = vunpack.c.l.b16 %v2248
    %v2338 = vunpack.c.h.b16 %v2248
    %v2339 = vunpack.c.l.b16 %v2249
    %v2340 = vunpack.c.h.b16 %v2249
    %v2341 = vunpack.c.l.b16 %v2250
    %v2342 = vunpack.c.h.b16 %v2250
    %v2343 = vunpack.c.l.b16 %v2251
    %v2344 = vunpack.c.h.b16 %v2251
    %v2345 = vunpack.c.l.b16 %v2252
    %v2346 = vunpack.c.h.b16 %v2252
    %v2347 = vunpack.c.l.b16 %v2253
    %v2348 = vunpack.c.h.b16 %v2253
    %v2349 = vunpack.c.l.b16 %v2254
    %v2350 = vunpack.c.h.b16 %v2254
    %v2351 = vpack.c.b16 %v2291, %v2287
    %v2352 = vpack.c.b16 %v2292, %v2288
    %v2353 = vpack.c.b16 %v2293, %v2289
    %v2354 = vpack.c.b16 %v2294, %v2290
    %v2355 = vpack.c.b16 %v2299, %v2295
    %v2356 = vpack.c.b16 %v2300, %v2296
    %v2357 = vpack.c.b16 %v2301, %v2297
    %v2358 = vpack.c.b16 %v2302, %v2298
    %v2359 = vpack.c.b16 %v2307, %v2303
    %v2360 = vpack.c.b16 %v2308, %v2304
    %v2361 = vpack.c.b16 %v2309, %v2305
    %v2362 = vpack.c.b16 %v2310, %v2306
    %v2363 = vpack.c.b16 %v2315, %v2311
    %v2364 = vpack.c.b16 %v2316, %v2312
    %v2365 = vpack.c.b16 %v2317, %v2313
    %v2366 = vpack.c.b16 %v2318, %v2314
    %v2367 = vpack.c.b16 %v2323, %v2319
    %v2368 = vpack.c.b16 %v2324, %v2320
    %v2369 = vpack.c.b16 %v2325, %v2321
    %v2370 = vpack.c.b16 %v2326, %v2322
    %v2371 = vpack.c.b16 %v2331, %v2327
    %v2372 = vpack.c.b16 %v2332, %v2328
    %v2373 = vpack.c.b16 %v2333, %v2329
    %v2374 = vpack.c.b16 %v2334, %v2330
    %v2375 = vpack.c.b16 %v2339, %v2335
    %v2376 = vpack.c.b16 %v2340, %v2336
    %v2377 = vpack.c.b16 %v2341, %v2337
    %v2378 = vpack.c.b16 %v2342, %v2338
    %v2379 = vpack.c.b16 %v2347, %v2343
    %v2380 = vpack.c.b16 %v2348, %v2344
    %v2381 = vpack.c.b16 %v2349, %v2345
    %v2382 = vpack.c.b16 %v2350, %v2346
    %2415 = vmatprep.subr.bf16.mxu0 %v2352
    %2416 = vmatpush1.bf16.msra.mxu0 %v2351
    %2417 = vmatprep.subr.bf16.mxu0 %v2356
    %2418 = vmatpush1.bf16.msra.mxu0 %v2355
    %2419 = vmatprep.subr.bf16.mxu0 %v2360
    %2420 = vmatpush1.bf16.msra.mxu0 %v2359
    %2421 = vmatprep.subr.bf16.mxu0 %v2364
    %2422 = vmatpush1.bf16.msra.mxu0 %v2363
    %2423 = vmatprep.subr.bf16.mxu0 %v2368
    %2424 = vmatpush1.bf16.msra.mxu0 %v2367
    %2425 = vmatprep.subr.bf16.mxu0 %v2372
    %2426 = vmatpush1.bf16.msra.mxu0 %v2371
    %2427 = vmatprep.subr.bf16.mxu0 %v2376
    %2428 = vmatpush1.bf16.msra.mxu0 %v2375
    %2429 = vmatprep.subr.bf16.mxu0 %v2380
    %2430 = vmatpush1.bf16.msra.mxu0 %v2379
    %2431 = vmatprep.subr.bf16.mxu0 0
    %2432 = vmatpush1.bf16.msra.mxu0 0
    %2433 = vmatprep.subr.bf16.mxu0 0
    %2434 = vmatpush1.bf16.msra.mxu0 0
    %2435 = vmatprep.subr.bf16.mxu0 0
    %2436 = vmatpush1.bf16.msra.mxu0 0
    %2437 = vmatprep.subr.bf16.mxu0 0
    %2438 = vmatpush1.bf16.msra.mxu0 0
    %2439 = vmatprep.subr.bf16.mxu0 0
    %2440 = vmatpush1.bf16.msra.mxu0 0
    %2441 = vmatprep.subr.bf16.mxu0 0
    %2442 = vmatpush1.bf16.msra.mxu0 0
    %2443 = vmatprep.subr.bf16.mxu0 0
    %2444 = vmatpush1.bf16.msra.mxu0 0
    %2445 = vmatprep.subr.bf16.mxu0 0
    %2446 = vmatpush1.bf16.msra.mxu0 0
    %2447 = vmatprep.mubr.bf16.mxu0 0
    %2448 = vmatmul.mubr.bf16.gmra.mrb[0].mxu0 %v2213
    %v2449 = vpop.f32.mrb[0].mxu0
    %v2450 = vadd.f32 0.0, %v2449
    %v2451 = vpop.f32.mrb[0].mxu0
    %v2452 = vadd.f32 0.0, %v2451
    %v2453 = vpop.f32.mrb[0].mxu0
    %v2454 = vpop.f32.mrb[0].mxu0
    %2455 = vdwg.mxu0
    %2456 = vmatprep.subr.bf16.mxu0 %v2354
    %2457 = vmatpush1.bf16.msra.mxu0 %v2353
    %2458 = vmatprep.subr.bf16.mxu0 %v2358
    %2459 = vmatpush1.bf16.msra.mxu0 %v2357
    %2460 = vmatprep.subr.bf16.mxu0 %v2362
    %2461 = vmatpush1.bf16.msra.mxu0 %v2361
    %2462 = vmatprep.subr.bf16.mxu0 %v2366
    %2463 = vmatpush1.bf16.msra.mxu0 %v2365
    %2464 = vmatprep.subr.bf16.mxu0 %v2370
    %2465 = vmatpush1.bf16.msra.mxu0 %v2369
    %2466 = vmatprep.subr.bf16.mxu0 %v2374
    %2467 = vmatpush1.bf16.msra.mxu0 %v2373
    %2468 = vmatprep.subr.bf16.mxu0 %v2378
    %2469 = vmatpush1.bf16.msra.mxu0 %v2377
    %2470 = vmatprep.subr.bf16.mxu0 %v2382
    %2471 = vmatpush1.bf16.msra.mxu0 %v2381
    %2472 = vmatprep.subr.bf16.mxu0 0
    %2473 = vmatpush1.bf16.msra.mxu0 0
    %2474 = vmatprep.subr.bf16.mxu0 0
    %2475 = vmatpush1.bf16.msra.mxu0 0
    %2476 = vmatprep.subr.bf16.mxu0 0
    %2477 = vmatpush1.bf16.msra.mxu0 0
    %2478 = vmatprep.subr.bf16.mxu0 0
    %2479 = vmatpush1.bf16.msra.mxu0 0
    %2480 = vmatprep.subr.bf16.mxu0 0
    %2481 = vmatpush1.bf16.msra.mxu0 0
    %2482 = vmatprep.subr.bf16.mxu0 0
    %2483 = vmatpush1.bf16.msra.mxu0 0
    %2484 = vmatprep.subr.bf16.mxu0 0
    %2485 = vmatpush1.bf16.msra.mxu0 0
    %2486 = vmatprep.subr.bf16.mxu0 0
    %2487 = vmatpush1.bf16.msra.mxu0 0
    %2488 = vmatprep.mubr.bf16.mxu0 0
    %2489 = vmatmul.mubr.bf16.gmra.mrb[0].mxu0 %v2213
    %v2490 = vpop.f32.mrb[0].mxu0
    %v2491 = vadd.f32 0.0, %v2490
    %v2492 = vpop.f32.mrb[0].mxu0
    %v2493 = vadd.f32 0.0, %v2492
    %v2494 = vpop.f32.mrb[0].mxu0
    %v2495 = vpop.f32.mrb[0].mxu0
    %2496 = vdwg.mxu0
    %v2497 = vadd.f32 %v2219, %v2450
    %v2498 = vadd.f32 %v2220, %v2452
    %v2499 = vadd.f32 %v2221, %v2491
    %v2500 = vadd.f32 %v2222, %v2493
    %v2501 = vxor.u32 %v2497, 2147483648
    %v2502 = vmul.f32 %v2501, 1.442695
    %v2503 = vpow.pop %v2502
    %v2504 = vadd.f32 %v2503, 1.0
    %v2505 = vrcp.pop %v2504
    %v2506 = vmul.f32 1.0, %v2505
    %v2507 = vxor.u32 %v2498, 2147483648
    %v2508 = vmul.f32 %v2507, 1.442695
    %v2509 = vpow.pop %v2508
    %v2510 = vadd.f32 %v2509, 1.0
    %v2511 = vrcp.pop %v2510
    %v2512 = vmul.f32 1.0, %v2511
    %v2513 = vtanh.pop %v2499
    %v2514 = vxor.u32 %v2500, 2147483648
    %v2515 = vmul.f32 %v2514, 1.442695
    %v2516 = vpow.pop %v2515
    %v2517 = vadd.f32 %v2516, 1.0
    %v2518 = vrcp.pop %v2517
    %v2519 = vmul.f32 1.0, %v2518
    %v2520 = vmul.f32 %v2512, %v2210
    %v2521 = vmul.f32 %v2506, %v2513
    %v2522 = vadd.f32 %v2520, %v2521
    %v2523 = vtanh.pop %v2522
    %v2524 = vmul.f32 %v2519, %v2523
    %v2525 = vpack.c.bf16 %v2524, %v2524
    %s2526 = scalar_lea.vmem %s4, 28
    %2527 = vst [vmem:[%s2526] sm:$0xf] %v2525
    %2528 = vst [vmem:[#allocation2] sm:$0xff] %v2524
    %2529 = vst [vmem:[#allocation3] sm:$0xff] %v2522
    // Predicated region
    $region22: #{seq2seq_forward.8} parent=1 // pred_check
      %p2530 = pneg %p23
    $region23: #{seq2seq_forward.8} parent=1 // pred_check_branch
      %2532 = sbr.rel (%p2530) target = $region25
    $region24: #{seq2seq_forward.8} parent=1 // pred_region
      %2533 = vst [vmem:[#allocation4] sm:$0xff] %v2524
      %2534 = vst [vmem:[#allocation6] sm:$0xff] %v2522
    $region25: #{seq2seq_forward.8} parent=1 // pred_fallthru
      _
    // Predicated region
    $region26: #{seq2seq_forward.8} parent=1 // pred_check
      _
    $region27: #{seq2seq_forward.8} parent=1 // pred_check_branch
      %2536 = sbr.rel (0) target = $region29
    $region28: #{seq2seq_forward.8} parent=1 // pred_region
      _
    $region29: #{seq2seq_forward.8} parent=1 // pred_fallthru
      _
    // Predicated region
    $region30: #{seq2seq_forward.8} parent=1 // pred_check
      _
    $region31: #{seq2seq_forward.8} parent=1 // pred_check_branch
      %2538 = sbr.rel (0) target = $region33
    $region32: #{seq2seq_forward.8} parent=1 // pred_region
      %s2540 = ssub.s32 128, 128
      %2541 = vsyncadd [#allocation5], %s2540
      %s2543 = sshll.u32 [#allocation4], 4
      %s2544 = int_to_ptr.vmem [resolvable:$true] %s2543
      %2546 = dma.vmem_to_hbm [thread:$0]  %s2544, 128, %s5, [#allocation5]
    $region33: #{seq2seq_forward.8} parent=1 // pred_fallthru
      _
    // Predicated region
    $region34: #{seq2seq_forward.8} parent=1 // pred_check
      _
    $region35: #{seq2seq_forward.8} parent=1 // pred_check_branch
      %2548 = sbr.rel (0) target = $region37
    $region36: #{seq2seq_forward.8} parent=1 // pred_region
      %s2550 = ssub.s32 128, 128
      %2551 = vsyncadd [#allocation7], %s2550
      %s2553 = sshll.u32 [#allocation6], 4
      %s2554 = int_to_ptr.vmem [resolvable:$true] %s2553
      %2556 = dma.vmem_to_hbm [thread:$0]  %s2554, 128, %s6, [#allocation7]
    $region37: #{seq2seq_forward.8} parent=1 // pred_fallthru
      _
    // Predicated region
    $region38: #{seq2seq_forward.8} parent=1 // pred_check
      _
    $region39: #{seq2seq_forward.8} parent=1 // pred_check_branch
      %2558 = sbr.rel (0) target = $region41
    $region40: #{seq2seq_forward.8} parent=1 // pred_region
      _
    $region41: #{seq2seq_forward.8} parent=1 // pred_fallthru
      _
    // Predicated region
    $region42: #{seq2seq_forward.8} parent=1 // pred_check
      _
    $region43: #{seq2seq_forward.8} parent=1 // pred_check_branch
      %2560 = sbr.rel (0) target = $region45
    $region44: #{seq2seq_forward.8} parent=1 // pred_region
      %2561 = dma.done [#allocation5], 128
    $region45: #{seq2seq_forward.8} parent=1 // pred_fallthru
      _
    // Predicated region
    $region46: #{seq2seq_forward.8} parent=1 // pred_check
      _
    $region47: #{seq2seq_forward.8} parent=1 // pred_check_branch
      %2563 = sbr.rel (0) target = $region49
    $region48: #{seq2seq_forward.8} parent=1 // pred_region
      %2564 = dma.done [#allocation7], 128
    $region49: #{seq2seq_forward.8} parent=1 // pred_fallthru
      _
    %2565 = vsyncpa [#allocation5], 1
    %2566 = vsyncpa [#allocation7], 1

</llo_original>
